<compile_context>
chip_gen: v5e
topology: v5e:2x2
jax: 0.10.0
libtpu: 0.0.40
codegen_flags: <defaults>
</compile_context>

<pallas_src>
import functools

import jax
import jax.numpy as jnp
from jax.experimental import pallas as pl
from jax.experimental.pallas import tpu as pltpu

BN_EPS = 1e-5
D3_POS = 21 * 21                       # final-deconv positions per batch element
D3_POS_PAD = 512                       # lane-padded (multiple of 128)


def _round_up(x, m):
    return (x + m - 1) // m * m


# ----------------------------------------------------------------------------
# Pallas kernels
# ----------------------------------------------------------------------------
def _fused_matmul_kernel(a_ref, w_ref, shift_ref, o_ref, *, relu):
    """(mt, Kp) @ (Kp, Cp) on the MXU (bf16 in, f32 acc); +shift (+ReLU) in f32.

    The BN scale is pre-folded into the weight columns, so the epilogue is a
    single broadcast add (plus optional ReLU)."""
    acc = jnp.dot(a_ref[...], w_ref[...], preferred_element_type=jnp.float32)
    y = acc + shift_ref[...]
    if relu:
        y = jnp.maximum(y, 0.0)
    o_ref[...] = y.astype(o_ref.dtype)


def fused_matmul(a, w_pad, shift_pad, *, relu, out_dtype=jnp.bfloat16, row_tiles=1):
    """a: (M, K); w_pad: (Kp, Cp) bf16 (128-aligned); shift_pad: (1, Cp) f32.

    Returns (M, Cp) in out_dtype (caller slices the valid C columns).  Rows are
    padded to a multiple of 16 (bf16 sublane packing); `row_tiles` > 1 only when
    the row count is large enough that a parallel split pays off (v7x)."""
    M, K = a.shape
    Kp, Cp = w_pad.shape
    mt = _round_up(-(-M // row_tiles), 16)
    Mp = mt * row_tiles
    a = jnp.pad(a.astype(jnp.bfloat16), ((0, Mp - M), (0, Kp - K)))

    out = pl.pallas_call(
        functools.partial(_fused_matmul_kernel, relu=relu),
        out_shape=jax.ShapeDtypeStruct((Mp, Cp), out_dtype),
        grid_spec=pltpu.PrefetchScalarGridSpec(
            num_scalar_prefetch=0,
            grid=(row_tiles,),
            in_specs=[
                pl.BlockSpec((mt, Kp), lambda i: (i, 0)),
                pl.BlockSpec((Kp, Cp), lambda i: (0, 0)),
                pl.BlockSpec((1, Cp), lambda i: (0, 0)),
            ],
            out_specs=pl.BlockSpec((mt, Cp), lambda i: (i, 0)),
        ),
        compiler_params=pltpu.CompilerParams(dimension_semantics=("parallel",)),
    )(a, w_pad, shift_pad)
    return out[:M]


def _deconv3_logsoftmax_kernel(w_ref, b_ref, shift_ref, o_ref, *, valid_cols):
    """Final ConvTranspose2d (transposed orientation) fused with LogSoftmax.

    w_ref: (16, 128) phase weights; b_ref: (1, 128, Pp) taps x positions for one
    batch element; output (1, 16, Pp) log-probs (padded cols are garbage and are
    sliced away in XLA)."""
    acc = jnp.dot(w_ref[...], b_ref[0], preferred_element_type=jnp.float32)  # (16, Pp)
    acc = acc + shift_ref[...]                       # deconv bias (cancels in softmax)
    col = jax.lax.broadcasted_iota(jnp.int32, acc.shape, 1)
    valid = col < valid_cols
    masked = jnp.where(valid, acc, jnp.full_like(acc, -3.0e38))
    m = jnp.max(jnp.max(masked, axis=1, keepdims=True), axis=0, keepdims=True)
    e = jnp.where(valid, jnp.exp(acc - m), jnp.zeros_like(acc))
    s = jnp.sum(jnp.sum(e, axis=1, keepdims=True), axis=0, keepdims=True)
    o_ref[0] = acc - m - jnp.log(s)


# ----------------------------------------------------------------------------
# Parameter preparation (hoisted out of the per-forward jit)
# ----------------------------------------------------------------------------
def fold_bn(bias, bn):
    """Fold conv bias + eval-mode BatchNorm into (scale, shift), in f32."""
    if bn is None:
        return jnp.ones_like(bias), bias
    gamma, beta, mean, var = bn
    scale = gamma / jnp.sqrt(var + BN_EPS)
    shift = (bias - mean) * scale + beta
    return scale, shift


def _pad_weight_matrix(wm):
    K, C = wm.shape
    Kp = _round_up(K, 128)
    Cp = _round_up(max(C, 128), 128)
    return jnp.pad(wm, ((0, Kp - K), (0, Cp - C))).astype(jnp.bfloat16)


def _pad_shift(shift):
    C = shift.shape[0]
    Cp = _round_up(max(C, 128), 128)
    return jnp.pad(shift.astype(jnp.float32), (0, Cp - C)).reshape(1, Cp)


def _conv_weight_matrix(w):
    """Conv2d weight (Cout, Cin, kH, kW) -> (kH*kW*Cin, Cout), rows (kh, kw, c)."""
    cout, cin, kh, kw = w.shape
    return jnp.transpose(w, (2, 3, 1, 0)).reshape(kh * kw * cin, cout)


def _phase_weight_matrix(w_t, stride):
    """ConvTranspose2d weight (Cin, Cout, k, k), k = t*stride -> phase-conv matrix
    (t*t*Cin, stride*stride*Cout).  Rows (jh, jw, cin) match im2col ordering,
    columns (rh, rw, cout) match the pixel shuffle."""
    cin, cout, k, _ = w_t.shape
    s = stride
    t = k // s
    assert k == t * s, (k, s)
    w6 = w_t.reshape(cin, cout, t, s, t, s)        # (cin, cout, ah, rh, aw, rw)
    w6 = jnp.flip(w6, axis=(2, 4))                 # tap flip -> (jh, jw)
    w6 = jnp.transpose(w6, (2, 4, 0, 3, 5, 1))     # (jh, jw, cin, rh, rw, cout)
    return w6.reshape(t * t * cin, s * s * cout)


def prepare_params(P):
    """Build all padded bf16 weight matrices / f32 shifts once, outside the forward."""
    PP = {}

    def conv_entry(name, w, b, bn):
        scale, shift = fold_bn(b, bn)
        wm = _conv_weight_matrix(w) * scale[None, :]
        PP[name + "_w"] = _pad_weight_matrix(wm)
        PP[name + "_s"] = _pad_shift(shift)

    conv_entry("c1", P["c1_w"], P["c1_b"], P["bn1"])
    conv_entry("c2", P["c2_w"], P["c2_b"], P["bn2"])
    conv_entry("c3", P["c3_w"], P["c3_b"], P["bn3"])

    # d1: ConvTranspose2d stride 1 == Conv2d(flipped, channel-swapped kernel)
    # over a (k-1)-padded input.
    d1_conv_w = jnp.transpose(jnp.flip(P["d1_w"], axis=(2, 3)), (1, 0, 2, 3))
    conv_entry("d1", d1_conv_w, P["d1_b"], P["bn4"])

    # d2: ConvTranspose2d(64->32, k=4, s=2) via sub-pixel phase decomposition.
    scale, shift = fold_bn(P["d2_b"], P["bn5"])
    wm = _phase_weight_matrix(P["d2_w"], 2) * jnp.tile(scale, 4)[None, :]
    PP["d2_w"] = _pad_weight_matrix(wm)            # (256, 128) — already aligned
    PP["d2_s"] = _pad_shift(jnp.tile(shift, 4))

    # d3: ConvTranspose2d(32->1, k=8, s=4), no BN/ReLU.  Stored TRANSPOSED
    # (16 phases x 128 taps) so the matmul output lane dim is the 512-wide
    # position axis (lane-dense stores).
    PP["d3_w"] = _phase_weight_matrix(P["d3_w"], 4).T.astype(jnp.bfloat16)  # (16,128)
    PP["d3_s"] = jnp.full((1, D3_POS_PAD), P["d3_b"][0], jnp.float32)
    return PP


# ----------------------------------------------------------------------------
# Forward-pass glue (pure data movement; all math is inside the Pallas kernels)
# ----------------------------------------------------------------------------
def im2col(x, k, stride):
    """x: (N, H, W, C) -> patches (N, Ho*Wo, k*k*C) with (kh, kw, c) ordering."""
    N, H, W, C = x.shape
    Ho = (H - k) // stride + 1
    Wo = (W - k) // stride + 1
    cols = []
    for kh in range(k):
        for kw in range(k):
            cols.append(x[:, kh:kh + (Ho - 1) * stride + 1:stride,
                            kw:kw + (Wo - 1) * stride + 1:stride, :])
    p = jnp.stack(cols, axis=3)                    # (N, Ho, Wo, k*k, C)
    return p.reshape(N, Ho * Wo, k * k * C), Ho, Wo


def conv_block(x, w_pad, shift_pad, *, k, stride, cout, relu=True):
    N = x.shape[0]
    patches, Ho, Wo = im2col(x, k, stride)
    a = patches.reshape(N * Ho * Wo, patches.shape[-1])
    row_tiles = 2 if a.shape[0] >= 512 else 1      # only conv1 splits (v7x megacore)
    y = fused_matmul(a, w_pad, shift_pad, relu=relu, row_tiles=row_tiles)
    return y[:, :cout].reshape(N, Ho, Wo, cout)


def deconv2_block(x, w_pad, shift_pad):
    """ConvTranspose2d(64->32, k=4, s=2) + BN + ReLU via phase decomposition.
    Returns NCHW so the next layer's patches come out (taps, positions)-major."""
    N, H, W, C = x.shape                                     # (N, 9, 9, 64)
    xp = jnp.pad(x, ((0, 0), (1, 1), (1, 1), (0, 0)))
    patches, Hq, Wq = im2col(xp, 2, 1)                       # (N, 100, 256)
    a = patches.reshape(N * Hq * Wq, 4 * C)
    y = fused_matmul(a, w_pad, shift_pad, relu=True)         # cols = (rh, rw, cout)
    y = y.reshape(N, Hq, Wq, 2, 2, 32)
    y = jnp.transpose(y, (0, 5, 1, 3, 2, 4)).reshape(N, 32, 2 * Hq, 2 * Wq)
    return y                                                 # (N, 32, 20, 20)


def deconv3_logsoftmax(x_nchw, w_t_pad, shift_pad):
    """Final ConvTranspose2d(32->1, k=8, s=4) fused with LogSoftmax over the full
    84x84 map; one grid step per batch element.  Pixel shuffle is tiny XLA."""
    N, C, H, W = x_nchw.shape                                # (N, 32, 20, 20)
    Hq, Wq = H + 1, W + 1                                    # 21, 21
    assert Hq * Wq == D3_POS
    xp = jnp.pad(x_nchw, ((0, 0), (0, 0), (1, 1), (1, 1)))
    taps = [xp[:, :, jh:jh + Hq, jw:jw + Wq] for jh in range(2) for jw in range(2)]
    b = jnp.stack(taps, axis=1).reshape(N, 4 * C, D3_POS)    # rows = (jh, jw, cin)
    b = jnp.pad(b, ((0, 0), (0, 0), (0, D3_POS_PAD - D3_POS))).astype(jnp.bfloat16)

    out = pl.pallas_call(
        functools.partial(_deconv3_logsoftmax_kernel, valid_cols=D3_POS),
        out_shape=jax.ShapeDtypeStruct((N, 16, D3_POS_PAD), jnp.float32),
        grid_spec=pltpu.PrefetchScalarGridSpec(
            num_scalar_prefetch=0,
            grid=(N,),
            in_specs=[
                pl.BlockSpec((16, 128), lambda n: (0, 0)),
                pl.BlockSpec((1, 4 * C, D3_POS_PAD), lambda n: (n, 0, 0)),
                pl.BlockSpec((1, D3_POS_PAD), lambda n: (0, 0)),
            ],
            out_specs=pl.BlockSpec((1, 16, D3_POS_PAD), lambda n: (n, 0, 0)),
        ),
        compiler_params=pltpu.CompilerParams(dimension_semantics=("parallel",)),
    )(w_t_pad, b, shift_pad)

    y = out[:, :, :D3_POS].reshape(N, 4, 4, Hq, Wq)          # (n, rh, rw, u, v)
    y = jnp.transpose(y, (0, 3, 1, 4, 2)).reshape(N, 4 * Hq, 4 * Wq)
    return y                                                 # (N, 84, 84) f32


def gaze_prediction_forward(x_nchw, PP):
    # TODO(synk): nn.Dropout is identity in eval()/inference mode, so it is omitted.
    x = jnp.transpose(x_nchw, (0, 2, 3, 1)).astype(jnp.bfloat16)          # NHWC bf16
    x = conv_block(x, PP["c1_w"], PP["c1_s"], k=8, stride=4, cout=32)     # (N,20,20,32)
    x = conv_block(x, PP["c2_w"], PP["c2_s"], k=4, stride=2, cout=64)     # (N, 9, 9,64)
    x = conv_block(x, PP["c3_w"], PP["c3_s"], k=3, stride=1, cout=64)     # (N, 7, 7,64)
    xp = jnp.pad(x, ((0, 0), (2, 2), (2, 2), (0, 0)))                     # deconv1 pad
    x = conv_block(xp, PP["d1_w"], PP["d1_s"], k=3, stride=1, cout=64)    # (N, 9, 9,64)
    x = deconv2_block(x, PP["d2_w"], PP["d2_s"])                          # (N,32,20,20)
    return deconv3_logsoftmax(x, PP["d3_w"], PP["d3_s"])                  # (N,84,84) f32


# ----------------------------------------------------------------------------
# Pure-JAX f32 reference (XLA convs) for the numerical cross-check
# ----------------------------------------------------------------------------
def _reference_forward(x, P):
    dn = ("NCHW", "OIHW", "NCHW")
    hi = jax.lax.Precision.HIGHEST

    def bn(x, p):
        g, b, m, v = p
        inv = g / jnp.sqrt(v + BN_EPS)
        return (x - m[None, :, None, None]) * inv[None, :, None, None] \
            + b[None, :, None, None]

    def conv(x, w, b, s):
        y = jax.lax.conv_general_dilated(x, w, (s, s), "VALID",
                                         dimension_numbers=dn, precision=hi)
        return y + b[None, :, None, None]

    def deconv(x, w_t, b, s):
        k = w_t.shape[2]
        w = jnp.transpose(jnp.flip(w_t, (2, 3)), (1, 0, 2, 3))
        y = jax.lax.conv_general_dilated(x, w, (1, 1),
                                         [(k - 1, k - 1), (k - 1, k - 1)],
                                         lhs_dilation=(s, s),
                                         dimension_numbers=dn, precision=hi)
        return y + b[None, :, None, None]

    relu = jax.nn.relu
    x = relu(bn(conv(x, P["c1_w"], P["c1_b"], 4), P["bn1"]))
    x = relu(bn(conv(x, P["c2_w"], P["c2_b"], 2), P["bn2"]))
    x = relu(bn(conv(x, P["c3_w"], P["c3_b"], 1), P["bn3"]))
    x = relu(bn(deconv(x, P["d1_w"], P["d1_b"], 1), P["bn4"]))
    x = relu(bn(deconv(x, P["d2_w"], P["d2_b"], 2), P["bn5"]))
    x = deconv(x, P["d3_w"], P["d3_b"], 4)
    n = x.shape[0]
    x = jax.nn.log_softmax(x.reshape(n, -1), axis=1)
    return x.reshape(n, 84, 84)


# ----------------------------------------------------------------------------
# Init + driver
# ----------------------------------------------------------------------------
def init_params(key):
    ks = jax.random.split(key, 17)

    def w_init(k, shape, fan_in):
        return jax.random.normal(k, shape, jnp.float32) / jnp.sqrt(float(fan_in))

    def bn_init(k, c):
        k1, k2, k3, k4 = jax.random.split(k, 4)
        gamma = 1.0 + 0.1 * jax.random.normal(k1, (c,), jnp.float32)
        beta = 0.1 * jax.random.normal(k2, (c,), jnp.float32)
        mean = 0.1 * jax.random.normal(k3, (c,), jnp.float32)
        var = jax.random.uniform(k4, (c,), jnp.float32, minval=0.5, maxval=1.5)
        return (gamma, beta, mean, var)

    P = {}
    P["c1_w"] = w_init(ks[0], (32, 4, 8, 8), 4 * 8 * 8)
    P["c1_b"] = 0.01 * jax.random.normal(ks[1], (32,), jnp.float32)
    P["bn1"] = bn_init(ks[2], 32)
    P["c2_w"] = w_init(ks[3], (64, 32, 4, 4), 32 * 4 * 4)
    P["c2_b"] = 0.01 * jax.random.normal(ks[4], (64,), jnp.float32)
    P["bn2"] = bn_init(ks[5], 64)
    P["c3_w"] = w_init(ks[6], (64, 64, 3, 3), 64 * 3 * 3)
    P["c3_b"] = 0.01 * jax.random.normal(ks[7], (64,), jnp.float32)
    P["bn3"] = bn_init(ks[8], 64)
    # ConvTranspose2d weights: (Cin, Cout, kH, kW)
    P["d1_w"] = w_init(ks[9], (64, 64, 3, 3), 64 * 3 * 3)
    P["d1_b"] = 0.01 * jax.random.normal(ks[10], (64,), jnp.float32)
    P["bn4"] = bn_init(ks[11], 64)
    P["d2_w"] = w_init(ks[12], (64, 32, 4, 4), 64 * 4 * 4)
    P["d2_b"] = 0.01 * jax.random.normal(ks[13], (32,), jnp.float32)
    P["bn5"] = bn_init(ks[14], 32)
    P["d3_w"] = w_init(ks[15], (32, 1, 8, 8), 32 * 8 * 8)
    P["d3_b"] = 0.01 * jax.random.normal(ks[16], (1,), jnp.float32)
    return P


if __name__ == "__main__":
    key = jax.random.PRNGKey(0)
    k_params, k_input = jax.random.split(key)
    params = init_params(k_params)
    prepped = prepare_params(params)          # weight prep runs once, outside the fwd

    # The module's final .view(B, 84, 84) pins the spatial size to 84x84
    # (standard Atari 4-frame greyscale stack): batch=2, channels=4.
    x = jax.random.uniform(k_input, (2, 4, 84, 84), jnp.float32)

    fwd = jax.jit(gaze_prediction_forward)
    out = jax.block_until_ready(fwd(x, prepped))

    assert out.shape == (2, 84, 84), out.shape
    assert out.dtype == jnp.float32
    assert bool(jnp.all(jnp.isfinite(out)))
    # log-softmax rows must sum to 1 in probability space
    assert bool(jnp.allclose(jnp.sum(jnp.exp(out.reshape(2, -1)), axis=1),
                             1.0, atol=1e-3))

    # Numerical cross-check of the whole forward (phase decomposition, pixel
    # shuffle, BN folding) against a pure-JAX f32 XLA reference.  Tolerance is
    # generous to absorb bf16 activation drift; permutation bugs would be O(1+).
    ref = jax.block_until_ready(jax.jit(_reference_forward)(x, params))
    max_diff = float(jnp.max(jnp.abs(out - ref)))
    assert max_diff < 0.25, f"max |pallas - reference| = {max_diff}"

    print("KERNEL_OK")
</pallas_src>

<mosaic_0001>
module attributes {stable_mosaic.version = 11 : i64} {
  func.func @_fused_matmul_kernel(%arg0: i32, %arg1: memref<400x256xbf16, #tpu.memory_space<vmem>>, %arg2: memref<256x128xbf16, #tpu.memory_space<vmem>>, %arg3: memref<1x128xf32, #tpu.memory_space<vmem>>, %arg4: memref<400x128xbf16, #tpu.memory_space<vmem>>) attributes {dimension_semantics = [#tpu.dimension_semantics<parallel>], iteration_bounds = array<i64: 2>, scalar_prefetch = 0 : i64, scratch_operands = 0 : i64, tpu.core_type = #tpu.core_type<tc>, window_params = [{transform_indices = @transform_0, window_bounds = array<i64: 400, 256>}, {pipeline_mode = #tpu.pipeline_mode<synchronous>, transform_indices = @transform_1, window_bounds = array<i64: 256, 128>}, {pipeline_mode = #tpu.pipeline_mode<synchronous>, transform_indices = @transform_2, window_bounds = array<i64: 1, 128>}, {transform_indices = @transform_3, window_bounds = array<i64: 400, 128>}]} {
    %c0 = arith.constant 0 : index
    %c0_0 = arith.constant 0 : index
    %0 = vector.load %arg1[%c0, %c0_0] : memref<400x256xbf16, #tpu.memory_space<vmem>>, vector<400x256xbf16>
    %c0_1 = arith.constant 0 : index
    %c0_2 = arith.constant 0 : index
    %1 = vector.load %arg2[%c0_1, %c0_2] : memref<256x128xbf16, #tpu.memory_space<vmem>>, vector<256x128xbf16>
    %cst = arith.constant dense<0.000000e+00> : vector<400x128xf32>
    %2 = tpu.matmul %0, %1, %cst {dimension_numbers = #tpu.dot_dimension_numbers<[1], [0], [0], [1], [0, 0, 1, 1], [], []>} : vector<400x256xbf16>, vector<256x128xbf16>, vector<400x128xf32> -> vector<400x128xf32>
    %c0_3 = arith.constant 0 : index
    %c0_4 = arith.constant 0 : index
    %3 = vector.load %arg3[%c0_3, %c0_4] : memref<1x128xf32, #tpu.memory_space<vmem>>, vector<1x128xf32>
    %4 = vector.broadcast %3 : vector<1x128xf32> to vector<400x128xf32>
    %5 = arith.addf %2, %4 : vector<400x128xf32>
    %cst_5 = arith.constant 0.000000e+00 : f32
    %6 = vector.broadcast %cst_5 : f32 to vector<400x128xf32>
    %7 = arith.maximumf %5, %6 : vector<400x128xf32>
    %8 = arith.truncf %7 : vector<400x128xf32> to vector<400x128xbf16>
    %c0_6 = arith.constant 0 : index
    %c0_7 = arith.constant 0 : index
    %9 = vector.load %arg4[%c0_6, %c0_7] : memref<400x128xbf16, #tpu.memory_space<vmem>>, vector<400x128xbf16>
    tpu.vector_store %arg4[%c0_6, %c0_7], %8 {strides = array<i32>} : memref<400x128xbf16, #tpu.memory_space<vmem>>, vector<400x128xbf16>,
    return
  }
  func.func @transform_0(%arg0: i32) -> (i32, i32) {
    %c0_i32 = arith.constant 0 : i32
    %c0_i32_0 = arith.constant 0 : i32
    return %arg0, %c0_i32 : i32, i32
  }
  func.func @transform_1(%arg0: i32) -> (i32, i32) {
    %c0_i32 = arith.constant 0 : i32
    %c0_i32_0 = arith.constant 0 : i32
    %c0_i32_1 = arith.constant 0 : i32
    return %c0_i32, %c0_i32_0 : i32, i32
  }
  func.func @transform_2(%arg0: i32) -> (i32, i32) {
    %c0_i32 = arith.constant 0 : i32
    %c0_i32_0 = arith.constant 0 : i32
    %c0_i32_1 = arith.constant 0 : i32
    return %c0_i32, %c0_i32_0 : i32, i32
  }
  func.func @transform_3(%arg0: i32) -> (i32, i32) {
    %c0_i32 = arith.constant 0 : i32
    %c0_i32_0 = arith.constant 0 : i32
    return %arg0, %c0_i32 : i32, i32
  }
}

module attributes {stable_mosaic.version = 11 : i64} {
  func.func @_fused_matmul_kernel(%arg0: i32, %arg1: memref<176x512xbf16, #tpu.memory_space<vmem>>, %arg2: memref<512x128xbf16, #tpu.memory_space<vmem>>, %arg3: memref<1x128xf32, #tpu.memory_space<vmem>>, %arg4: memref<176x128xbf16, #tpu.memory_space<vmem>>) attributes {dimension_semantics = [#tpu.dimension_semantics<parallel>], iteration_bounds = array<i64: 1>, scalar_prefetch = 0 : i64, scratch_operands = 0 : i64, tpu.core_type = #tpu.core_type<tc>, window_params = [{transform_indices = @transform_0, window_bounds = array<i64: 176, 512>}, {pipeline_mode = #tpu.pipeline_mode<synchronous>, transform_indices = @transform_1, window_bounds = array<i64: 512, 128>}, {pipeline_mode = #tpu.pipeline_mode<synchronous>, transform_indices = @transform_2, window_bounds = array<i64: 1, 128>}, {transform_indices = @transform_3, window_bounds = array<i64: 176, 128>}]} {
    %c0 = arith.constant 0 : index
    %c0_0 = arith.constant 0 : index
    %0 = vector.load %arg1[%c0, %c0_0] : memref<176x512xbf16, #tpu.memory_space<vmem>>, vector<176x512xbf16>
    %c0_1 = arith.constant 0 : index
    %c0_2 = arith.constant 0 : index
    %1 = vector.load %arg2[%c0_1, %c0_2] : memref<512x128xbf16, #tpu.memory_space<vmem>>, vector<512x128xbf16>
    %cst = arith.constant dense<0.000000e+00> : vector<176x128xf32>
    %2 = tpu.matmul %0, %1, %cst {dimension_numbers = #tpu.dot_dimension_numbers<[1], [0], [0], [1], [0, 0, 1, 1], [], []>} : vector<176x512xbf16>, vector<512x128xbf16>, vector<176x128xf32> -> vector<176x128xf32>
    %c0_3 = arith.constant 0 : index
    %c0_4 = arith.constant 0 : index
    %3 = vector.load %arg3[%c0_3, %c0_4] : memref<1x128xf32, #tpu.memory_space<vmem>>, vector<1x128xf32>
    %4 = vector.broadcast %3 : vector<1x128xf32> to vector<176x128xf32>
    %5 = arith.addf %2, %4 : vector<176x128xf32>
    %cst_5 = arith.constant 0.000000e+00 : f32
    %6 = vector.broadcast %cst_5 : f32 to vector<176x128xf32>
    %7 = arith.maximumf %5, %6 : vector<176x128xf32>
    %8 = arith.truncf %7 : vector<176x128xf32> to vector<176x128xbf16>
    %c0_6 = arith.constant 0 : index
    %c0_7 = arith.constant 0 : index
    %9 = vector.load %arg4[%c0_6, %c0_7] : memref<176x128xbf16, #tpu.memory_space<vmem>>, vector<176x128xbf16>
    tpu.vector_store %arg4[%c0_6, %c0_7], %8 {strides = array<i32>} : memref<176x128xbf16, #tpu.memory_space<vmem>>, vector<176x128xbf16>,
    return
  }
  func.func @transform_0(%arg0: i32) -> (i32, i32) {
    %c0_i32 = arith.constant 0 : i32
    %c0_i32_0 = arith.constant 0 : i32
    return %arg0, %c0_i32 : i32, i32
  }
  func.func @transform_1(%arg0: i32) -> (i32, i32) {
    %c0_i32 = arith.constant 0 : i32
    %c0_i32_0 = arith.constant 0 : i32
    %c0_i32_1 = arith.constant 0 : i32
    return %c0_i32, %c0_i32_0 : i32, i32
  }
  func.func @transform_2(%arg0: i32) -> (i32, i32) {
    %c0_i32 = arith.constant 0 : i32
    %c0_i32_0 = arith.constant 0 : i32
    %c0_i32_1 = arith.constant 0 : i32
    return %c0_i32, %c0_i32_0 : i32, i32
  }
  func.func @transform_3(%arg0: i32) -> (i32, i32) {
    %c0_i32 = arith.constant 0 : i32
    %c0_i32_0 = arith.constant 0 : i32
    return %arg0, %c0_i32 : i32, i32
  }
}

module attributes {stable_mosaic.version = 11 : i64} {
  func.func @_fused_matmul_kernel(%arg0: i32, %arg1: memref<112x640xbf16, #tpu.memory_space<vmem>>, %arg2: memref<640x128xbf16, #tpu.memory_space<vmem>>, %arg3: memref<1x128xf32, #tpu.memory_space<vmem>>, %arg4: memref<112x128xbf16, #tpu.memory_space<vmem>>) attributes {dimension_semantics = [#tpu.dimension_semantics<parallel>], iteration_bounds = array<i64: 1>, scalar_prefetch = 0 : i64, scratch_operands = 0 : i64, tpu.core_type = #tpu.core_type<tc>, window_params = [{transform_indices = @transform_0, window_bounds = array<i64: 112, 640>}, {pipeline_mode = #tpu.pipeline_mode<synchronous>, transform_indices = @transform_1, window_bounds = array<i64: 640, 128>}, {pipeline_mode = #tpu.pipeline_mode<synchronous>, transform_indices = @transform_2, window_bounds = array<i64: 1, 128>}, {transform_indices = @transform_3, window_bounds = array<i64: 112, 128>}]} {
    %c0 = arith.constant 0 : index
    %c0_0 = arith.constant 0 : index
    %0 = vector.load %arg1[%c0, %c0_0] : memref<112x640xbf16, #tpu.memory_space<vmem>>, vector<112x640xbf16>
    %c0_1 = arith.constant 0 : index
    %c0_2 = arith.constant 0 : index
    %1 = vector.load %arg2[%c0_1, %c0_2] : memref<640x128xbf16, #tpu.memory_space<vmem>>, vector<640x128xbf16>
    %cst = arith.constant dense<0.000000e+00> : vector<112x128xf32>
    %2 = tpu.matmul %0, %1, %cst {dimension_numbers = #tpu.dot_dimension_numbers<[1], [0], [0], [1], [0, 0, 1, 1], [], []>} : vector<112x640xbf16>, vector<640x128xbf16>, vector<112x128xf32> -> vector<112x128xf32>
    %c0_3 = arith.constant 0 : index
    %c0_4 = arith.constant 0 : index
    %3 = vector.load %arg3[%c0_3, %c0_4] : memref<1x128xf32, #tpu.memory_space<vmem>>, vector<1x128xf32>
    %4 = vector.broadcast %3 : vector<1x128xf32> to vector<112x128xf32>
    %5 = arith.addf %2, %4 : vector<112x128xf32>
    %cst_5 = arith.constant 0.000000e+00 : f32
    %6 = vector.broadcast %cst_5 : f32 to vector<112x128xf32>
    %7 = arith.maximumf %5, %6 : vector<112x128xf32>
    %8 = arith.truncf %7 : vector<112x128xf32> to vector<112x128xbf16>
    %c0_6 = arith.constant 0 : index
    %c0_7 = arith.constant 0 : index
    %9 = vector.load %arg4[%c0_6, %c0_7] : memref<112x128xbf16, #tpu.memory_space<vmem>>, vector<112x128xbf16>
    tpu.vector_store %arg4[%c0_6, %c0_7], %8 {strides = array<i32>} : memref<112x128xbf16, #tpu.memory_space<vmem>>, vector<112x128xbf16>,
    return
  }
  func.func @transform_0(%arg0: i32) -> (i32, i32) {
    %c0_i32 = arith.constant 0 : i32
    %c0_i32_0 = arith.constant 0 : i32
    return %arg0, %c0_i32 : i32, i32
  }
  func.func @transform_1(%arg0: i32) -> (i32, i32) {
    %c0_i32 = arith.constant 0 : i32
    %c0_i32_0 = arith.constant 0 : i32
    %c0_i32_1 = arith.constant 0 : i32
    return %c0_i32, %c0_i32_0 : i32, i32
  }
  func.func @transform_2(%arg0: i32) -> (i32, i32) {
    %c0_i32 = arith.constant 0 : i32
    %c0_i32_0 = arith.constant 0 : i32
    %c0_i32_1 = arith.constant 0 : i32
    return %c0_i32, %c0_i32_0 : i32, i32
  }
  func.func @transform_3(%arg0: i32) -> (i32, i32) {
    %c0_i32 = arith.constant 0 : i32
    %c0_i32_0 = arith.constant 0 : i32
    return %arg0, %c0_i32 : i32, i32
  }
}

module attributes {stable_mosaic.version = 11 : i64} {
  func.func @_fused_matmul_kernel(%arg0: i32, %arg1: memref<176x640xbf16, #tpu.memory_space<vmem>>, %arg2: memref<640x128xbf16, #tpu.memory_space<vmem>>, %arg3: memref<1x128xf32, #tpu.memory_space<vmem>>, %arg4: memref<176x128xbf16, #tpu.memory_space<vmem>>) attributes {dimension_semantics = [#tpu.dimension_semantics<parallel>], iteration_bounds = array<i64: 1>, scalar_prefetch = 0 : i64, scratch_operands = 0 : i64, tpu.core_type = #tpu.core_type<tc>, window_params = [{transform_indices = @transform_0, window_bounds = array<i64: 176, 640>}, {pipeline_mode = #tpu.pipeline_mode<synchronous>, transform_indices = @transform_1, window_bounds = array<i64: 640, 128>}, {pipeline_mode = #tpu.pipeline_mode<synchronous>, transform_indices = @transform_2, window_bounds = array<i64: 1, 128>}, {transform_indices = @transform_3, window_bounds = array<i64: 176, 128>}]} {
    %c0 = arith.constant 0 : index
    %c0_0 = arith.constant 0 : index
    %0 = vector.load %arg1[%c0, %c0_0] : memref<176x640xbf16, #tpu.memory_space<vmem>>, vector<176x640xbf16>
    %c0_1 = arith.constant 0 : index
    %c0_2 = arith.constant 0 : index
    %1 = vector.load %arg2[%c0_1, %c0_2] : memref<640x128xbf16, #tpu.memory_space<vmem>>, vector<640x128xbf16>
    %cst = arith.constant dense<0.000000e+00> : vector<176x128xf32>
    %2 = tpu.matmul %0, %1, %cst {dimension_numbers = #tpu.dot_dimension_numbers<[1], [0], [0], [1], [0, 0, 1, 1], [], []>} : vector<176x640xbf16>, vector<640x128xbf16>, vector<176x128xf32> -> vector<176x128xf32>
    %c0_3 = arith.constant 0 : index
    %c0_4 = arith.constant 0 : index
    %3 = vector.load %arg3[%c0_3, %c0_4] : memref<1x128xf32, #tpu.memory_space<vmem>>, vector<1x128xf32>
    %4 = vector.broadcast %3 : vector<1x128xf32> to vector<176x128xf32>
    %5 = arith.addf %2, %4 : vector<176x128xf32>
    %cst_5 = arith.constant 0.000000e+00 : f32
    %6 = vector.broadcast %cst_5 : f32 to vector<176x128xf32>
    %7 = arith.maximumf %5, %6 : vector<176x128xf32>
    %8 = arith.truncf %7 : vector<176x128xf32> to vector<176x128xbf16>
    %c0_6 = arith.constant 0 : index
    %c0_7 = arith.constant 0 : index
    %9 = vector.load %arg4[%c0_6, %c0_7] : memref<176x128xbf16, #tpu.memory_space<vmem>>, vector<176x128xbf16>
    tpu.vector_store %arg4[%c0_6, %c0_7], %8 {strides = array<i32>} : memref<176x128xbf16, #tpu.memory_space<vmem>>, vector<176x128xbf16>,
    return
  }
  func.func @transform_0(%arg0: i32) -> (i32, i32) {
    %c0_i32 = arith.constant 0 : i32
    %c0_i32_0 = arith.constant 0 : i32
    return %arg0, %c0_i32 : i32, i32
  }
  func.func @transform_1(%arg0: i32) -> (i32, i32) {
    %c0_i32 = arith.constant 0 : i32
    %c0_i32_0 = arith.constant 0 : i32
    %c0_i32_1 = arith.constant 0 : i32
    return %c0_i32, %c0_i32_0 : i32, i32
  }
  func.func @transform_2(%arg0: i32) -> (i32, i32) {
    %c0_i32 = arith.constant 0 : i32
    %c0_i32_0 = arith.constant 0 : i32
    %c0_i32_1 = arith.constant 0 : i32
    return %c0_i32, %c0_i32_0 : i32, i32
  }
  func.func @transform_3(%arg0: i32) -> (i32, i32) {
    %c0_i32 = arith.constant 0 : i32
    %c0_i32_0 = arith.constant 0 : i32
    return %arg0, %c0_i32 : i32, i32
  }
}

module attributes {stable_mosaic.version = 11 : i64} {
  func.func @_fused_matmul_kernel(%arg0: i32, %arg1: memref<208x256xbf16, #tpu.memory_space<vmem>>, %arg2: memref<256x128xbf16, #tpu.memory_space<vmem>>, %arg3: memref<1x128xf32, #tpu.memory_space<vmem>>, %arg4: memref<208x128xbf16, #tpu.memory_space<vmem>>) attributes {dimension_semantics = [#tpu.dimension_semantics<parallel>], iteration_bounds = array<i64: 1>, scalar_prefetch = 0 : i64, scratch_operands = 0 : i64, tpu.core_type = #tpu.core_type<tc>, window_params = [{transform_indices = @transform_0, window_bounds = array<i64: 208, 256>}, {pipeline_mode = #tpu.pipeline_mode<synchronous>, transform_indices = @transform_1, window_bounds = array<i64: 256, 128>}, {pipeline_mode = #tpu.pipeline_mode<synchronous>, transform_indices = @transform_2, window_bounds = array<i64: 1, 128>}, {transform_indices = @transform_3, window_bounds = array<i64: 208, 128>}]} {
    %c0 = arith.constant 0 : index
    %c0_0 = arith.constant 0 : index
    %0 = vector.load %arg1[%c0, %c0_0] : memref<208x256xbf16, #tpu.memory_space<vmem>>, vector<208x256xbf16>
    %c0_1 = arith.constant 0 : index
    %c0_2 = arith.constant 0 : index
    %1 = vector.load %arg2[%c0_1, %c0_2] : memref<256x128xbf16, #tpu.memory_space<vmem>>, vector<256x128xbf16>
    %cst = arith.constant dense<0.000000e+00> : vector<208x128xf32>
    %2 = tpu.matmul %0, %1, %cst {dimension_numbers = #tpu.dot_dimension_numbers<[1], [0], [0], [1], [0, 0, 1, 1], [], []>} : vector<208x256xbf16>, vector<256x128xbf16>, vector<208x128xf32> -> vector<208x128xf32>
    %c0_3 = arith.constant 0 : index
    %c0_4 = arith.constant 0 : index
    %3 = vector.load %arg3[%c0_3, %c0_4] : memref<1x128xf32, #tpu.memory_space<vmem>>, vector<1x128xf32>
    %4 = vector.broadcast %3 : vector<1x128xf32> to vector<208x128xf32>
    %5 = arith.addf %2, %4 : vector<208x128xf32>
    %cst_5 = arith.constant 0.000000e+00 : f32
    %6 = vector.broadcast %cst_5 : f32 to vector<208x128xf32>
    %7 = arith.maximumf %5, %6 : vector<208x128xf32>
    %8 = arith.truncf %7 : vector<208x128xf32> to vector<208x128xbf16>
    %c0_6 = arith.constant 0 : index
    %c0_7 = arith.constant 0 : index
    %9 = vector.load %arg4[%c0_6, %c0_7] : memref<208x128xbf16, #tpu.memory_space<vmem>>, vector<208x128xbf16>
    tpu.vector_store %arg4[%c0_6, %c0_7], %8 {strides = array<i32>} : memref<208x128xbf16, #tpu.memory_space<vmem>>, vector<208x128xbf16>,
    return
  }
  func.func @transform_0(%arg0: i32) -> (i32, i32) {
    %c0_i32 = arith.constant 0 : i32
    %c0_i32_0 = arith.constant 0 : i32
    return %arg0, %c0_i32 : i32, i32
  }
  func.func @transform_1(%arg0: i32) -> (i32, i32) {
    %c0_i32 = arith.constant 0 : i32
    %c0_i32_0 = arith.constant 0 : i32
    %c0_i32_1 = arith.constant 0 : i32
    return %c0_i32, %c0_i32_0 : i32, i32
  }
  func.func @transform_2(%arg0: i32) -> (i32, i32) {
    %c0_i32 = arith.constant 0 : i32
    %c0_i32_0 = arith.constant 0 : i32
    %c0_i32_1 = arith.constant 0 : i32
    return %c0_i32, %c0_i32_0 : i32, i32
  }
  func.func @transform_3(%arg0: i32) -> (i32, i32) {
    %c0_i32 = arith.constant 0 : i32
    %c0_i32_0 = arith.constant 0 : i32
    return %arg0, %c0_i32 : i32, i32
  }
}

module attributes {stable_mosaic.version = 11 : i64} {
  func.func @_deconv3_logsoftmax_kernel(%arg0: i32, %arg1: memref<16x128xbf16, #tpu.memory_space<vmem>>, %arg2: memref<1x128x512xbf16, #tpu.memory_space<vmem>>, %arg3: memref<1x512xf32, #tpu.memory_space<vmem>>, %arg4: memref<1x16x512xf32, #tpu.memory_space<vmem>>) attributes {dimension_semantics = [#tpu.dimension_semantics<parallel>], iteration_bounds = array<i64: 2>, scalar_prefetch = 0 : i64, scratch_operands = 0 : i64, tpu.core_type = #tpu.core_type<tc>, window_params = [{pipeline_mode = #tpu.pipeline_mode<synchronous>, transform_indices = @transform_0, window_bounds = array<i64: 16, 128>}, {transform_indices = @transform_1, window_bounds = array<i64: 1, 128, 512>}, {pipeline_mode = #tpu.pipeline_mode<synchronous>, transform_indices = @transform_2, window_bounds = array<i64: 1, 512>}, {transform_indices = @transform_3, window_bounds = array<i64: 1, 16, 512>}]} {
    %c0 = arith.constant 0 : index
    %c0_0 = arith.constant 0 : index
    %0 = vector.load %arg1[%c0, %c0_0] : memref<16x128xbf16, #tpu.memory_space<vmem>>, vector<16x128xbf16>
    %c0_1 = arith.constant 0 : index
    %c0_2 = arith.constant 0 : index
    %c0_3 = arith.constant 0 : index
    %1 = vector.load %arg2[%c0_1, %c0_2, %c0_3] : memref<1x128x512xbf16, #tpu.memory_space<vmem>>, vector<1x128x512xbf16>
    %2 = vector.shape_cast %1 : vector<1x128x512xbf16> to vector<128x512xbf16>
    %cst = arith.constant dense<0.000000e+00> : vector<16x512xf32>
    %3 = tpu.matmul %0, %2, %cst {dimension_numbers = #tpu.dot_dimension_numbers<[1], [0], [0], [1], [0, 0, 1, 1], [], []>} : vector<16x128xbf16>, vector<128x512xbf16>, vector<16x512xf32> -> vector<16x512xf32>
    %c0_4 = arith.constant 0 : index
    %c0_5 = arith.constant 0 : index
    %4 = vector.load %arg3[%c0_4, %c0_5] : memref<1x512xf32, #tpu.memory_space<vmem>>, vector<1x512xf32>
    %5 = vector.broadcast %4 : vector<1x512xf32> to vector<16x512xf32>
    %6 = arith.addf %3, %5 : vector<16x512xf32>
    %7 = tpu.iota {dimensions = array<i32: 1>} : vector<16x512xi32>
    %c441_i32 = arith.constant 441 : i32
    %8 = vector.broadcast %c441_i32 : i32 to vector<16x512xi32>
    %9 = arith.cmpi slt, %7, %8 : vector<16x512xi32>
    %cst_6 = arith.constant -3.000000e+38 : f32
    %10 = vector.broadcast %cst_6 : f32 to vector<16x512xf32>
    %11 = arith.select %9, %6, %10 : vector<16x512xi1>, vector<16x512xf32>
    %cst_7 = arith.constant dense<0xFF800000> : vector<16xf32>
    %12 = vector.multi_reduction <maximumf>, %11, %cst_7 [1] : vector<16x512xf32> to vector<16xf32>
    %13 = vector.shape_cast %12 : vector<16xf32> to vector<16x1xf32>
    %cst_8 = arith.constant dense<0xFF800000> : vector<1xf32>
    %14 = vector.multi_reduction <maximumf>, %13, %cst_8 [0] : vector<16x1xf32> to vector<1xf32>
    %15 = vector.shape_cast %14 : vector<1xf32> to vector<1x1xf32>
    %16 = vector.broadcast %15 : vector<1x1xf32> to vector<16x512xf32>
    %17 = arith.subf %6, %16 : vector<16x512xf32>
    %18 = math.exp %17 : vector<16x512xf32>
    %cst_9 = arith.constant 0.000000e+00 : f32
    %19 = vector.broadcast %cst_9 : f32 to vector<16x512xf32>
    %20 = arith.select %9, %18, %19 : vector<16x512xi1>, vector<16x512xf32>
    %cst_10 = arith.constant dense<0.000000e+00> : vector<16xf32>
    %21 = vector.multi_reduction <add>, %20, %cst_10 [1] : vector<16x512xf32> to vector<16xf32>
    %22 = vector.shape_cast %21 : vector<16xf32> to vector<16x1xf32>
    %cst_11 = arith.constant dense<0.000000e+00> : vector<1xf32>
    %23 = vector.multi_reduction <add>, %22, %cst_11 [0] : vector<16x1xf32> to vector<1xf32>
    %24 = vector.shape_cast %23 : vector<1xf32> to vector<1x1xf32>
    %25 = vector.broadcast %15 : vector<1x1xf32> to vector<16x512xf32>
    %26 = arith.subf %6, %25 : vector<16x512xf32>
    %27 = math.log %24 : vector<1x1xf32>
    %28 = vector.broadcast %27 : vector<1x1xf32> to vector<16x512xf32>
    %29 = arith.subf %26, %28 : vector<16x512xf32>
    %c0_12 = arith.constant 0 : index
    %c0_13 = arith.constant 0 : index
    %c0_14 = arith.constant 0 : index
    %30 = vector.load %arg4[%c0_12, %c0_13, %c0_14] : memref<1x16x512xf32, #tpu.memory_space<vmem>>, vector<1x16x512xf32>
    %31 = vector.shape_cast %30 : vector<1x16x512xf32> to vector<16x512xf32>
    %32 = vector.shape_cast %29 : vector<16x512xf32> to vector<1x16x512xf32>
    tpu.vector_store %arg4[%c0_12, %c0_13, %c0_14], %32 {strides = array<i32>} : memref<1x16x512xf32, #tpu.memory_space<vmem>>, vector<1x16x512xf32>,
    return
  }
  func.func @transform_0(%arg0: i32) -> (i32, i32) {
    %c0_i32 = arith.constant 0 : i32
    %c0_i32_0 = arith.constant 0 : i32
    %c0_i32_1 = arith.constant 0 : i32
    return %c0_i32, %c0_i32_0 : i32, i32
  }
  func.func @transform_1(%arg0: i32) -> (i32, i32, i32) {
    %c0_i32 = arith.constant 0 : i32
    %c0_i32_0 = arith.constant 0 : i32
    %c0_i32_1 = arith.constant 0 : i32
    return %arg0, %c0_i32, %c0_i32_0 : i32, i32, i32
  }
  func.func @transform_2(%arg0: i32) -> (i32, i32) {
    %c0_i32 = arith.constant 0 : i32
    %c0_i32_0 = arith.constant 0 : i32
    %c0_i32_1 = arith.constant 0 : i32
    return %c0_i32, %c0_i32_0 : i32, i32
  }
  func.func @transform_3(%arg0: i32) -> (i32, i32, i32) {
    %c0_i32 = arith.constant 0 : i32
    %c0_i32_0 = arith.constant 0 : i32
    %c0_i32_1 = arith.constant 0 : i32
    return %arg0, %c0_i32, %c0_i32_0 : i32, i32, i32
  }
}

</mosaic_0001>

<llo_original>
// kernel: gaze_prediction_forward.6
$region0: #{gaze_prediction_forward.6}
  #allocation0 [shape = 'u32[]', space=smem, size = 0x4, offset = 0x4, fixed_abs, tag = 'smem constant byte address 0x4 - core index']
  #allocation1 [shape = 'u32[72,128]{1,0:T(1,128)}', space=vmem, size = 0x9000, scoped, tag = 'internal scratch']
  %s0 = inlined_call_operand.vmem [shape: bf16[800,256], index: 0, kind: input, shape index: {}]
  %s1 = inlined_call_operand.vmem [shape: bf16[256,128], index: 1, kind: input, shape index: {}]
  %s2 = inlined_call_operand.vmem [shape: f32[1,128], index: 2, kind: input, shape index: {}]
  %s3 = inlined_call_operand.vmem [shape: bf16[800,128], index: 3, kind: output, shape index: {}]
  %s4 = sld [smem:[#allocation0]]
  $region45: #{gaze_prediction_forward.6} parent=0
    _
  %s6 = ssub.s32 1, %s4
  %s7 = scalar_select 0, %s6, %s4
  loop: start=0, step=1, limit=4
  $region2: #{gaze_prediction_forward.6} parent=0 // loop_pre_header
    _
  $region3: #{gaze_prediction_forward.6} parent=0 // loop_header
    %s9 = sphi 0, %s13
    %p10 = scmp.ge.s32.totalorder %s9, 4
    %s19 = sphi 0, %s21
    %s22 = sphi 0, %s19
    %s23 = sphi 0, %s22
    %s39 = sphi 0, %s23
    %s43 = sphi 0, %s43
    %s45 = sphi 0, %s43
    %s46 = sphi 0, %s45
    %s60 = sphi 0, %s46
    %s64 = sphi 0, %s64
    %s66 = sphi 0, %s64
    %s67 = sphi 0, %s66
    %s81 = sphi 0, %s67
    %s87 = sphi 0, %s89
    %s90 = sphi 0, %s87
    %s91 = sphi 0, %s90
    %s107 = sphi 0, %s91
  $region4: #{gaze_prediction_forward.6} parent=0 // loop_header_branch
    %12 = sbr.rel (%p10) target = $region8
  $region5: #{gaze_prediction_forward.6} parent=0 // loop_body
    %s14 = ssub.s32 %s9, 1
    %s15 = ssub.s32 %s9, 2
    %s16 = sadd.s32 %s9, 1
    %s17 = ssub.s32 %s9, %s16
    %p18 = scmp.eq.s32.totalorder %s17, 0
    %s20 = sadd.s32 %s19, 1
    %s21 = scalar_select %p18, %s19, %s20
    %p24 = pneg %p18
    %p25 = scmp.eq.s32.totalorder %s9, 1
    %p26 = por %p24, %p25
    %p27 = scmp.ne.s32.totalorder %s19, %s22
    %p28 = scmp.eq.s32.totalorder %s9, 0
    %p29 = por %p27, %p28
    %p30 = scmp.ne.s32.totalorder %s19, %s22
    %p31 = scmp.eq.s32.totalorder %s14, 1
    %p32 = por %p30, %p31
    %p33 = scmp.ne.s32.totalorder %s22, %s23
    %p34 = scmp.eq.s32.totalorder %s14, 0
    %p35 = por %p33, %p34
    %p36 = scmp.ne.s32.totalorder %s22, %s23
    %p37 = scmp.eq.s32.totalorder %s15, 1
    %p38 = por %p36, %p37
    %p40 = scmp.ne.s32.totalorder %s23, %s39
    %p41 = scmp.eq.s32.totalorder %s15, 0
    %p42 = por %p40, %p41
    %s44 = sadd.s32 %s43, 1
    %p47 = scmp.eq.s32.totalorder %s9, 1
    %p48 = scmp.ne.s32.totalorder %s43, %s45
    %p49 = scmp.eq.s32.totalorder %s9, 0
    %p50 = por %p48, %p49
    %p51 = scmp.ne.s32.totalorder %s43, %s45
    %p52 = scmp.eq.s32.totalorder %s14, 1
    %p53 = por %p51, %p52
    %p54 = scmp.ne.s32.totalorder %s45, %s46
    %p55 = scmp.eq.s32.totalorder %s14, 0
    %p56 = por %p54, %p55
    %p57 = scmp.ne.s32.totalorder %s45, %s46
    %p58 = scmp.eq.s32.totalorder %s15, 1
    %p59 = por %p57, %p58
    %p61 = scmp.ne.s32.totalorder %s46, %s60
    %p62 = scmp.eq.s32.totalorder %s15, 0
    %p63 = por %p61, %p62
    %s65 = sadd.s32 %s64, 1
    %p68 = scmp.eq.s32.totalorder %s9, 1
    %p69 = scmp.ne.s32.totalorder %s64, %s66
    %p70 = scmp.eq.s32.totalorder %s9, 0
    %p71 = por %p69, %p70
    %p72 = scmp.ne.s32.totalorder %s64, %s66
    %p73 = scmp.eq.s32.totalorder %s14, 1
    %p74 = por %p72, %p73
    %p75 = scmp.ne.s32.totalorder %s66, %s67
    %p76 = scmp.eq.s32.totalorder %s14, 0
    %p77 = por %p75, %p76
    %p78 = scmp.ne.s32.totalorder %s66, %s67
    %p79 = scmp.eq.s32.totalorder %s15, 1
    %p80 = por %p78, %p79
    %p82 = scmp.ne.s32.totalorder %s67, %s81
    %p83 = scmp.eq.s32.totalorder %s15, 0
    %p84 = por %p82, %p83
    %s85 = ssub.s32 %s9, %s16
    %p86 = scmp.eq.s32.totalorder %s85, 0
    %s88 = sadd.s32 %s87, 1
    %s89 = scalar_select %p86, %s87, %s88
    %p92 = pneg %p86
    %p93 = scmp.eq.s32.totalorder %s9, 1
    %p94 = por %p92, %p93
    %p95 = scmp.ne.s32.totalorder %s87, %s90
    %p96 = scmp.eq.s32.totalorder %s9, 0
    %p97 = por %p95, %p96
    %p98 = scmp.ne.s32.totalorder %s87, %s90
    %p99 = scmp.eq.s32.totalorder %s14, 1
    %p100 = por %p98, %p99
    %p101 = scmp.ne.s32.totalorder %s90, %s91
    %p102 = scmp.eq.s32.totalorder %s14, 0
    %p103 = por %p101, %p102
    %p104 = scmp.ne.s32.totalorder %s90, %s91
    %p105 = scmp.eq.s32.totalorder %s15, 1
    %p106 = por %p104, %p105
    %p108 = scmp.ne.s32.totalorder %s91, %s107
    %p109 = scmp.eq.s32.totalorder %s15, 0
    %p110 = por %p108, %p109
    %p111 = scmp.le.s32.totalorder 1, %s9
    %p112 = scmp.lt.s32.totalorder %s9, 3
    %p113 = pnand %p111, %p112
    %p114 = pneg %p113
    // Predicated region
    $region9: #{gaze_prediction_forward.6} parent=5 // pred_check
      _
    $region10: #{gaze_prediction_forward.6} parent=5 // pred_check_branch
      %116 = sbr.rel (%p113) target = $region12
    $region11: #{gaze_prediction_forward.6} parent=5 // pred_region
      %s117 = ssub.s32 %s9, 1
      // Predicated region
      $region13: #{gaze_prediction_forward.6} parent=11 // pred_check
        %p118 = pneg %p56
      $region14: #{gaze_prediction_forward.6} parent=11 // pred_check_branch
        %120 = sbr.rel (%p118) target = $region16
      $region15: #{gaze_prediction_forward.6} parent=11 // pred_region
        _
      $region16: #{gaze_prediction_forward.6} parent=11 // pred_fallthru
        _
      // Predicated region
      $region17: #{gaze_prediction_forward.6} parent=11 // pred_check
        %p121 = pneg %p77
      $region18: #{gaze_prediction_forward.6} parent=11 // pred_check_branch
        %123 = sbr.rel (%p121) target = $region20
      $region19: #{gaze_prediction_forward.6} parent=11 // pred_region
        _
      $region20: #{gaze_prediction_forward.6} parent=11 // pred_fallthru
        _
    $region12: #{gaze_prediction_forward.6} parent=5 // pred_fallthru
      _
    %p124 = scmp.lt.s32.totalorder %s9, 2
    // Predicated region
    $region21: #{gaze_prediction_forward.6} parent=5 // pred_check
      %p125 = pneg %p124
    $region22: #{gaze_prediction_forward.6} parent=5 // pred_check_branch
      %127 = sbr.rel (%p125) target = $region24
    $region23: #{gaze_prediction_forward.6} parent=5 // pred_region
      // Predicated region
      $region25: #{gaze_prediction_forward.6} parent=23 // pred_check
        %p128 = pneg %p29
      $region26: #{gaze_prediction_forward.6} parent=23 // pred_check_branch
        %130 = sbr.rel (%p128) target = $region28
      $region27: #{gaze_prediction_forward.6} parent=23 // pred_region
        %s131 = smul.u32 50, %s9
        %p132 = scmp.lt.s32.totalorder %s131, 99
        %s133 = scalar_select %p132, %s131, 99
        %s134 = smul.addr %s133, 2
        %s135 = smul.addr %s134, 4
        %s136 = scalar_lea.vmem %s0, %s135
        %s137 = smul.u32 50, %s9
      $region28: #{gaze_prediction_forward.6} parent=23 // pred_fallthru
        _
    $region24: #{gaze_prediction_forward.6} parent=5 // pred_fallthru
      _
    %p138 = scmp.le.s32.totalorder 1, %s9
    %p139 = scmp.lt.s32.totalorder %s9, 3
    %p140 = pnand %p138, %p139
    %p141 = pneg %p140
    // Predicated region
    $region29: #{gaze_prediction_forward.6} parent=5 // pred_check
      _
    $region30: #{gaze_prediction_forward.6} parent=5 // pred_check_branch
      %143 = sbr.rel (%p140) target = $region32
    $region31: #{gaze_prediction_forward.6} parent=5 // pred_region
      %s144 = ssub.s32 %s9, 1
      %s145 = smul.u32 50, %s14
      %p146 = scmp.lt.s32.totalorder %s145, 99
      %s147 = scalar_select %p146, %s145, 99
      %s148 = smul.addr %s147, 2
      %s149 = smul.addr %s148, 4
      %s150 = scalar_lea.vmem %s0, %s149
      %p151 = pneg %p35
      %p152 = pneg %p32
      %p153 = pneg %p56
      %p154 = pneg %p53
      %p155 = pneg %p77
      %p156 = pneg %p74
      %p157 = pneg %p103
      %p158 = pneg %p100
      %s159 = smul.u32 50, %s14
      %p160 = scmp.lt.s32.totalorder %s159, 99
      %s161 = scalar_select %p160, %s159, 99
      %s162 = smul.addr %s161, 4
      %s163 = scalar_lea.vmem %s3, %s162
      %s164 = smul.u32 50, %s14
      %p165 = scmp.lt.s32.totalorder %s164, 99
      %s166 = scalar_select %p165, %s164, 99
      %s167 = smul.addr %s166, 2
      %s168 = smul.addr %s167, 4
      %s169 = scalar_lea.vmem %s0, %s168
      %s170 = smul.u32 50, %s14
      %s171 = smul.u32 50, %s14
      %p172 = scmp.lt.s32.totalorder %s171, 99
      %s173 = scalar_select %p172, %s171, 99
      %s174 = smul.addr %s173, 4
      %s175 = scalar_lea.vmem %s3, %s174
      %s176 = smul.u32 50, %s14
      %v177 = vld [vmem:[%s169] sm:$0xff]
      %v178 = vld [vmem:[%s169 + $0x8] sm:$0xff]
      %v179 = vld [vmem:[%s169 + $0x10] sm:$0xff]
      %v180 = vld [vmem:[%s169 + $0x18] sm:$0xff]
      %v181 = vld [vmem:[%s169 + $0x20] sm:$0xff]
      %v182 = vld [vmem:[%s169 + $0x28] sm:$0xff]
      %v183 = vld [vmem:[%s169 + $0x30] sm:$0xff]
      %v184 = vld [vmem:[%s169 + $0x38] sm:$0xff]
      %v185 = vld [vmem:[%s169 + $0x40] sm:$0xff]
      %v186 = vld [vmem:[%s169 + $0x48] sm:$0xff]
      %v187 = vld [vmem:[%s169 + $0x50] sm:$0xff]
      %v188 = vld [vmem:[%s169 + $0x58] sm:$0xff]
      %v189 = vld [vmem:[%s169 + $0x60] sm:$0xff]
      %v190 = vld [vmem:[%s169 + $0x68] sm:$0xff]
      %v191 = vld [vmem:[%s169 + $0x70] sm:$0xff]
      %v192 = vld [vmem:[%s169 + $0x78] sm:$0xff]
      %v193 = vld [vmem:[%s169 + $0x80] sm:$0xff]
      %v194 = vld [vmem:[%s169 + $0x88] sm:$0xff]
      %v195 = vld [vmem:[%s169 + $0x90] sm:$0xff]
      %v196 = vld [vmem:[%s169 + $0x98] sm:$0xff]
      %v197 = vld [vmem:[%s169 + $0xa0] sm:$0xff]
      %v198 = vld [vmem:[%s169 + $0xa8] sm:$0xff]
      %v199 = vld [vmem:[%s169 + $0xb0] sm:$0xff]
      %v200 = vld [vmem:[%s169 + $0xb8] sm:$0xff]
      %v201 = vld [vmem:[%s169 + $0xc0] sm:$0xff]
      %v202 = vld [vmem:[%s169 + $0xc8] sm:$0xff]
      %v203 = vld [vmem:[%s169 + $0xd0] sm:$0xff]
      %v204 = vld [vmem:[%s169 + $0xd8] sm:$0xff]
      %v205 = vld [vmem:[%s169 + $0xe0] sm:$0xff]
      %v206 = vld [vmem:[%s169 + $0xe8] sm:$0xff]
      %v207 = vld [vmem:[%s169 + $0xf0] sm:$0xff]
      %v208 = vld [vmem:[%s169 + $0xf8] sm:$0xff]
      %v209 = vld [vmem:[%s169 + $0x100] sm:$0xff]
      %v210 = vld [vmem:[%s169 + $0x108] sm:$0xff]
      %v211 = vld [vmem:[%s169 + $0x110] sm:$0xff]
      %v212 = vld [vmem:[%s169 + $0x118] sm:$0xff]
      %v213 = vld [vmem:[%s169 + $0x120] sm:$0xff]
      %v214 = vld [vmem:[%s169 + $0x128] sm:$0xff]
      %v215 = vld [vmem:[%s169 + $0x130] sm:$0xff]
      %v216 = vld [vmem:[%s169 + $0x138] sm:$0xff]
      %v217 = vld [vmem:[%s169 + $0x140] sm:$0xff]
      %v218 = vld [vmem:[%s169 + $0x148] sm:$0xff]
      %v219 = vld [vmem:[%s169 + $0x150] sm:$0xff]
      %v220 = vld [vmem:[%s169 + $0x158] sm:$0xff]
      %v221 = vld [vmem:[%s169 + $0x160] sm:$0xff]
      %v222 = vld [vmem:[%s169 + $0x168] sm:$0xff]
      %v223 = vld [vmem:[%s169 + $0x170] sm:$0xff]
      %v224 = vld [vmem:[%s169 + $0x178] sm:$0xff]
      %v225 = vld [vmem:[%s169 + $0x180] sm:$0xff]
      %v226 = vld [vmem:[%s169 + $0x188] sm:$0xff]
      %v227 = vld [vmem:[%s1] sm:$0xf]
      %v228 = vld [vmem:[%s1 + $0x4] sm:$0xf]
      %v229 = vld [vmem:[%s1 + $0x8] sm:$0xf]
      %v230 = vld [vmem:[%s1 + $0xc] sm:$0xf]
      %v231 = vld [vmem:[%s1 + $0x10] sm:$0xf]
      %v232 = vld [vmem:[%s1 + $0x14] sm:$0xf]
      %v233 = vld [vmem:[%s1 + $0x18] sm:$0xf]
      %v234 = vld [vmem:[%s1 + $0x1c] sm:$0xf]
      %v235 = vld [vmem:[%s1 + $0x20] sm:$0xf]
      %v236 = vld [vmem:[%s1 + $0x24] sm:$0xf]
      %v237 = vld [vmem:[%s1 + $0x28] sm:$0xf]
      %v238 = vld [vmem:[%s1 + $0x2c] sm:$0xf]
      %v239 = vld [vmem:[%s1 + $0x30] sm:$0xf]
      %v240 = vld [vmem:[%s1 + $0x34] sm:$0xf]
      %v241 = vld [vmem:[%s1 + $0x38] sm:$0xf]
      %v242 = vld [vmem:[%s1 + $0x3c] sm:$0xf]
      %v243 = vld [vmem:[%s1 + $0x40] sm:$0xf]
      %v244 = vld [vmem:[%s1 + $0x44] sm:$0xf]
      %v245 = vld [vmem:[%s1 + $0x48] sm:$0xf]
      %v246 = vld [vmem:[%s1 + $0x4c] sm:$0xf]
      %v247 = vld [vmem:[%s1 + $0x50] sm:$0xf]
      %v248 = vld [vmem:[%s1 + $0x54] sm:$0xf]
      %v249 = vld [vmem:[%s1 + $0x58] sm:$0xf]
      %v250 = vld [vmem:[%s1 + $0x5c] sm:$0xf]
      %v251 = vld [vmem:[%s1 + $0x60] sm:$0xf]
      %v252 = vld [vmem:[%s1 + $0x64] sm:$0xf]
      %v253 = vld [vmem:[%s1 + $0x68] sm:$0xf]
      %v254 = vld [vmem:[%s1 + $0x6c] sm:$0xf]
      %v255 = vld [vmem:[%s1 + $0x70] sm:$0xf]
      %v256 = vld [vmem:[%s1 + $0x74] sm:$0xf]
      %v257 = vld [vmem:[%s1 + $0x78] sm:$0xf]
      %v258 = vld [vmem:[%s1 + $0x7c] sm:$0xf]
      %v259 = vld [vmem:[%s2] sm:$0x1]
      %v261 = vperm.slane %v259, 0
      %v313 = vunpack.c.l.b16 %v177
      %v314 = vunpack.c.h.b16 %v177
      %v315 = vunpack.c.l.b16 %v178
      %v316 = vunpack.c.h.b16 %v178
      %v317 = vunpack.c.l.b16 %v179
      %v318 = vunpack.c.h.b16 %v179
      %v319 = vunpack.c.l.b16 %v180
      %v320 = vunpack.c.h.b16 %v180
      %v321 = vunpack.c.l.b16 %v181
      %v322 = vunpack.c.h.b16 %v181
      %v323 = vunpack.c.l.b16 %v182
      %v324 = vunpack.c.h.b16 %v182
      %v325 = vunpack.c.l.b16 %v183
      %v326 = vunpack.c.h.b16 %v183
      %v327 = vunpack.c.l.b16 %v184
      %v328 = vunpack.c.h.b16 %v184
      %v329 = vunpack.c.l.b16 %v185
      %v330 = vunpack.c.h.b16 %v185
      %v331 = vunpack.c.l.b16 %v186
      %v332 = vunpack.c.h.b16 %v186
      %v333 = vunpack.c.l.b16 %v187
      %v334 = vunpack.c.h.b16 %v187
      %v335 = vunpack.c.l.b16 %v188
      %v336 = vunpack.c.h.b16 %v188
      %v337 = vunpack.c.l.b16 %v189
      %v338 = vunpack.c.h.b16 %v189
      %v339 = vunpack.c.l.b16 %v190
      %v340 = vunpack.c.h.b16 %v190
      %v341 = vunpack.c.l.b16 %v191
      %v342 = vunpack.c.h.b16 %v191
      %v343 = vunpack.c.l.b16 %v192
      %v344 = vunpack.c.h.b16 %v192
      %v345 = vunpack.c.l.b16 %v193
      %v346 = vunpack.c.h.b16 %v193
      %v347 = vunpack.c.l.b16 %v194
      %v348 = vunpack.c.h.b16 %v194
      %v349 = vunpack.c.l.b16 %v195
      %v350 = vunpack.c.h.b16 %v195
      %v351 = vunpack.c.l.b16 %v196
      %v352 = vunpack.c.h.b16 %v196
      %v353 = vunpack.c.l.b16 %v197
      %v354 = vunpack.c.h.b16 %v197
      %v355 = vunpack.c.l.b16 %v198
      %v356 = vunpack.c.h.b16 %v198
      %v357 = vunpack.c.l.b16 %v199
      %v358 = vunpack.c.h.b16 %v199
      %v359 = vunpack.c.l.b16 %v200
      %v360 = vunpack.c.h.b16 %v200
      %v361 = vunpack.c.l.b16 %v201
      %v362 = vunpack.c.h.b16 %v201
      %v363 = vunpack.c.l.b16 %v202
      %v364 = vunpack.c.h.b16 %v202
      %v365 = vunpack.c.l.b16 %v203
      %v366 = vunpack.c.h.b16 %v203
      %v367 = vunpack.c.l.b16 %v204
      %v368 = vunpack.c.h.b16 %v204
      %v369 = vunpack.c.l.b16 %v205
      %v370 = vunpack.c.h.b16 %v205
      %v371 = vunpack.c.l.b16 %v206
      %v372 = vunpack.c.h.b16 %v206
      %v373 = vunpack.c.l.b16 %v207
      %v374 = vunpack.c.h.b16 %v207
      %v375 = vunpack.c.l.b16 %v208
      %v376 = vunpack.c.h.b16 %v208
      %v377 = vunpack.c.l.b16 %v209
      %v378 = vunpack.c.h.b16 %v209
      %v379 = vunpack.c.l.b16 %v210
      %v380 = vunpack.c.h.b16 %v210
      %v381 = vunpack.c.l.b16 %v211
      %v382 = vunpack.c.h.b16 %v211
      %v383 = vunpack.c.l.b16 %v212
      %v384 = vunpack.c.h.b16 %v212
      %v385 = vunpack.c.l.b16 %v213
      %v386 = vunpack.c.h.b16 %v213
      %v387 = vunpack.c.l.b16 %v214
      %v388 = vunpack.c.h.b16 %v214
      %v389 = vunpack.c.l.b16 %v215
      %v390 = vunpack.c.h.b16 %v215
      %v391 = vunpack.c.l.b16 %v216
      %v392 = vunpack.c.h.b16 %v216
      %v393 = vunpack.c.l.b16 %v217
      %v394 = vunpack.c.h.b16 %v217
      %v395 = vunpack.c.l.b16 %v218
      %v396 = vunpack.c.h.b16 %v218
      %v397 = vunpack.c.l.b16 %v219
      %v398 = vunpack.c.h.b16 %v219
      %v399 = vunpack.c.l.b16 %v220
      %v400 = vunpack.c.h.b16 %v220
      %v401 = vunpack.c.l.b16 %v221
      %v402 = vunpack.c.h.b16 %v221
      %v403 = vunpack.c.l.b16 %v222
      %v404 = vunpack.c.h.b16 %v222
      %v405 = vunpack.c.l.b16 %v223
      %v406 = vunpack.c.h.b16 %v223
      %v407 = vunpack.c.l.b16 %v224
      %v408 = vunpack.c.h.b16 %v224
      %v409 = vunpack.c.l.b16 %v225
      %v410 = vunpack.c.h.b16 %v225
      %v411 = vunpack.c.l.b16 %v226
      %v412 = vunpack.c.h.b16 %v226
      %v413 = vpack.c.b16 %v315, %v313
      %v414 = vpack.c.b16 %v316, %v314
      %v415 = vpack.c.b16 %v319, %v317
      %v416 = vpack.c.b16 %v320, %v318
      %v417 = vpack.c.b16 %v323, %v321
      %v418 = vpack.c.b16 %v324, %v322
      %v419 = vpack.c.b16 %v327, %v325
      %v420 = vpack.c.b16 %v328, %v326
      %v421 = vpack.c.b16 %v331, %v329
      %v422 = vpack.c.b16 %v332, %v330
      %v423 = vpack.c.b16 %v335, %v333
      %v424 = vpack.c.b16 %v336, %v334
      %v425 = vpack.c.b16 %v339, %v337
      %v426 = vpack.c.b16 %v340, %v338
      %v427 = vpack.c.b16 %v343, %v341
      %v428 = vpack.c.b16 %v344, %v342
      %v429 = vpack.c.b16 %v347, %v345
      %v430 = vpack.c.b16 %v348, %v346
      %v431 = vpack.c.b16 %v351, %v349
      %v432 = vpack.c.b16 %v352, %v350
      %v433 = vpack.c.b16 %v355, %v353
      %v434 = vpack.c.b16 %v356, %v354
      %v435 = vpack.c.b16 %v359, %v357
      %v436 = vpack.c.b16 %v360, %v358
      %v437 = vpack.c.b16 %v363, %v361
      %v438 = vpack.c.b16 %v364, %v362
      %v439 = vpack.c.b16 %v367, %v365
      %v440 = vpack.c.b16 %v368, %v366
      %v441 = vpack.c.b16 %v371, %v369
      %v442 = vpack.c.b16 %v372, %v370
      %v443 = vpack.c.b16 %v375, %v373
      %v444 = vpack.c.b16 %v376, %v374
      %v445 = vpack.c.b16 %v379, %v377
      %v446 = vpack.c.b16 %v380, %v378
      %v447 = vpack.c.b16 %v383, %v381
      %v448 = vpack.c.b16 %v384, %v382
      %v449 = vpack.c.b16 %v387, %v385
      %v450 = vpack.c.b16 %v388, %v386
      %v451 = vpack.c.b16 %v391, %v389
      %v452 = vpack.c.b16 %v392, %v390
      %v453 = vpack.c.b16 %v395, %v393
      %v454 = vpack.c.b16 %v396, %v394
      %v455 = vpack.c.b16 %v399, %v397
      %v456 = vpack.c.b16 %v400, %v398
      %v457 = vpack.c.b16 %v403, %v401
      %v458 = vpack.c.b16 %v404, %v402
      %v459 = vpack.c.b16 %v407, %v405
      %v460 = vpack.c.b16 %v408, %v406
      %v461 = vpack.c.b16 %v411, %v409
      %v462 = vpack.c.b16 %v412, %v410
      %v545 = vunpack.c.l.b16 %v227
      %v546 = vunpack.c.l.b16 %v228
      %v547 = vunpack.c.l.b16 %v229
      %v548 = vunpack.c.l.b16 %v230
      %v549 = vunpack.c.l.b16 %v231
      %v550 = vunpack.c.l.b16 %v232
      %v551 = vunpack.c.l.b16 %v233
      %v552 = vunpack.c.l.b16 %v234
      %v553 = vunpack.c.l.b16 %v235
      %v554 = vunpack.c.l.b16 %v236
      %v555 = vunpack.c.l.b16 %v237
      %v556 = vunpack.c.l.b16 %v238
      %v557 = vunpack.c.l.b16 %v239
      %v558 = vunpack.c.l.b16 %v240
      %v559 = vunpack.c.l.b16 %v241
      %v560 = vunpack.c.l.b16 %v242
      %v561 = vunpack.c.l.b16 %v243
      %v562 = vunpack.c.l.b16 %v244
      %v563 = vunpack.c.l.b16 %v245
      %v564 = vunpack.c.l.b16 %v246
      %v565 = vunpack.c.l.b16 %v247
      %v566 = vunpack.c.l.b16 %v248
      %v567 = vunpack.c.l.b16 %v249
      %v568 = vunpack.c.l.b16 %v250
      %v569 = vunpack.c.l.b16 %v251
      %v570 = vunpack.c.l.b16 %v252
      %v571 = vunpack.c.l.b16 %v253
      %v572 = vunpack.c.l.b16 %v254
      %v573 = vunpack.c.l.b16 %v255
      %v574 = vunpack.c.l.b16 %v256
      %v575 = vunpack.c.l.b16 %v257
      %v576 = vunpack.c.l.b16 %v258
      %v577 = vpack.c.b16 %v546, %v545
      %v578 = vpack.c.b16 %v548, %v547
      %v579 = vpack.c.b16 %v550, %v549
      %v580 = vpack.c.b16 %v552, %v551
      %v581 = vpack.c.b16 %v554, %v553
      %v582 = vpack.c.b16 %v556, %v555
      %v583 = vpack.c.b16 %v558, %v557
      %v584 = vpack.c.b16 %v560, %v559
      %v585 = vpack.c.b16 %v562, %v561
      %v586 = vpack.c.b16 %v564, %v563
      %v587 = vpack.c.b16 %v566, %v565
      %v588 = vpack.c.b16 %v568, %v567
      %v589 = vpack.c.b16 %v570, %v569
      %v590 = vpack.c.b16 %v572, %v571
      %v591 = vpack.c.b16 %v574, %v573
      %v592 = vpack.c.b16 %v576, %v575
      %609 = vmatpush.bf16.msra.mxu0 %v584
      %610 = vmatpush.bf16.msra.mxu0 %v583
      %611 = vmatpush.bf16.msra.mxu0 %v582
      %612 = vmatpush.bf16.msra.mxu0 %v581
      %613 = vmatpush.bf16.msra.mxu0 %v580
      %614 = vmatpush.bf16.msra.mxu0 %v579
      %615 = vmatpush.bf16.msra.mxu0 %v578
      %616 = vmatpush.bf16.msra.mxu0 %v577
      %617 = vmatmul.bf16.gmra.mxu0 %v413
      %v618 = vpop.f32.mrf.mxu0
      %v619 = vadd.f32 %v261, %v618
      %v620 = vpop.f32.mrf.mxu0
      %v621 = vadd.f32 %v261, %v620
      %622 = vmatmul.bf16.gmra.mxu0 %v415
      %v623 = vpop.f32.mrf.mxu0
      %v624 = vadd.f32 %v261, %v623
      %v625 = vpop.f32.mrf.mxu0
      %v626 = vadd.f32 %v261, %v625
      %627 = vmatmul.bf16.gmra.mxu0 %v417
      %v628 = vpop.f32.mrf.mxu0
      %v629 = vadd.f32 %v261, %v628
      %v630 = vpop.f32.mrf.mxu0
      %v631 = vadd.f32 %v261, %v630
      %632 = vmatmul.bf16.gmra.mxu0 %v419
      %v633 = vpop.f32.mrf.mxu0
      %v634 = vadd.f32 %v261, %v633
      %v635 = vpop.f32.mrf.mxu0
      %v636 = vadd.f32 %v261, %v635
      %637 = vmatmul.bf16.gmra.mxu0 %v421
      %v638 = vpop.f32.mrf.mxu0
      %v639 = vadd.f32 %v261, %v638
      %v640 = vpop.f32.mrf.mxu0
      %v641 = vadd.f32 %v261, %v640
      %642 = vmatmul.bf16.gmra.mxu0 %v423
      %v643 = vpop.f32.mrf.mxu0
      %v644 = vadd.f32 %v261, %v643
      %v645 = vpop.f32.mrf.mxu0
      %v646 = vadd.f32 %v261, %v645
      %647 = vmatmul.bf16.gmra.mxu0 %v425
      %v648 = vpop.f32.mrf.mxu0
      %v649 = vadd.f32 %v261, %v648
      %v650 = vpop.f32.mrf.mxu0
      %v651 = vadd.f32 %v261, %v650
      %652 = vmatmul.bf16.gmra.mxu0 %v427
      %v653 = vpop.f32.mrf.mxu0
      %v654 = vadd.f32 %v261, %v653
      %v655 = vpop.f32.mrf.mxu0
      %v656 = vadd.f32 %v261, %v655
      %657 = vmatmul.bf16.gmra.mxu0 %v429
      %v658 = vpop.f32.mrf.mxu0
      %v659 = vadd.f32 %v261, %v658
      %v660 = vpop.f32.mrf.mxu0
      %v661 = vadd.f32 %v261, %v660
      %662 = vmatmul.bf16.gmra.mxu0 %v431
      %v663 = vpop.f32.mrf.mxu0
      %v664 = vadd.f32 %v261, %v663
      %v665 = vpop.f32.mrf.mxu0
      %v666 = vadd.f32 %v261, %v665
      %667 = vmatmul.bf16.gmra.mxu0 %v433
      %v668 = vpop.f32.mrf.mxu0
      %v669 = vadd.f32 %v261, %v668
      %v670 = vpop.f32.mrf.mxu0
      %v671 = vadd.f32 %v261, %v670
      %672 = vmatmul.bf16.gmra.mxu0 %v435
      %v673 = vpop.f32.mrf.mxu0
      %v674 = vadd.f32 %v261, %v673
      %v675 = vpop.f32.mrf.mxu0
      %v676 = vadd.f32 %v261, %v675
      %677 = vmatmul.bf16.gmra.mxu0 %v437
      %v678 = vpop.f32.mrf.mxu0
      %v679 = vadd.f32 %v261, %v678
      %v680 = vpop.f32.mrf.mxu0
      %v681 = vadd.f32 %v261, %v680
      %682 = vmatmul.bf16.gmra.mxu0 %v439
      %v683 = vpop.f32.mrf.mxu0
      %v684 = vadd.f32 %v261, %v683
      %v685 = vpop.f32.mrf.mxu0
      %v686 = vadd.f32 %v261, %v685
      %687 = vmatmul.bf16.gmra.mxu0 %v441
      %v688 = vpop.f32.mrf.mxu0
      %v689 = vadd.f32 %v261, %v688
      %v690 = vpop.f32.mrf.mxu0
      %v691 = vadd.f32 %v261, %v690
      %692 = vmatmul.bf16.gmra.mxu0 %v443
      %v693 = vpop.f32.mrf.mxu0
      %v694 = vadd.f32 %v261, %v693
      %v695 = vpop.f32.mrf.mxu0
      %v696 = vadd.f32 %v261, %v695
      %697 = vmatmul.bf16.gmra.mxu0 %v445
      %v698 = vpop.f32.mrf.mxu0
      %v699 = vadd.f32 %v261, %v698
      %v700 = vpop.f32.mrf.mxu0
      %v701 = vadd.f32 %v261, %v700
      %702 = vmatmul.bf16.gmra.mxu0 %v447
      %v703 = vpop.f32.mrf.mxu0
      %v704 = vadd.f32 %v261, %v703
      %v705 = vpop.f32.mrf.mxu0
      %v706 = vadd.f32 %v261, %v705
      %707 = vmatmul.bf16.gmra.mxu0 %v449
      %v708 = vpop.f32.mrf.mxu0
      %v709 = vadd.f32 %v261, %v708
      %v710 = vpop.f32.mrf.mxu0
      %v711 = vadd.f32 %v261, %v710
      %712 = vmatmul.bf16.gmra.mxu0 %v451
      %v713 = vpop.f32.mrf.mxu0
      %v714 = vadd.f32 %v261, %v713
      %v715 = vpop.f32.mrf.mxu0
      %v716 = vadd.f32 %v261, %v715
      %717 = vmatmul.bf16.gmra.mxu0 %v453
      %v718 = vpop.f32.mrf.mxu0
      %v719 = vadd.f32 %v261, %v718
      %v720 = vpop.f32.mrf.mxu0
      %v721 = vadd.f32 %v261, %v720
      %722 = vmatmul.bf16.gmra.mxu0 %v455
      %v723 = vpop.f32.mrf.mxu0
      %v724 = vadd.f32 %v261, %v723
      %v725 = vpop.f32.mrf.mxu0
      %v726 = vadd.f32 %v261, %v725
      %727 = vmatmul.bf16.gmra.mxu0 %v457
      %v728 = vpop.f32.mrf.mxu0
      %v729 = vadd.f32 %v261, %v728
      %v730 = vpop.f32.mrf.mxu0
      %v731 = vadd.f32 %v261, %v730
      %732 = vmatmul.bf16.gmra.mxu0 %v459
      %v733 = vpop.f32.mrf.mxu0
      %v734 = vadd.f32 %v261, %v733
      %v735 = vpop.f32.mrf.mxu0
      %v736 = vadd.f32 %v261, %v735
      %737 = vmatmul.bf16.gmra.mxu0 %v461
      %v738 = vpop.f32.mrf.mxu0
      %v739 = vadd.f32 %v261, %v738
      %v740 = vpop.f32.mrf.mxu0
      %v741 = vadd.f32 %v261, %v740
      %742 = vdwg.mxu0
      %743 = vmatpush.bf16.msra.mxu0 %v592
      %744 = vmatpush.bf16.msra.mxu0 %v591
      %745 = vmatpush.bf16.msra.mxu0 %v590
      %746 = vmatpush.bf16.msra.mxu0 %v589
      %747 = vmatpush.bf16.msra.mxu0 %v588
      %748 = vmatpush.bf16.msra.mxu0 %v587
      %749 = vmatpush.bf16.msra.mxu0 %v586
      %750 = vmatpush.bf16.msra.mxu0 %v585
      %751 = vmatmul.bf16.gmra.mxu0 %v414
      %v752 = vpop.f32.mrf.mxu0
      %v753 = vadd.f32 %v619, %v752
      %v754 = vpop.f32.mrf.mxu0
      %v755 = vadd.f32 %v621, %v754
      %756 = vmatmul.bf16.gmra.mxu0 %v416
      %v757 = vpop.f32.mrf.mxu0
      %v758 = vadd.f32 %v624, %v757
      %v759 = vpop.f32.mrf.mxu0
      %v760 = vadd.f32 %v626, %v759
      %761 = vmatmul.bf16.gmra.mxu0 %v418
      %v762 = vpop.f32.mrf.mxu0
      %v763 = vadd.f32 %v629, %v762
      %v764 = vpop.f32.mrf.mxu0
      %v765 = vadd.f32 %v631, %v764
      %766 = vmatmul.bf16.gmra.mxu0 %v420
      %v767 = vpop.f32.mrf.mxu0
      %v768 = vadd.f32 %v634, %v767
      %v769 = vpop.f32.mrf.mxu0
      %v770 = vadd.f32 %v636, %v769
      %771 = vmatmul.bf16.gmra.mxu0 %v422
      %v772 = vpop.f32.mrf.mxu0
      %v773 = vadd.f32 %v639, %v772
      %v774 = vpop.f32.mrf.mxu0
      %v775 = vadd.f32 %v641, %v774
      %776 = vmatmul.bf16.gmra.mxu0 %v424
      %v777 = vpop.f32.mrf.mxu0
      %v778 = vadd.f32 %v644, %v777
      %v779 = vpop.f32.mrf.mxu0
      %v780 = vadd.f32 %v646, %v779
      %781 = vmatmul.bf16.gmra.mxu0 %v426
      %v782 = vpop.f32.mrf.mxu0
      %v783 = vadd.f32 %v649, %v782
      %v784 = vpop.f32.mrf.mxu0
      %v785 = vadd.f32 %v651, %v784
      %786 = vmatmul.bf16.gmra.mxu0 %v428
      %v787 = vpop.f32.mrf.mxu0
      %v788 = vadd.f32 %v654, %v787
      %v789 = vpop.f32.mrf.mxu0
      %v790 = vadd.f32 %v656, %v789
      %791 = vmatmul.bf16.gmra.mxu0 %v430
      %v792 = vpop.f32.mrf.mxu0
      %v793 = vadd.f32 %v659, %v792
      %v794 = vpop.f32.mrf.mxu0
      %v795 = vadd.f32 %v661, %v794
      %796 = vmatmul.bf16.gmra.mxu0 %v432
      %v797 = vpop.f32.mrf.mxu0
      %v798 = vadd.f32 %v664, %v797
      %v799 = vpop.f32.mrf.mxu0
      %v800 = vadd.f32 %v666, %v799
      %801 = vmatmul.bf16.gmra.mxu0 %v434
      %v802 = vpop.f32.mrf.mxu0
      %v803 = vadd.f32 %v669, %v802
      %v804 = vpop.f32.mrf.mxu0
      %v805 = vadd.f32 %v671, %v804
      %806 = vmatmul.bf16.gmra.mxu0 %v436
      %v807 = vpop.f32.mrf.mxu0
      %v808 = vadd.f32 %v674, %v807
      %v809 = vpop.f32.mrf.mxu0
      %v810 = vadd.f32 %v676, %v809
      %811 = vmatmul.bf16.gmra.mxu0 %v438
      %v812 = vpop.f32.mrf.mxu0
      %v813 = vadd.f32 %v679, %v812
      %v814 = vpop.f32.mrf.mxu0
      %v815 = vadd.f32 %v681, %v814
      %816 = vmatmul.bf16.gmra.mxu0 %v440
      %v817 = vpop.f32.mrf.mxu0
      %v818 = vadd.f32 %v684, %v817
      %v819 = vpop.f32.mrf.mxu0
      %v820 = vadd.f32 %v686, %v819
      %821 = vmatmul.bf16.gmra.mxu0 %v442
      %v822 = vpop.f32.mrf.mxu0
      %v823 = vadd.f32 %v689, %v822
      %v824 = vpop.f32.mrf.mxu0
      %v825 = vadd.f32 %v691, %v824
      %826 = vmatmul.bf16.gmra.mxu0 %v444
      %v827 = vpop.f32.mrf.mxu0
      %v828 = vadd.f32 %v694, %v827
      %v829 = vpop.f32.mrf.mxu0
      %v830 = vadd.f32 %v696, %v829
      %831 = vmatmul.bf16.gmra.mxu0 %v446
      %v832 = vpop.f32.mrf.mxu0
      %v833 = vadd.f32 %v699, %v832
      %v834 = vpop.f32.mrf.mxu0
      %v835 = vadd.f32 %v701, %v834
      %836 = vmatmul.bf16.gmra.mxu0 %v448
      %v837 = vpop.f32.mrf.mxu0
      %v838 = vadd.f32 %v704, %v837
      %v839 = vpop.f32.mrf.mxu0
      %v840 = vadd.f32 %v706, %v839
      %841 = vmatmul.bf16.gmra.mxu0 %v450
      %v842 = vpop.f32.mrf.mxu0
      %v843 = vadd.f32 %v709, %v842
      %v844 = vpop.f32.mrf.mxu0
      %v845 = vadd.f32 %v711, %v844
      %846 = vmatmul.bf16.gmra.mxu0 %v452
      %v847 = vpop.f32.mrf.mxu0
      %v848 = vadd.f32 %v714, %v847
      %v849 = vpop.f32.mrf.mxu0
      %v850 = vadd.f32 %v716, %v849
      %851 = vmatmul.bf16.gmra.mxu0 %v454
      %v852 = vpop.f32.mrf.mxu0
      %v853 = vadd.f32 %v719, %v852
      %v854 = vpop.f32.mrf.mxu0
      %v855 = vadd.f32 %v721, %v854
      %856 = vmatmul.bf16.gmra.mxu0 %v456
      %v857 = vpop.f32.mrf.mxu0
      %v858 = vadd.f32 %v724, %v857
      %v859 = vpop.f32.mrf.mxu0
      %v860 = vadd.f32 %v726, %v859
      %861 = vmatmul.bf16.gmra.mxu0 %v458
      %v862 = vpop.f32.mrf.mxu0
      %v863 = vadd.f32 %v729, %v862
      %v864 = vpop.f32.mrf.mxu0
      %v865 = vadd.f32 %v731, %v864
      %866 = vmatmul.bf16.gmra.mxu0 %v460
      %v867 = vpop.f32.mrf.mxu0
      %v868 = vadd.f32 %v734, %v867
      %v869 = vpop.f32.mrf.mxu0
      %v870 = vadd.f32 %v736, %v869
      %871 = vmatmul.bf16.gmra.mxu0 %v462
      %v872 = vpop.f32.mrf.mxu0
      %v873 = vadd.f32 %v739, %v872
      %v874 = vpop.f32.mrf.mxu0
      %v875 = vadd.f32 %v741, %v874
      %876 = vdwg.mxu0
      %v877 = vmax.f32 %v753, 0.0
      %v878 = vmax.f32 %v755, 0.0
      %v879 = vmax.f32 %v758, 0.0
      %v880 = vmax.f32 %v760, 0.0
      %v881 = vmax.f32 %v763, 0.0
      %v882 = vmax.f32 %v765, 0.0
      %v883 = vmax.f32 %v768, 0.0
      %v884 = vmax.f32 %v770, 0.0
      %v885 = vmax.f32 %v773, 0.0
      %v886 = vmax.f32 %v775, 0.0
      %v887 = vmax.f32 %v778, 0.0
      %v888 = vmax.f32 %v780, 0.0
      %v889 = vmax.f32 %v783, 0.0
      %v890 = vmax.f32 %v785, 0.0
      %v891 = vmax.f32 %v788, 0.0
      %v892 = vmax.f32 %v790, 0.0
      %v893 = vmax.f32 %v793, 0.0
      %v894 = vmax.f32 %v795, 0.0
      %v895 = vmax.f32 %v798, 0.0
      %v896 = vmax.f32 %v800, 0.0
      %v897 = vmax.f32 %v803, 0.0
      %v898 = vmax.f32 %v805, 0.0
      %v899 = vmax.f32 %v808, 0.0
      %v900 = vmax.f32 %v810, 0.0
      %v901 = vmax.f32 %v813, 0.0
      %v902 = vmax.f32 %v815, 0.0
      %v903 = vmax.f32 %v818, 0.0
      %v904 = vmax.f32 %v820, 0.0
      %v905 = vmax.f32 %v823, 0.0
      %v906 = vmax.f32 %v825, 0.0
      %v907 = vmax.f32 %v828, 0.0
      %v908 = vmax.f32 %v830, 0.0
      %v909 = vmax.f32 %v833, 0.0
      %v910 = vmax.f32 %v835, 0.0
      %v911 = vmax.f32 %v838, 0.0
      %v912 = vmax.f32 %v840, 0.0
      %v913 = vmax.f32 %v843, 0.0
      %v914 = vmax.f32 %v845, 0.0
      %v915 = vmax.f32 %v848, 0.0
      %v916 = vmax.f32 %v850, 0.0
      %v917 = vmax.f32 %v853, 0.0
      %v918 = vmax.f32 %v855, 0.0
      %v919 = vmax.f32 %v858, 0.0
      %v920 = vmax.f32 %v860, 0.0
      %v921 = vmax.f32 %v863, 0.0
      %v922 = vmax.f32 %v865, 0.0
      %v923 = vmax.f32 %v868, 0.0
      %v924 = vmax.f32 %v870, 0.0
      %v925 = vmax.f32 %v873, 0.0
      %v926 = vmax.f32 %v875, 0.0
      %v927 = vpack.c.bf16 %v877, %v877
      %v928 = vpack.c.bf16 %v878, %v878
      %v929 = vpack.c.bf16 %v879, %v879
      %v930 = vpack.c.bf16 %v880, %v880
      %v931 = vpack.c.bf16 %v881, %v881
      %v932 = vpack.c.bf16 %v882, %v882
      %v933 = vpack.c.bf16 %v883, %v883
      %v934 = vpack.c.bf16 %v884, %v884
      %v935 = vpack.c.bf16 %v885, %v885
      %v936 = vpack.c.bf16 %v886, %v886
      %v937 = vpack.c.bf16 %v887, %v887
      %v938 = vpack.c.bf16 %v888, %v888
      %v939 = vpack.c.bf16 %v889, %v889
      %v940 = vpack.c.bf16 %v890, %v890
      %v941 = vpack.c.bf16 %v891, %v891
      %v942 = vpack.c.bf16 %v892, %v892
      %v943 = vpack.c.bf16 %v893, %v893
      %v944 = vpack.c.bf16 %v894, %v894
      %v945 = vpack.c.bf16 %v895, %v895
      %v946 = vpack.c.bf16 %v896, %v896
      %v947 = vpack.c.bf16 %v897, %v897
      %v948 = vpack.c.bf16 %v898, %v898
      %v949 = vpack.c.bf16 %v899, %v899
      %v950 = vpack.c.bf16 %v900, %v900
      %v951 = vpack.c.bf16 %v901, %v901
      %v952 = vpack.c.bf16 %v902, %v902
      %v953 = vpack.c.bf16 %v903, %v903
      %v954 = vpack.c.bf16 %v904, %v904
      %v955 = vpack.c.bf16 %v905, %v905
      %v956 = vpack.c.bf16 %v906, %v906
      %v957 = vpack.c.bf16 %v907, %v907
      %v958 = vpack.c.bf16 %v908, %v908
      %v959 = vpack.c.bf16 %v909, %v909
      %v960 = vpack.c.bf16 %v910, %v910
      %v961 = vpack.c.bf16 %v911, %v911
      %v962 = vpack.c.bf16 %v912, %v912
      %v963 = vpack.c.bf16 %v913, %v913
      %v964 = vpack.c.bf16 %v914, %v914
      %v965 = vpack.c.bf16 %v915, %v915
      %v966 = vpack.c.bf16 %v916, %v916
      %v967 = vpack.c.bf16 %v917, %v917
      %v968 = vpack.c.bf16 %v918, %v918
      %v969 = vpack.c.bf16 %v919, %v919
      %v970 = vpack.c.bf16 %v920, %v920
      %v971 = vpack.c.bf16 %v921, %v921
      %v972 = vpack.c.bf16 %v922, %v922
      %v973 = vpack.c.bf16 %v923, %v923
      %v974 = vpack.c.bf16 %v924, %v924
      %v975 = vpack.c.bf16 %v925, %v925
      %v976 = vpack.c.bf16 %v926, %v926
      %977 = vst [vmem:[%s175] sm:$0xf] %v927
      %978 = vst [vmem:[%s175 + $0x4] sm:$0xf] %v928
      %979 = vst [vmem:[%s175 + $0x8] sm:$0xf] %v929
      %980 = vst [vmem:[%s175 + $0xc] sm:$0xf] %v930
      %981 = vst [vmem:[%s175 + $0x10] sm:$0xf] %v931
      %982 = vst [vmem:[%s175 + $0x14] sm:$0xf] %v932
      %983 = vst [vmem:[%s175 + $0x18] sm:$0xf] %v933
      %984 = vst [vmem:[%s175 + $0x1c] sm:$0xf] %v934
      %985 = vst [vmem:[%s175 + $0x20] sm:$0xf] %v935
      %986 = vst [vmem:[%s175 + $0x24] sm:$0xf] %v936
      %987 = vst [vmem:[%s175 + $0x28] sm:$0xf] %v937
      %988 = vst [vmem:[%s175 + $0x2c] sm:$0xf] %v938
      %989 = vst [vmem:[%s175 + $0x30] sm:$0xf] %v939
      %990 = vst [vmem:[%s175 + $0x34] sm:$0xf] %v940
      %991 = vst [vmem:[%s175 + $0x38] sm:$0xf] %v941
      %992 = vst [vmem:[%s175 + $0x3c] sm:$0xf] %v942
      %993 = vst [vmem:[%s175 + $0x40] sm:$0xf] %v943
      %994 = vst [vmem:[%s175 + $0x44] sm:$0xf] %v944
      %995 = vst [vmem:[%s175 + $0x48] sm:$0xf] %v945
      %996 = vst [vmem:[%s175 + $0x4c] sm:$0xf] %v946
      %997 = vst [vmem:[%s175 + $0x50] sm:$0xf] %v947
      %998 = vst [vmem:[%s175 + $0x54] sm:$0xf] %v948
      %999 = vst [vmem:[%s175 + $0x58] sm:$0xf] %v949
      %1000 = vst [vmem:[%s175 + $0x5c] sm:$0xf] %v950
      %1001 = vst [vmem:[%s175 + $0x60] sm:$0xf] %v951
      %1002 = vst [vmem:[%s175 + $0x64] sm:$0xf] %v952
      %1003 = vst [vmem:[%s175 + $0x68] sm:$0xf] %v953
      %1004 = vst [vmem:[%s175 + $0x6c] sm:$0xf] %v954
      %1005 = vst [vmem:[%s175 + $0x70] sm:$0xf] %v955
      %1006 = vst [vmem:[%s175 + $0x74] sm:$0xf] %v956
      %1007 = vst [vmem:[%s175 + $0x78] sm:$0xf] %v957
      %1008 = vst [vmem:[%s175 + $0x7c] sm:$0xf] %v958
      %1009 = vst [vmem:[%s175 + $0x80] sm:$0xf] %v959
      %1010 = vst [vmem:[%s175 + $0x84] sm:$0xf] %v960
      %1011 = vst [vmem:[%s175 + $0x88] sm:$0xf] %v961
      %1012 = vst [vmem:[%s175 + $0x8c] sm:$0xf] %v962
      %1013 = vst [vmem:[%s175 + $0x90] sm:$0xf] %v963
      %1014 = vst [vmem:[%s175 + $0x94] sm:$0xf] %v964
      %1015 = vst [vmem:[%s175 + $0x98] sm:$0xf] %v965
      %1016 = vst [vmem:[%s175 + $0x9c] sm:$0xf] %v966
      %1017 = vst [vmem:[%s175 + $0xa0] sm:$0xf] %v967
      %1018 = vst [vmem:[%s175 + $0xa4] sm:$0xf] %v968
      %1019 = vst [vmem:[%s175 + $0xa8] sm:$0xf] %v969
      %1020 = vst [vmem:[%s175 + $0xac] sm:$0xf] %v970
      %1021 = vst [vmem:[%s175 + $0xb0] sm:$0xf] %v971
      %1022 = vst [vmem:[%s175 + $0xb4] sm:$0xf] %v972
      %1023 = vst [vmem:[%s175 + $0xb8] sm:$0xf] %v973
      %1024 = vst [vmem:[%s175 + $0xbc] sm:$0xf] %v974
      %1025 = vst [vmem:[%s175 + $0xc0] sm:$0xf] %v975
      %1026 = vst [vmem:[%s175 + $0xc4] sm:$0xf] %v976
      %s1027 = smul.u32 50, %s14
      %p1028 = scmp.lt.s32.totalorder %s1027, 99
      %s1029 = scalar_select %p1028, %s1027, 99
      %s1030 = smul.addr %s1029, 4
      %s1031 = scalar_lea.vmem %s3, %s1030
      // Predicated region
      $region33: #{gaze_prediction_forward.6} parent=31 // pred_check
        %p1032 = pneg %p100
      $region34: #{gaze_prediction_forward.6} parent=31 // pred_check_branch
        %1034 = sbr.rel (%p1032) target = $region36
      $region35: #{gaze_prediction_forward.6} parent=31 // pred_region
        %s1035 = smul.u32 50, %s14
      $region36: #{gaze_prediction_forward.6} parent=31 // pred_fallthru
        _
    $region32: #{gaze_prediction_forward.6} parent=5 // pred_fallthru
      _
    %p1036 = scmp.le.s32.totalorder 2, %s9
    // Predicated region
    $region37: #{gaze_prediction_forward.6} parent=5 // pred_check
      %p1037 = pneg %p1036
    $region38: #{gaze_prediction_forward.6} parent=5 // pred_check_branch
      %1039 = sbr.rel (%p1037) target = $region40
    $region39: #{gaze_prediction_forward.6} parent=5 // pred_region
      %s1040 = ssub.s32 %s9, 2
      // Predicated region
      $region41: #{gaze_prediction_forward.6} parent=39 // pred_check
        %p1041 = pneg %p106
      $region42: #{gaze_prediction_forward.6} parent=39 // pred_check_branch
        %1043 = sbr.rel (%p1041) target = $region44
      $region43: #{gaze_prediction_forward.6} parent=39 // pred_region
        %s1044 = smul.u32 50, %s15
        %p1045 = scmp.lt.s32.totalorder %s1044, 99
        %s1046 = scalar_select %p1045, %s1044, 99
        %s1047 = smul.addr %s1046, 4
        %s1048 = scalar_lea.vmem %s3, %s1047
      $region44: #{gaze_prediction_forward.6} parent=39 // pred_fallthru
        _
    $region40: #{gaze_prediction_forward.6} parent=5 // pred_fallthru
      _
  $region6: #{gaze_prediction_forward.6} parent=0 // loop_footer
    %s13 = sadd.s32 1, %s9
  $region7: #{gaze_prediction_forward.6} parent=0 // loop_footer_branch
    %8 = sbr.rel target = $region3
  $region8: #{gaze_prediction_forward.6} parent=0 // loop_exit
    _

// kernel: gaze_prediction_forward.7
$region0: #{gaze_prediction_forward.7}
  #allocation0 [shape = 'u32[]', space=smem, size = 0x4, offset = 0x4, fixed_abs, tag = 'smem constant byte address 0x4 - core index']
  #allocation1 [shape = 'u32[72,128]{1,0:T(1,128)}', space=vmem, size = 0x9000, scoped, tag = 'internal scratch']
  %s0 = inlined_call_operand.vmem [shape: bf16[176,512], index: 0, kind: input, shape index: {}]
  %s1 = inlined_call_operand.vmem [shape: bf16[512,128], index: 1, kind: input, shape index: {}]
  %s2 = inlined_call_operand.vmem [shape: f32[1,128], index: 2, kind: input, shape index: {}]
  %s3 = inlined_call_operand.vmem [shape: bf16[176,128], index: 3, kind: output, shape index: {}]
  %s4 = sld [smem:[#allocation0]]
  $region22: #{gaze_prediction_forward.7} parent=0
    _
  %s6 = ssub.s32 1, %s4
  %s7 = scalar_select 0, %s6, %s4
  // Predicated region
  $region2: #{gaze_prediction_forward.7} parent=0 // pred_check
    _
  $region3: #{gaze_prediction_forward.7} parent=0 // pred_check_branch
    %9 = sbr.rel (0) target = $region5
  $region4: #{gaze_prediction_forward.7} parent=0 // pred_region
    _
  $region5: #{gaze_prediction_forward.7} parent=0 // pred_fallthru
    _
  // Predicated region
  $region6: #{gaze_prediction_forward.7} parent=0 // pred_check
    _
  $region7: #{gaze_prediction_forward.7} parent=0 // pred_check_branch
    %11 = sbr.rel (0) target = $region9
  $region8: #{gaze_prediction_forward.7} parent=0 // pred_region
    _
  $region9: #{gaze_prediction_forward.7} parent=0 // pred_fallthru
    _
  // Predicated region
  $region10: #{gaze_prediction_forward.7} parent=0 // pred_check
    _
  $region11: #{gaze_prediction_forward.7} parent=0 // pred_check_branch
    %13 = sbr.rel (0) target = $region13
  $region12: #{gaze_prediction_forward.7} parent=0 // pred_region
    _
  $region13: #{gaze_prediction_forward.7} parent=0 // pred_fallthru
    _
  %v14 = vld [vmem:[%s0] sm:$0xff]
  %v15 = vld [vmem:[%s0 + $0x8] sm:$0xff]
  %v16 = vld [vmem:[%s0 + $0x10] sm:$0xff]
  %v17 = vld [vmem:[%s0 + $0x18] sm:$0xff]
  %v18 = vld [vmem:[%s0 + $0x20] sm:$0xff]
  %v19 = vld [vmem:[%s0 + $0x28] sm:$0xff]
  %v20 = vld [vmem:[%s0 + $0x30] sm:$0xff]
  %v21 = vld [vmem:[%s0 + $0x38] sm:$0xff]
  %v22 = vld [vmem:[%s0 + $0x40] sm:$0xff]
  %v23 = vld [vmem:[%s0 + $0x48] sm:$0xff]
  %v24 = vld [vmem:[%s0 + $0x50] sm:$0xff]
  %v25 = vld [vmem:[%s0 + $0x58] sm:$0xff]
  %v26 = vld [vmem:[%s0 + $0x60] sm:$0xff]
  %v27 = vld [vmem:[%s0 + $0x68] sm:$0xff]
  %v28 = vld [vmem:[%s0 + $0x70] sm:$0xff]
  %v29 = vld [vmem:[%s0 + $0x78] sm:$0xff]
  %v30 = vld [vmem:[%s0 + $0x80] sm:$0xff]
  %v31 = vld [vmem:[%s0 + $0x88] sm:$0xff]
  %v32 = vld [vmem:[%s0 + $0x90] sm:$0xff]
  %v33 = vld [vmem:[%s0 + $0x98] sm:$0xff]
  %v34 = vld [vmem:[%s0 + $0xa0] sm:$0xff]
  %v35 = vld [vmem:[%s0 + $0xa8] sm:$0xff]
  %v36 = vld [vmem:[%s0 + $0xb0] sm:$0xff]
  %v37 = vld [vmem:[%s0 + $0xb8] sm:$0xff]
  %v38 = vld [vmem:[%s0 + $0xc0] sm:$0xff]
  %v39 = vld [vmem:[%s0 + $0xc8] sm:$0xff]
  %v40 = vld [vmem:[%s0 + $0xd0] sm:$0xff]
  %v41 = vld [vmem:[%s0 + $0xd8] sm:$0xff]
  %v42 = vld [vmem:[%s0 + $0xe0] sm:$0xff]
  %v43 = vld [vmem:[%s0 + $0xe8] sm:$0xff]
  %v44 = vld [vmem:[%s0 + $0xf0] sm:$0xff]
  %v45 = vld [vmem:[%s0 + $0xf8] sm:$0xff]
  %v46 = vld [vmem:[%s0 + $0x100] sm:$0xff]
  %v47 = vld [vmem:[%s0 + $0x108] sm:$0xff]
  %v48 = vld [vmem:[%s0 + $0x110] sm:$0xff]
  %v49 = vld [vmem:[%s0 + $0x118] sm:$0xff]
  %v50 = vld [vmem:[%s0 + $0x120] sm:$0xff]
  %v51 = vld [vmem:[%s0 + $0x128] sm:$0xff]
  %v52 = vld [vmem:[%s0 + $0x130] sm:$0xff]
  %v53 = vld [vmem:[%s0 + $0x138] sm:$0xff]
  %v54 = vld [vmem:[%s0 + $0x140] sm:$0xff]
  %v55 = vld [vmem:[%s0 + $0x148] sm:$0xff]
  %v56 = vld [vmem:[%s0 + $0x150] sm:$0xff]
  %v57 = vld [vmem:[%s0 + $0x158] sm:$0xff]
  %v58 = vld [vmem:[%s1] sm:$0xf]
  %v59 = vld [vmem:[%s1 + $0x4] sm:$0xf]
  %v60 = vld [vmem:[%s1 + $0x8] sm:$0xf]
  %v61 = vld [vmem:[%s1 + $0xc] sm:$0xf]
  %v62 = vld [vmem:[%s1 + $0x10] sm:$0xf]
  %v63 = vld [vmem:[%s1 + $0x14] sm:$0xf]
  %v64 = vld [vmem:[%s1 + $0x18] sm:$0xf]
  %v65 = vld [vmem:[%s1 + $0x1c] sm:$0xf]
  %v66 = vld [vmem:[%s1 + $0x20] sm:$0xf]
  %v67 = vld [vmem:[%s1 + $0x24] sm:$0xf]
  %v68 = vld [vmem:[%s1 + $0x28] sm:$0xf]
  %v69 = vld [vmem:[%s1 + $0x2c] sm:$0xf]
  %v70 = vld [vmem:[%s1 + $0x30] sm:$0xf]
  %v71 = vld [vmem:[%s1 + $0x34] sm:$0xf]
  %v72 = vld [vmem:[%s1 + $0x38] sm:$0xf]
  %v73 = vld [vmem:[%s1 + $0x3c] sm:$0xf]
  %v74 = vld [vmem:[%s1 + $0x40] sm:$0xf]
  %v75 = vld [vmem:[%s1 + $0x44] sm:$0xf]
  %v76 = vld [vmem:[%s1 + $0x48] sm:$0xf]
  %v77 = vld [vmem:[%s1 + $0x4c] sm:$0xf]
  %v78 = vld [vmem:[%s1 + $0x50] sm:$0xf]
  %v79 = vld [vmem:[%s1 + $0x54] sm:$0xf]
  %v80 = vld [vmem:[%s1 + $0x58] sm:$0xf]
  %v81 = vld [vmem:[%s1 + $0x5c] sm:$0xf]
  %v82 = vld [vmem:[%s1 + $0x60] sm:$0xf]
  %v83 = vld [vmem:[%s1 + $0x64] sm:$0xf]
  %v84 = vld [vmem:[%s1 + $0x68] sm:$0xf]
  %v85 = vld [vmem:[%s1 + $0x6c] sm:$0xf]
  %v86 = vld [vmem:[%s1 + $0x70] sm:$0xf]
  %v87 = vld [vmem:[%s1 + $0x74] sm:$0xf]
  %v88 = vld [vmem:[%s1 + $0x78] sm:$0xf]
  %v89 = vld [vmem:[%s1 + $0x7c] sm:$0xf]
  %v90 = vld [vmem:[%s1 + $0x80] sm:$0xf]
  %v91 = vld [vmem:[%s1 + $0x84] sm:$0xf]
  %v92 = vld [vmem:[%s1 + $0x88] sm:$0xf]
  %v93 = vld [vmem:[%s1 + $0x8c] sm:$0xf]
  %v94 = vld [vmem:[%s1 + $0x90] sm:$0xf]
  %v95 = vld [vmem:[%s1 + $0x94] sm:$0xf]
  %v96 = vld [vmem:[%s1 + $0x98] sm:$0xf]
  %v97 = vld [vmem:[%s1 + $0x9c] sm:$0xf]
  %v98 = vld [vmem:[%s1 + $0xa0] sm:$0xf]
  %v99 = vld [vmem:[%s1 + $0xa4] sm:$0xf]
  %v100 = vld [vmem:[%s1 + $0xa8] sm:$0xf]
  %v101 = vld [vmem:[%s1 + $0xac] sm:$0xf]
  %v102 = vld [vmem:[%s1 + $0xb0] sm:$0xf]
  %v103 = vld [vmem:[%s1 + $0xb4] sm:$0xf]
  %v104 = vld [vmem:[%s1 + $0xb8] sm:$0xf]
  %v105 = vld [vmem:[%s1 + $0xbc] sm:$0xf]
  %v106 = vld [vmem:[%s1 + $0xc0] sm:$0xf]
  %v107 = vld [vmem:[%s1 + $0xc4] sm:$0xf]
  %v108 = vld [vmem:[%s1 + $0xc8] sm:$0xf]
  %v109 = vld [vmem:[%s1 + $0xcc] sm:$0xf]
  %v110 = vld [vmem:[%s1 + $0xd0] sm:$0xf]
  %v111 = vld [vmem:[%s1 + $0xd4] sm:$0xf]
  %v112 = vld [vmem:[%s1 + $0xd8] sm:$0xf]
  %v113 = vld [vmem:[%s1 + $0xdc] sm:$0xf]
  %v114 = vld [vmem:[%s1 + $0xe0] sm:$0xf]
  %v115 = vld [vmem:[%s1 + $0xe4] sm:$0xf]
  %v116 = vld [vmem:[%s1 + $0xe8] sm:$0xf]
  %v117 = vld [vmem:[%s1 + $0xec] sm:$0xf]
  %v118 = vld [vmem:[%s1 + $0xf0] sm:$0xf]
  %v119 = vld [vmem:[%s1 + $0xf4] sm:$0xf]
  %v120 = vld [vmem:[%s1 + $0xf8] sm:$0xf]
  %v121 = vld [vmem:[%s1 + $0xfc] sm:$0xf]
  %v122 = vld [vmem:[%s2] sm:$0x1]
  %v124 = vperm.slane %v122, 0
  %v170 = vunpack.c.l.b16 %v14
  %v171 = vunpack.c.h.b16 %v14
  %v172 = vunpack.c.l.b16 %v15
  %v173 = vunpack.c.h.b16 %v15
  %v174 = vunpack.c.l.b16 %v16
  %v175 = vunpack.c.h.b16 %v16
  %v176 = vunpack.c.l.b16 %v17
  %v177 = vunpack.c.h.b16 %v17
  %v178 = vunpack.c.l.b16 %v18
  %v179 = vunpack.c.h.b16 %v18
  %v180 = vunpack.c.l.b16 %v19
  %v181 = vunpack.c.h.b16 %v19
  %v182 = vunpack.c.l.b16 %v20
  %v183 = vunpack.c.h.b16 %v20
  %v184 = vunpack.c.l.b16 %v21
  %v185 = vunpack.c.h.b16 %v21
  %v186 = vunpack.c.l.b16 %v22
  %v187 = vunpack.c.h.b16 %v22
  %v188 = vunpack.c.l.b16 %v23
  %v189 = vunpack.c.h.b16 %v23
  %v190 = vunpack.c.l.b16 %v24
  %v191 = vunpack.c.h.b16 %v24
  %v192 = vunpack.c.l.b16 %v25
  %v193 = vunpack.c.h.b16 %v25
  %v194 = vunpack.c.l.b16 %v26
  %v195 = vunpack.c.h.b16 %v26
  %v196 = vunpack.c.l.b16 %v27
  %v197 = vunpack.c.h.b16 %v27
  %v198 = vunpack.c.l.b16 %v28
  %v199 = vunpack.c.h.b16 %v28
  %v200 = vunpack.c.l.b16 %v29
  %v201 = vunpack.c.h.b16 %v29
  %v202 = vunpack.c.l.b16 %v30
  %v203 = vunpack.c.h.b16 %v30
  %v204 = vunpack.c.l.b16 %v31
  %v205 = vunpack.c.h.b16 %v31
  %v206 = vunpack.c.l.b16 %v32
  %v207 = vunpack.c.h.b16 %v32
  %v208 = vunpack.c.l.b16 %v33
  %v209 = vunpack.c.h.b16 %v33
  %v210 = vunpack.c.l.b16 %v34
  %v211 = vunpack.c.h.b16 %v34
  %v212 = vunpack.c.l.b16 %v35
  %v213 = vunpack.c.h.b16 %v35
  %v214 = vunpack.c.l.b16 %v36
  %v215 = vunpack.c.h.b16 %v36
  %v216 = vunpack.c.l.b16 %v37
  %v217 = vunpack.c.h.b16 %v37
  %v218 = vunpack.c.l.b16 %v38
  %v219 = vunpack.c.h.b16 %v38
  %v220 = vunpack.c.l.b16 %v39
  %v221 = vunpack.c.h.b16 %v39
  %v222 = vunpack.c.l.b16 %v40
  %v223 = vunpack.c.h.b16 %v40
  %v224 = vunpack.c.l.b16 %v41
  %v225 = vunpack.c.h.b16 %v41
  %v226 = vunpack.c.l.b16 %v42
  %v227 = vunpack.c.h.b16 %v42
  %v228 = vunpack.c.l.b16 %v43
  %v229 = vunpack.c.h.b16 %v43
  %v230 = vunpack.c.l.b16 %v44
  %v231 = vunpack.c.h.b16 %v44
  %v232 = vunpack.c.l.b16 %v45
  %v233 = vunpack.c.h.b16 %v45
  %v234 = vunpack.c.l.b16 %v46
  %v235 = vunpack.c.h.b16 %v46
  %v236 = vunpack.c.l.b16 %v47
  %v237 = vunpack.c.h.b16 %v47
  %v238 = vunpack.c.l.b16 %v48
  %v239 = vunpack.c.h.b16 %v48
  %v240 = vunpack.c.l.b16 %v49
  %v241 = vunpack.c.h.b16 %v49
  %v242 = vunpack.c.l.b16 %v50
  %v243 = vunpack.c.h.b16 %v50
  %v244 = vunpack.c.l.b16 %v51
  %v245 = vunpack.c.h.b16 %v51
  %v246 = vunpack.c.l.b16 %v52
  %v247 = vunpack.c.h.b16 %v52
  %v248 = vunpack.c.l.b16 %v53
  %v249 = vunpack.c.h.b16 %v53
  %v250 = vunpack.c.l.b16 %v54
  %v251 = vunpack.c.h.b16 %v54
  %v252 = vunpack.c.l.b16 %v55
  %v253 = vunpack.c.h.b16 %v55
  %v254 = vunpack.c.l.b16 %v56
  %v255 = vunpack.c.h.b16 %v56
  %v256 = vunpack.c.l.b16 %v57
  %v257 = vunpack.c.h.b16 %v57
  %v258 = vpack.c.b16 %v174, %v170
  %v259 = vpack.c.b16 %v175, %v171
  %v260 = vpack.c.b16 %v176, %v172
  %v261 = vpack.c.b16 %v177, %v173
  %v262 = vpack.c.b16 %v182, %v178
  %v263 = vpack.c.b16 %v183, %v179
  %v264 = vpack.c.b16 %v184, %v180
  %v265 = vpack.c.b16 %v185, %v181
  %v266 = vpack.c.b16 %v190, %v186
  %v267 = vpack.c.b16 %v191, %v187
  %v268 = vpack.c.b16 %v192, %v188
  %v269 = vpack.c.b16 %v193, %v189
  %v270 = vpack.c.b16 %v198, %v194
  %v271 = vpack.c.b16 %v199, %v195
  %v272 = vpack.c.b16 %v200, %v196
  %v273 = vpack.c.b16 %v201, %v197
  %v274 = vpack.c.b16 %v206, %v202
  %v275 = vpack.c.b16 %v207, %v203
  %v276 = vpack.c.b16 %v208, %v204
  %v277 = vpack.c.b16 %v209, %v205
  %v278 = vpack.c.b16 %v214, %v210
  %v279 = vpack.c.b16 %v215, %v211
  %v280 = vpack.c.b16 %v216, %v212
  %v281 = vpack.c.b16 %v217, %v213
  %v282 = vpack.c.b16 %v222, %v218
  %v283 = vpack.c.b16 %v223, %v219
  %v284 = vpack.c.b16 %v224, %v220
  %v285 = vpack.c.b16 %v225, %v221
  %v286 = vpack.c.b16 %v230, %v226
  %v287 = vpack.c.b16 %v231, %v227
  %v288 = vpack.c.b16 %v232, %v228
  %v289 = vpack.c.b16 %v233, %v229
  %v290 = vpack.c.b16 %v238, %v234
  %v291 = vpack.c.b16 %v239, %v235
  %v292 = vpack.c.b16 %v240, %v236
  %v293 = vpack.c.b16 %v241, %v237
  %v294 = vpack.c.b16 %v246, %v242
  %v295 = vpack.c.b16 %v247, %v243
  %v296 = vpack.c.b16 %v248, %v244
  %v297 = vpack.c.b16 %v249, %v245
  %v298 = vpack.c.b16 %v254, %v250
  %v299 = vpack.c.b16 %v255, %v251
  %v300 = vpack.c.b16 %v256, %v252
  %v301 = vpack.c.b16 %v257, %v253
  %v410 = vunpack.c.l.b16 %v58
  %v411 = vunpack.c.l.b16 %v59
  %v412 = vunpack.c.l.b16 %v60
  %v413 = vunpack.c.l.b16 %v61
  %v414 = vunpack.c.l.b16 %v62
  %v415 = vunpack.c.l.b16 %v63
  %v416 = vunpack.c.l.b16 %v64
  %v417 = vunpack.c.l.b16 %v65
  %v418 = vunpack.c.l.b16 %v66
  %v419 = vunpack.c.l.b16 %v67
  %v420 = vunpack.c.l.b16 %v68
  %v421 = vunpack.c.l.b16 %v69
  %v422 = vunpack.c.l.b16 %v70
  %v423 = vunpack.c.l.b16 %v71
  %v424 = vunpack.c.l.b16 %v72
  %v425 = vunpack.c.l.b16 %v73
  %v426 = vunpack.c.l.b16 %v74
  %v427 = vunpack.c.l.b16 %v75
  %v428 = vunpack.c.l.b16 %v76
  %v429 = vunpack.c.l.b16 %v77
  %v430 = vunpack.c.l.b16 %v78
  %v431 = vunpack.c.l.b16 %v79
  %v432 = vunpack.c.l.b16 %v80
  %v433 = vunpack.c.l.b16 %v81
  %v434 = vunpack.c.l.b16 %v82
  %v435 = vunpack.c.l.b16 %v83
  %v436 = vunpack.c.l.b16 %v84
  %v437 = vunpack.c.l.b16 %v85
  %v438 = vunpack.c.l.b16 %v86
  %v439 = vunpack.c.l.b16 %v87
  %v440 = vunpack.c.l.b16 %v88
  %v441 = vunpack.c.l.b16 %v89
  %v442 = vunpack.c.l.b16 %v90
  %v443 = vunpack.c.l.b16 %v91
  %v444 = vunpack.c.l.b16 %v92
  %v445 = vunpack.c.l.b16 %v93
  %v446 = vunpack.c.l.b16 %v94
  %v447 = vunpack.c.l.b16 %v95
  %v448 = vunpack.c.l.b16 %v96
  %v449 = vunpack.c.l.b16 %v97
  %v450 = vunpack.c.l.b16 %v98
  %v451 = vunpack.c.l.b16 %v99
  %v452 = vunpack.c.l.b16 %v100
  %v453 = vunpack.c.l.b16 %v101
  %v454 = vunpack.c.l.b16 %v102
  %v455 = vunpack.c.l.b16 %v103
  %v456 = vunpack.c.l.b16 %v104
  %v457 = vunpack.c.l.b16 %v105
  %v458 = vunpack.c.l.b16 %v106
  %v459 = vunpack.c.l.b16 %v107
  %v460 = vunpack.c.l.b16 %v108
  %v461 = vunpack.c.l.b16 %v109
  %v462 = vunpack.c.l.b16 %v110
  %v463 = vunpack.c.l.b16 %v111
  %v464 = vunpack.c.l.b16 %v112
  %v465 = vunpack.c.l.b16 %v113
  %v466 = vunpack.c.l.b16 %v114
  %v467 = vunpack.c.l.b16 %v115
  %v468 = vunpack.c.l.b16 %v116
  %v469 = vunpack.c.l.b16 %v117
  %v470 = vunpack.c.l.b16 %v118
  %v471 = vunpack.c.l.b16 %v119
  %v472 = vunpack.c.l.b16 %v120
  %v473 = vunpack.c.l.b16 %v121
  %v474 = vpack.c.b16 %v411, %v410
  %v475 = vpack.c.b16 %v413, %v412
  %v476 = vpack.c.b16 %v415, %v414
  %v477 = vpack.c.b16 %v417, %v416
  %v478 = vpack.c.b16 %v419, %v418
  %v479 = vpack.c.b16 %v421, %v420
  %v480 = vpack.c.b16 %v423, %v422
  %v481 = vpack.c.b16 %v425, %v424
  %v482 = vpack.c.b16 %v427, %v426
  %v483 = vpack.c.b16 %v429, %v428
  %v484 = vpack.c.b16 %v431, %v430
  %v485 = vpack.c.b16 %v433, %v432
  %v486 = vpack.c.b16 %v435, %v434
  %v487 = vpack.c.b16 %v437, %v436
  %v488 = vpack.c.b16 %v439, %v438
  %v489 = vpack.c.b16 %v441, %v440
  %v490 = vpack.c.b16 %v443, %v442
  %v491 = vpack.c.b16 %v445, %v444
  %v492 = vpack.c.b16 %v447, %v446
  %v493 = vpack.c.b16 %v449, %v448
  %v494 = vpack.c.b16 %v451, %v450
  %v495 = vpack.c.b16 %v453, %v452
  %v496 = vpack.c.b16 %v455, %v454
  %v497 = vpack.c.b16 %v457, %v456
  %v498 = vpack.c.b16 %v459, %v458
  %v499 = vpack.c.b16 %v461, %v460
  %v500 = vpack.c.b16 %v463, %v462
  %v501 = vpack.c.b16 %v465, %v464
  %v502 = vpack.c.b16 %v467, %v466
  %v503 = vpack.c.b16 %v469, %v468
  %v504 = vpack.c.b16 %v471, %v470
  %v505 = vpack.c.b16 %v473, %v472
  %538 = vmatpush.bf16.msra.mxu0 %v481
  %539 = vmatpush.bf16.msra.mxu0 %v480
  %540 = vmatpush.bf16.msra.mxu0 %v479
  %541 = vmatpush.bf16.msra.mxu0 %v478
  %542 = vmatpush.bf16.msra.mxu0 %v477
  %543 = vmatpush.bf16.msra.mxu0 %v476
  %544 = vmatpush.bf16.msra.mxu0 %v475
  %545 = vmatpush.bf16.msra.mxu0 %v474
  %546 = vmatmul.bf16.gmra.mxu0 %v258
  %v547 = vpop.f32.mrf.mxu0
  %v548 = vadd.f32 %v124, %v547
  %v549 = vpop.f32.mrf.mxu0
  %v550 = vadd.f32 %v124, %v549
  %551 = vmatmul.bf16.gmra.mxu0 %v262
  %v552 = vpop.f32.mrf.mxu0
  %v553 = vadd.f32 %v124, %v552
  %v554 = vpop.f32.mrf.mxu0
  %v555 = vadd.f32 %v124, %v554
  %556 = vmatmul.bf16.gmra.mxu0 %v266
  %v557 = vpop.f32.mrf.mxu0
  %v558 = vadd.f32 %v124, %v557
  %v559 = vpop.f32.mrf.mxu0
  %v560 = vadd.f32 %v124, %v559
  %561 = vmatmul.bf16.gmra.mxu0 %v270
  %v562 = vpop.f32.mrf.mxu0
  %v563 = vadd.f32 %v124, %v562
  %v564 = vpop.f32.mrf.mxu0
  %v565 = vadd.f32 %v124, %v564
  %566 = vmatmul.bf16.gmra.mxu0 %v274
  %v567 = vpop.f32.mrf.mxu0
  %v568 = vadd.f32 %v124, %v567
  %v569 = vpop.f32.mrf.mxu0
  %v570 = vadd.f32 %v124, %v569
  %571 = vmatmul.bf16.gmra.mxu0 %v278
  %v572 = vpop.f32.mrf.mxu0
  %v573 = vadd.f32 %v124, %v572
  %v574 = vpop.f32.mrf.mxu0
  %v575 = vadd.f32 %v124, %v574
  %576 = vmatmul.bf16.gmra.mxu0 %v282
  %v577 = vpop.f32.mrf.mxu0
  %v578 = vadd.f32 %v124, %v577
  %v579 = vpop.f32.mrf.mxu0
  %v580 = vadd.f32 %v124, %v579
  %581 = vmatmul.bf16.gmra.mxu0 %v286
  %v582 = vpop.f32.mrf.mxu0
  %v583 = vadd.f32 %v124, %v582
  %v584 = vpop.f32.mrf.mxu0
  %v585 = vadd.f32 %v124, %v584
  %586 = vmatmul.bf16.gmra.mxu0 %v290
  %v587 = vpop.f32.mrf.mxu0
  %v588 = vadd.f32 %v124, %v587
  %v589 = vpop.f32.mrf.mxu0
  %v590 = vadd.f32 %v124, %v589
  %591 = vmatmul.bf16.gmra.mxu0 %v294
  %v592 = vpop.f32.mrf.mxu0
  %v593 = vadd.f32 %v124, %v592
  %v594 = vpop.f32.mrf.mxu0
  %v595 = vadd.f32 %v124, %v594
  %596 = vmatmul.bf16.gmra.mxu0 %v298
  %v597 = vpop.f32.mrf.mxu0
  %v598 = vadd.f32 %v124, %v597
  %v599 = vpop.f32.mrf.mxu0
  %v600 = vadd.f32 %v124, %v599
  %601 = vdwg.mxu0
  %602 = vmatpush.bf16.msra.mxu0 %v489
  %603 = vmatpush.bf16.msra.mxu0 %v488
  %604 = vmatpush.bf16.msra.mxu0 %v487
  %605 = vmatpush.bf16.msra.mxu0 %v486
  %606 = vmatpush.bf16.msra.mxu0 %v485
  %607 = vmatpush.bf16.msra.mxu0 %v484
  %608 = vmatpush.bf16.msra.mxu0 %v483
  %609 = vmatpush.bf16.msra.mxu0 %v482
  %610 = vmatmul.bf16.gmra.mxu0 %v259
  %v611 = vpop.f32.mrf.mxu0
  %v612 = vadd.f32 %v548, %v611
  %v613 = vpop.f32.mrf.mxu0
  %v614 = vadd.f32 %v550, %v613
  %615 = vmatmul.bf16.gmra.mxu0 %v263
  %v616 = vpop.f32.mrf.mxu0
  %v617 = vadd.f32 %v553, %v616
  %v618 = vpop.f32.mrf.mxu0
  %v619 = vadd.f32 %v555, %v618
  %620 = vmatmul.bf16.gmra.mxu0 %v267
  %v621 = vpop.f32.mrf.mxu0
  %v622 = vadd.f32 %v558, %v621
  %v623 = vpop.f32.mrf.mxu0
  %v624 = vadd.f32 %v560, %v623
  %625 = vmatmul.bf16.gmra.mxu0 %v271
  %v626 = vpop.f32.mrf.mxu0
  %v627 = vadd.f32 %v563, %v626
  %v628 = vpop.f32.mrf.mxu0
  %v629 = vadd.f32 %v565, %v628
  %630 = vmatmul.bf16.gmra.mxu0 %v275
  %v631 = vpop.f32.mrf.mxu0
  %v632 = vadd.f32 %v568, %v631
  %v633 = vpop.f32.mrf.mxu0
  %v634 = vadd.f32 %v570, %v633
  %635 = vmatmul.bf16.gmra.mxu0 %v279
  %v636 = vpop.f32.mrf.mxu0
  %v637 = vadd.f32 %v573, %v636
  %v638 = vpop.f32.mrf.mxu0
  %v639 = vadd.f32 %v575, %v638
  %640 = vmatmul.bf16.gmra.mxu0 %v283
  %v641 = vpop.f32.mrf.mxu0
  %v642 = vadd.f32 %v578, %v641
  %v643 = vpop.f32.mrf.mxu0
  %v644 = vadd.f32 %v580, %v643
  %645 = vmatmul.bf16.gmra.mxu0 %v287
  %v646 = vpop.f32.mrf.mxu0
  %v647 = vadd.f32 %v583, %v646
  %v648 = vpop.f32.mrf.mxu0
  %v649 = vadd.f32 %v585, %v648
  %650 = vmatmul.bf16.gmra.mxu0 %v291
  %v651 = vpop.f32.mrf.mxu0
  %v652 = vadd.f32 %v588, %v651
  %v653 = vpop.f32.mrf.mxu0
  %v654 = vadd.f32 %v590, %v653
  %655 = vmatmul.bf16.gmra.mxu0 %v295
  %v656 = vpop.f32.mrf.mxu0
  %v657 = vadd.f32 %v593, %v656
  %v658 = vpop.f32.mrf.mxu0
  %v659 = vadd.f32 %v595, %v658
  %660 = vmatmul.bf16.gmra.mxu0 %v299
  %v661 = vpop.f32.mrf.mxu0
  %v662 = vadd.f32 %v598, %v661
  %v663 = vpop.f32.mrf.mxu0
  %v664 = vadd.f32 %v600, %v663
  %665 = vdwg.mxu0
  %666 = vmatpush.bf16.msra.mxu0 %v497
  %667 = vmatpush.bf16.msra.mxu0 %v496
  %668 = vmatpush.bf16.msra.mxu0 %v495
  %669 = vmatpush.bf16.msra.mxu0 %v494
  %670 = vmatpush.bf16.msra.mxu0 %v493
  %671 = vmatpush.bf16.msra.mxu0 %v492
  %672 = vmatpush.bf16.msra.mxu0 %v491
  %673 = vmatpush.bf16.msra.mxu0 %v490
  %674 = vmatmul.bf16.gmra.mxu0 %v260
  %v675 = vpop.f32.mrf.mxu0
  %v676 = vadd.f32 %v612, %v675
  %v677 = vpop.f32.mrf.mxu0
  %v678 = vadd.f32 %v614, %v677
  %679 = vmatmul.bf16.gmra.mxu0 %v264
  %v680 = vpop.f32.mrf.mxu0
  %v681 = vadd.f32 %v617, %v680
  %v682 = vpop.f32.mrf.mxu0
  %v683 = vadd.f32 %v619, %v682
  %684 = vmatmul.bf16.gmra.mxu0 %v268
  %v685 = vpop.f32.mrf.mxu0
  %v686 = vadd.f32 %v622, %v685
  %v687 = vpop.f32.mrf.mxu0
  %v688 = vadd.f32 %v624, %v687
  %689 = vmatmul.bf16.gmra.mxu0 %v272
  %v690 = vpop.f32.mrf.mxu0
  %v691 = vadd.f32 %v627, %v690
  %v692 = vpop.f32.mrf.mxu0
  %v693 = vadd.f32 %v629, %v692
  %694 = vmatmul.bf16.gmra.mxu0 %v276
  %v695 = vpop.f32.mrf.mxu0
  %v696 = vadd.f32 %v632, %v695
  %v697 = vpop.f32.mrf.mxu0
  %v698 = vadd.f32 %v634, %v697
  %699 = vmatmul.bf16.gmra.mxu0 %v280
  %v700 = vpop.f32.mrf.mxu0
  %v701 = vadd.f32 %v637, %v700
  %v702 = vpop.f32.mrf.mxu0
  %v703 = vadd.f32 %v639, %v702
  %704 = vmatmul.bf16.gmra.mxu0 %v284
  %v705 = vpop.f32.mrf.mxu0
  %v706 = vadd.f32 %v642, %v705
  %v707 = vpop.f32.mrf.mxu0
  %v708 = vadd.f32 %v644, %v707
  %709 = vmatmul.bf16.gmra.mxu0 %v288
  %v710 = vpop.f32.mrf.mxu0
  %v711 = vadd.f32 %v647, %v710
  %v712 = vpop.f32.mrf.mxu0
  %v713 = vadd.f32 %v649, %v712
  %714 = vmatmul.bf16.gmra.mxu0 %v292
  %v715 = vpop.f32.mrf.mxu0
  %v716 = vadd.f32 %v652, %v715
  %v717 = vpop.f32.mrf.mxu0
  %v718 = vadd.f32 %v654, %v717
  %719 = vmatmul.bf16.gmra.mxu0 %v296
  %v720 = vpop.f32.mrf.mxu0
  %v721 = vadd.f32 %v657, %v720
  %v722 = vpop.f32.mrf.mxu0
  %v723 = vadd.f32 %v659, %v722
  %724 = vmatmul.bf16.gmra.mxu0 %v300
  %v725 = vpop.f32.mrf.mxu0
  %v726 = vadd.f32 %v662, %v725
  %v727 = vpop.f32.mrf.mxu0
  %v728 = vadd.f32 %v664, %v727
  %729 = vdwg.mxu0
  %730 = vmatpush.bf16.msra.mxu0 %v505
  %731 = vmatpush.bf16.msra.mxu0 %v504
  %732 = vmatpush.bf16.msra.mxu0 %v503
  %733 = vmatpush.bf16.msra.mxu0 %v502
  %734 = vmatpush.bf16.msra.mxu0 %v501
  %735 = vmatpush.bf16.msra.mxu0 %v500
  %736 = vmatpush.bf16.msra.mxu0 %v499
  %737 = vmatpush.bf16.msra.mxu0 %v498
  %738 = vmatmul.bf16.gmra.mxu0 %v261
  %v739 = vpop.f32.mrf.mxu0
  %v740 = vadd.f32 %v676, %v739
  %v741 = vpop.f32.mrf.mxu0
  %v742 = vadd.f32 %v678, %v741
  %743 = vmatmul.bf16.gmra.mxu0 %v265
  %v744 = vpop.f32.mrf.mxu0
  %v745 = vadd.f32 %v681, %v744
  %v746 = vpop.f32.mrf.mxu0
  %v747 = vadd.f32 %v683, %v746
  %748 = vmatmul.bf16.gmra.mxu0 %v269
  %v749 = vpop.f32.mrf.mxu0
  %v750 = vadd.f32 %v686, %v749
  %v751 = vpop.f32.mrf.mxu0
  %v752 = vadd.f32 %v688, %v751
  %753 = vmatmul.bf16.gmra.mxu0 %v273
  %v754 = vpop.f32.mrf.mxu0
  %v755 = vadd.f32 %v691, %v754
  %v756 = vpop.f32.mrf.mxu0
  %v757 = vadd.f32 %v693, %v756
  %758 = vmatmul.bf16.gmra.mxu0 %v277
  %v759 = vpop.f32.mrf.mxu0
  %v760 = vadd.f32 %v696, %v759
  %v761 = vpop.f32.mrf.mxu0
  %v762 = vadd.f32 %v698, %v761
  %763 = vmatmul.bf16.gmra.mxu0 %v281
  %v764 = vpop.f32.mrf.mxu0
  %v765 = vadd.f32 %v701, %v764
  %v766 = vpop.f32.mrf.mxu0
  %v767 = vadd.f32 %v703, %v766
  %768 = vmatmul.bf16.gmra.mxu0 %v285
  %v769 = vpop.f32.mrf.mxu0
  %v770 = vadd.f32 %v706, %v769
  %v771 = vpop.f32.mrf.mxu0
  %v772 = vadd.f32 %v708, %v771
  %773 = vmatmul.bf16.gmra.mxu0 %v289
  %v774 = vpop.f32.mrf.mxu0
  %v775 = vadd.f32 %v711, %v774
  %v776 = vpop.f32.mrf.mxu0
  %v777 = vadd.f32 %v713, %v776
  %778 = vmatmul.bf16.gmra.mxu0 %v293
  %v779 = vpop.f32.mrf.mxu0
  %v780 = vadd.f32 %v716, %v779
  %v781 = vpop.f32.mrf.mxu0
  %v782 = vadd.f32 %v718, %v781
  %783 = vmatmul.bf16.gmra.mxu0 %v297
  %v784 = vpop.f32.mrf.mxu0
  %v785 = vadd.f32 %v721, %v784
  %v786 = vpop.f32.mrf.mxu0
  %v787 = vadd.f32 %v723, %v786
  %788 = vmatmul.bf16.gmra.mxu0 %v301
  %v789 = vpop.f32.mrf.mxu0
  %v790 = vadd.f32 %v726, %v789
  %v791 = vpop.f32.mrf.mxu0
  %v792 = vadd.f32 %v728, %v791
  %793 = vdwg.mxu0
  %v794 = vmax.f32 %v740, 0.0
  %v795 = vmax.f32 %v742, 0.0
  %v796 = vmax.f32 %v745, 0.0
  %v797 = vmax.f32 %v747, 0.0
  %v798 = vmax.f32 %v750, 0.0
  %v799 = vmax.f32 %v752, 0.0
  %v800 = vmax.f32 %v755, 0.0
  %v801 = vmax.f32 %v757, 0.0
  %v802 = vmax.f32 %v760, 0.0
  %v803 = vmax.f32 %v762, 0.0
  %v804 = vmax.f32 %v765, 0.0
  %v805 = vmax.f32 %v767, 0.0
  %v806 = vmax.f32 %v770, 0.0
  %v807 = vmax.f32 %v772, 0.0
  %v808 = vmax.f32 %v775, 0.0
  %v809 = vmax.f32 %v777, 0.0
  %v810 = vmax.f32 %v780, 0.0
  %v811 = vmax.f32 %v782, 0.0
  %v812 = vmax.f32 %v785, 0.0
  %v813 = vmax.f32 %v787, 0.0
  %v814 = vmax.f32 %v790, 0.0
  %v815 = vmax.f32 %v792, 0.0
  %v816 = vpack.c.bf16 %v794, %v794
  %v817 = vpack.c.bf16 %v795, %v795
  %v818 = vpack.c.bf16 %v796, %v796
  %v819 = vpack.c.bf16 %v797, %v797
  %v820 = vpack.c.bf16 %v798, %v798
  %v821 = vpack.c.bf16 %v799, %v799
  %v822 = vpack.c.bf16 %v800, %v800
  %v823 = vpack.c.bf16 %v801, %v801
  %v824 = vpack.c.bf16 %v802, %v802
  %v825 = vpack.c.bf16 %v803, %v803
  %v826 = vpack.c.bf16 %v804, %v804
  %v827 = vpack.c.bf16 %v805, %v805
  %v828 = vpack.c.bf16 %v806, %v806
  %v829 = vpack.c.bf16 %v807, %v807
  %v830 = vpack.c.bf16 %v808, %v808
  %v831 = vpack.c.bf16 %v809, %v809
  %v832 = vpack.c.bf16 %v810, %v810
  %v833 = vpack.c.bf16 %v811, %v811
  %v834 = vpack.c.bf16 %v812, %v812
  %v835 = vpack.c.bf16 %v813, %v813
  %v836 = vpack.c.bf16 %v814, %v814
  %v837 = vpack.c.bf16 %v815, %v815
  %838 = vst [vmem:[%s3] sm:$0xf] %v816
  %839 = vst [vmem:[%s3 + $0x4] sm:$0xf] %v817
  %840 = vst [vmem:[%s3 + $0x8] sm:$0xf] %v818
  %841 = vst [vmem:[%s3 + $0xc] sm:$0xf] %v819
  %842 = vst [vmem:[%s3 + $0x10] sm:$0xf] %v820
  %843 = vst [vmem:[%s3 + $0x14] sm:$0xf] %v821
  %844 = vst [vmem:[%s3 + $0x18] sm:$0xf] %v822
  %845 = vst [vmem:[%s3 + $0x1c] sm:$0xf] %v823
  %846 = vst [vmem:[%s3 + $0x20] sm:$0xf] %v824
  %847 = vst [vmem:[%s3 + $0x24] sm:$0xf] %v825
  %848 = vst [vmem:[%s3 + $0x28] sm:$0xf] %v826
  %849 = vst [vmem:[%s3 + $0x2c] sm:$0xf] %v827
  %850 = vst [vmem:[%s3 + $0x30] sm:$0xf] %v828
  %851 = vst [vmem:[%s3 + $0x34] sm:$0xf] %v829
  %852 = vst [vmem:[%s3 + $0x38] sm:$0xf] %v830
  %853 = vst [vmem:[%s3 + $0x3c] sm:$0xf] %v831
  %854 = vst [vmem:[%s3 + $0x40] sm:$0xf] %v832
  %855 = vst [vmem:[%s3 + $0x44] sm:$0xf] %v833
  %856 = vst [vmem:[%s3 + $0x48] sm:$0xf] %v834
  %857 = vst [vmem:[%s3 + $0x4c] sm:$0xf] %v835
  %858 = vst [vmem:[%s3 + $0x50] sm:$0xf] %v836
  %859 = vst [vmem:[%s3 + $0x54] sm:$0xf] %v837
  // Predicated region
  $region14: #{gaze_prediction_forward.7} parent=0 // pred_check
    _
  $region15: #{gaze_prediction_forward.7} parent=0 // pred_check_branch
    %861 = sbr.rel (0) target = $region17
  $region16: #{gaze_prediction_forward.7} parent=0 // pred_region
    _
  $region17: #{gaze_prediction_forward.7} parent=0 // pred_fallthru
    _
  // Predicated region
  $region18: #{gaze_prediction_forward.7} parent=0 // pred_check
    _
  $region19: #{gaze_prediction_forward.7} parent=0 // pred_check_branch
    %863 = sbr.rel (0) target = $region21
  $region20: #{gaze_prediction_forward.7} parent=0 // pred_region
    _
  $region21: #{gaze_prediction_forward.7} parent=0 // pred_fallthru
    _

// kernel: gaze_prediction_forward.8
$region0: #{gaze_prediction_forward.8}
  #allocation0 [shape = 'u32[]', space=smem, size = 0x4, offset = 0x4, fixed_abs, tag = 'smem constant byte address 0x4 - core index']
  #allocation1 [shape = 'u32[72,128]{1,0:T(1,128)}', space=vmem, size = 0x9000, scoped, tag = 'internal scratch']
  %s0 = inlined_call_operand.vmem [shape: bf16[112,640], index: 0, kind: input, shape index: {}]
  %s1 = inlined_call_operand.vmem [shape: bf16[640,128], index: 1, kind: input, shape index: {}]
  %s2 = inlined_call_operand.vmem [shape: f32[1,128], index: 2, kind: input, shape index: {}]
  %s3 = inlined_call_operand.vmem [shape: bf16[112,128], index: 3, kind: output, shape index: {}]
  %s4 = sld [smem:[#allocation0]]
  $region22: #{gaze_prediction_forward.8} parent=0
    _
  %s6 = ssub.s32 1, %s4
  %s7 = scalar_select 0, %s6, %s4
  // Predicated region
  $region2: #{gaze_prediction_forward.8} parent=0 // pred_check
    _
  $region3: #{gaze_prediction_forward.8} parent=0 // pred_check_branch
    %9 = sbr.rel (0) target = $region5
  $region4: #{gaze_prediction_forward.8} parent=0 // pred_region
    _
  $region5: #{gaze_prediction_forward.8} parent=0 // pred_fallthru
    _
  // Predicated region
  $region6: #{gaze_prediction_forward.8} parent=0 // pred_check
    _
  $region7: #{gaze_prediction_forward.8} parent=0 // pred_check_branch
    %11 = sbr.rel (0) target = $region9
  $region8: #{gaze_prediction_forward.8} parent=0 // pred_region
    _
  $region9: #{gaze_prediction_forward.8} parent=0 // pred_fallthru
    _
  // Predicated region
  $region10: #{gaze_prediction_forward.8} parent=0 // pred_check
    _
  $region11: #{gaze_prediction_forward.8} parent=0 // pred_check_branch
    %13 = sbr.rel (0) target = $region13
  $region12: #{gaze_prediction_forward.8} parent=0 // pred_region
    _
  $region13: #{gaze_prediction_forward.8} parent=0 // pred_fallthru
    _
  %v14 = vld [vmem:[%s0] sm:$0xff]
  %v15 = vld [vmem:[%s0 + $0x8] sm:$0xff]
  %v16 = vld [vmem:[%s0 + $0x10] sm:$0xf]
  %v17 = vld [vmem:[%s0 + $0x14] sm:$0xff]
  %v18 = vld [vmem:[%s0 + $0x1c] sm:$0xff]
  %v19 = vld [vmem:[%s0 + $0x24] sm:$0xf]
  %v20 = vld [vmem:[%s0 + $0x28] sm:$0xff]
  %v21 = vld [vmem:[%s0 + $0x30] sm:$0xff]
  %v22 = vld [vmem:[%s0 + $0x38] sm:$0xf]
  %v23 = vld [vmem:[%s0 + $0x3c] sm:$0xff]
  %v24 = vld [vmem:[%s0 + $0x44] sm:$0xff]
  %v25 = vld [vmem:[%s0 + $0x4c] sm:$0xf]
  %v26 = vld [vmem:[%s0 + $0x50] sm:$0xff]
  %v27 = vld [vmem:[%s0 + $0x58] sm:$0xff]
  %v28 = vld [vmem:[%s0 + $0x60] sm:$0xf]
  %v29 = vld [vmem:[%s0 + $0x64] sm:$0xff]
  %v30 = vld [vmem:[%s0 + $0x6c] sm:$0xff]
  %v31 = vld [vmem:[%s0 + $0x74] sm:$0xf]
  %v32 = vld [vmem:[%s0 + $0x78] sm:$0xff]
  %v33 = vld [vmem:[%s0 + $0x80] sm:$0xff]
  %v34 = vld [vmem:[%s0 + $0x88] sm:$0xf]
  %v35 = vld [vmem:[%s0 + $0x8c] sm:$0xff]
  %v36 = vld [vmem:[%s0 + $0x94] sm:$0xff]
  %v37 = vld [vmem:[%s0 + $0x9c] sm:$0xf]
  %v38 = vld [vmem:[%s0 + $0xa0] sm:$0xff]
  %v39 = vld [vmem:[%s0 + $0xa8] sm:$0xff]
  %v40 = vld [vmem:[%s0 + $0xb0] sm:$0xf]
  %v41 = vld [vmem:[%s0 + $0xb4] sm:$0xff]
  %v42 = vld [vmem:[%s0 + $0xbc] sm:$0xff]
  %v43 = vld [vmem:[%s0 + $0xc4] sm:$0xf]
  %v44 = vld [vmem:[%s0 + $0xc8] sm:$0xff]
  %v45 = vld [vmem:[%s0 + $0xd0] sm:$0xff]
  %v46 = vld [vmem:[%s0 + $0xd8] sm:$0xf]
  %v47 = vld [vmem:[%s0 + $0xdc] sm:$0xff]
  %v48 = vld [vmem:[%s0 + $0xe4] sm:$0xff]
  %v49 = vld [vmem:[%s0 + $0xec] sm:$0xf]
  %v50 = vld [vmem:[%s0 + $0xf0] sm:$0xff]
  %v51 = vld [vmem:[%s0 + $0xf8] sm:$0xff]
  %v52 = vld [vmem:[%s0 + $0x100] sm:$0xf]
  %v53 = vld [vmem:[%s0 + $0x104] sm:$0xff]
  %v54 = vld [vmem:[%s0 + $0x10c] sm:$0xff]
  %v55 = vld [vmem:[%s0 + $0x114] sm:$0xf]
  %v56 = vld [vmem:[%s1] sm:$0xf]
  %v57 = vld [vmem:[%s1 + $0x4] sm:$0xf]
  %v58 = vld [vmem:[%s1 + $0x8] sm:$0xf]
  %v59 = vld [vmem:[%s1 + $0xc] sm:$0xf]
  %v60 = vld [vmem:[%s1 + $0x10] sm:$0xf]
  %v61 = vld [vmem:[%s1 + $0x14] sm:$0xf]
  %v62 = vld [vmem:[%s1 + $0x18] sm:$0xf]
  %v63 = vld [vmem:[%s1 + $0x1c] sm:$0xf]
  %v64 = vld [vmem:[%s1 + $0x20] sm:$0xf]
  %v65 = vld [vmem:[%s1 + $0x24] sm:$0xf]
  %v66 = vld [vmem:[%s1 + $0x28] sm:$0xf]
  %v67 = vld [vmem:[%s1 + $0x2c] sm:$0xf]
  %v68 = vld [vmem:[%s1 + $0x30] sm:$0xf]
  %v69 = vld [vmem:[%s1 + $0x34] sm:$0xf]
  %v70 = vld [vmem:[%s1 + $0x38] sm:$0xf]
  %v71 = vld [vmem:[%s1 + $0x3c] sm:$0xf]
  %v72 = vld [vmem:[%s1 + $0x40] sm:$0xf]
  %v73 = vld [vmem:[%s1 + $0x44] sm:$0xf]
  %v74 = vld [vmem:[%s1 + $0x48] sm:$0xf]
  %v75 = vld [vmem:[%s1 + $0x4c] sm:$0xf]
  %v76 = vld [vmem:[%s1 + $0x50] sm:$0xf]
  %v77 = vld [vmem:[%s1 + $0x54] sm:$0xf]
  %v78 = vld [vmem:[%s1 + $0x58] sm:$0xf]
  %v79 = vld [vmem:[%s1 + $0x5c] sm:$0xf]
  %v80 = vld [vmem:[%s1 + $0x60] sm:$0xf]
  %v81 = vld [vmem:[%s1 + $0x64] sm:$0xf]
  %v82 = vld [vmem:[%s1 + $0x68] sm:$0xf]
  %v83 = vld [vmem:[%s1 + $0x6c] sm:$0xf]
  %v84 = vld [vmem:[%s1 + $0x70] sm:$0xf]
  %v85 = vld [vmem:[%s1 + $0x74] sm:$0xf]
  %v86 = vld [vmem:[%s1 + $0x78] sm:$0xf]
  %v87 = vld [vmem:[%s1 + $0x7c] sm:$0xf]
  %v88 = vld [vmem:[%s1 + $0x80] sm:$0xf]
  %v89 = vld [vmem:[%s1 + $0x84] sm:$0xf]
  %v90 = vld [vmem:[%s1 + $0x88] sm:$0xf]
  %v91 = vld [vmem:[%s1 + $0x8c] sm:$0xf]
  %v92 = vld [vmem:[%s1 + $0x90] sm:$0xf]
  %v93 = vld [vmem:[%s1 + $0x94] sm:$0xf]
  %v94 = vld [vmem:[%s1 + $0x98] sm:$0xf]
  %v95 = vld [vmem:[%s1 + $0x9c] sm:$0xf]
  %v96 = vld [vmem:[%s1 + $0xa0] sm:$0xf]
  %v97 = vld [vmem:[%s1 + $0xa4] sm:$0xf]
  %v98 = vld [vmem:[%s1 + $0xa8] sm:$0xf]
  %v99 = vld [vmem:[%s1 + $0xac] sm:$0xf]
  %v100 = vld [vmem:[%s1 + $0xb0] sm:$0xf]
  %v101 = vld [vmem:[%s1 + $0xb4] sm:$0xf]
  %v102 = vld [vmem:[%s1 + $0xb8] sm:$0xf]
  %v103 = vld [vmem:[%s1 + $0xbc] sm:$0xf]
  %v104 = vld [vmem:[%s1 + $0xc0] sm:$0xf]
  %v105 = vld [vmem:[%s1 + $0xc4] sm:$0xf]
  %v106 = vld [vmem:[%s1 + $0xc8] sm:$0xf]
  %v107 = vld [vmem:[%s1 + $0xcc] sm:$0xf]
  %v108 = vld [vmem:[%s1 + $0xd0] sm:$0xf]
  %v109 = vld [vmem:[%s1 + $0xd4] sm:$0xf]
  %v110 = vld [vmem:[%s1 + $0xd8] sm:$0xf]
  %v111 = vld [vmem:[%s1 + $0xdc] sm:$0xf]
  %v112 = vld [vmem:[%s1 + $0xe0] sm:$0xf]
  %v113 = vld [vmem:[%s1 + $0xe4] sm:$0xf]
  %v114 = vld [vmem:[%s1 + $0xe8] sm:$0xf]
  %v115 = vld [vmem:[%s1 + $0xec] sm:$0xf]
  %v116 = vld [vmem:[%s1 + $0xf0] sm:$0xf]
  %v117 = vld [vmem:[%s1 + $0xf4] sm:$0xf]
  %v118 = vld [vmem:[%s1 + $0xf8] sm:$0xf]
  %v119 = vld [vmem:[%s1 + $0xfc] sm:$0xf]
  %v120 = vld [vmem:[%s1 + $0x100] sm:$0xf]
  %v121 = vld [vmem:[%s1 + $0x104] sm:$0xf]
  %v122 = vld [vmem:[%s1 + $0x108] sm:$0xf]
  %v123 = vld [vmem:[%s1 + $0x10c] sm:$0xf]
  %v124 = vld [vmem:[%s1 + $0x110] sm:$0xf]
  %v125 = vld [vmem:[%s1 + $0x114] sm:$0xf]
  %v126 = vld [vmem:[%s1 + $0x118] sm:$0xf]
  %v127 = vld [vmem:[%s1 + $0x11c] sm:$0xf]
  %v128 = vld [vmem:[%s1 + $0x120] sm:$0xf]
  %v129 = vld [vmem:[%s1 + $0x124] sm:$0xf]
  %v130 = vld [vmem:[%s1 + $0x128] sm:$0xf]
  %v131 = vld [vmem:[%s1 + $0x12c] sm:$0xf]
  %v132 = vld [vmem:[%s1 + $0x130] sm:$0xf]
  %v133 = vld [vmem:[%s1 + $0x134] sm:$0xf]
  %v134 = vld [vmem:[%s1 + $0x138] sm:$0xf]
  %v135 = vld [vmem:[%s1 + $0x13c] sm:$0xf]
  %v136 = vld [vmem:[%s2] sm:$0x1]
  %v138 = vperm.slane %v136, 0
  %v182 = vunpack.c.l.b16 %v14
  %v183 = vunpack.c.h.b16 %v14
  %v184 = vunpack.c.l.b16 %v15
  %v185 = vunpack.c.h.b16 %v15
  %v186 = vunpack.c.l.b16 %v16
  %v187 = vunpack.c.l.b16 %v17
  %v188 = vunpack.c.h.b16 %v17
  %v189 = vunpack.c.l.b16 %v18
  %v190 = vunpack.c.h.b16 %v18
  %v191 = vunpack.c.l.b16 %v19
  %v192 = vunpack.c.l.b16 %v20
  %v193 = vunpack.c.h.b16 %v20
  %v194 = vunpack.c.l.b16 %v21
  %v195 = vunpack.c.h.b16 %v21
  %v196 = vunpack.c.l.b16 %v22
  %v197 = vunpack.c.l.b16 %v23
  %v198 = vunpack.c.h.b16 %v23
  %v199 = vunpack.c.l.b16 %v24
  %v200 = vunpack.c.h.b16 %v24
  %v201 = vunpack.c.l.b16 %v25
  %v202 = vunpack.c.l.b16 %v26
  %v203 = vunpack.c.h.b16 %v26
  %v204 = vunpack.c.l.b16 %v27
  %v205 = vunpack.c.h.b16 %v27
  %v206 = vunpack.c.l.b16 %v28
  %v207 = vunpack.c.l.b16 %v29
  %v208 = vunpack.c.h.b16 %v29
  %v209 = vunpack.c.l.b16 %v30
  %v210 = vunpack.c.h.b16 %v30
  %v211 = vunpack.c.l.b16 %v31
  %v212 = vunpack.c.l.b16 %v32
  %v213 = vunpack.c.h.b16 %v32
  %v214 = vunpack.c.l.b16 %v33
  %v215 = vunpack.c.h.b16 %v33
  %v216 = vunpack.c.l.b16 %v34
  %v217 = vunpack.c.l.b16 %v35
  %v218 = vunpack.c.h.b16 %v35
  %v219 = vunpack.c.l.b16 %v36
  %v220 = vunpack.c.h.b16 %v36
  %v221 = vunpack.c.l.b16 %v37
  %v222 = vunpack.c.l.b16 %v38
  %v223 = vunpack.c.h.b16 %v38
  %v224 = vunpack.c.l.b16 %v39
  %v225 = vunpack.c.h.b16 %v39
  %v226 = vunpack.c.l.b16 %v40
  %v227 = vunpack.c.l.b16 %v41
  %v228 = vunpack.c.h.b16 %v41
  %v229 = vunpack.c.l.b16 %v42
  %v230 = vunpack.c.h.b16 %v42
  %v231 = vunpack.c.l.b16 %v43
  %v232 = vunpack.c.l.b16 %v44
  %v233 = vunpack.c.h.b16 %v44
  %v234 = vunpack.c.l.b16 %v45
  %v235 = vunpack.c.h.b16 %v45
  %v236 = vunpack.c.l.b16 %v46
  %v237 = vunpack.c.l.b16 %v47
  %v238 = vunpack.c.h.b16 %v47
  %v239 = vunpack.c.l.b16 %v48
  %v240 = vunpack.c.h.b16 %v48
  %v241 = vunpack.c.l.b16 %v49
  %v242 = vunpack.c.l.b16 %v50
  %v243 = vunpack.c.h.b16 %v50
  %v244 = vunpack.c.l.b16 %v51
  %v245 = vunpack.c.h.b16 %v51
  %v246 = vunpack.c.l.b16 %v52
  %v247 = vunpack.c.l.b16 %v53
  %v248 = vunpack.c.h.b16 %v53
  %v249 = vunpack.c.l.b16 %v54
  %v250 = vunpack.c.h.b16 %v54
  %v251 = vunpack.c.l.b16 %v55
  %v252 = vpack.c.b16 %v187, %v182
  %v253 = vpack.c.b16 %v188, %v183
  %v254 = vpack.c.b16 %v189, %v184
  %v255 = vpack.c.b16 %v190, %v185
  %v256 = vpack.c.b16 %v191, %v186
  %v257 = vpack.c.b16 %v197, %v192
  %v258 = vpack.c.b16 %v198, %v193
  %v259 = vpack.c.b16 %v199, %v194
  %v260 = vpack.c.b16 %v200, %v195
  %v261 = vpack.c.b16 %v201, %v196
  %v262 = vpack.c.b16 %v207, %v202
  %v263 = vpack.c.b16 %v208, %v203
  %v264 = vpack.c.b16 %v209, %v204
  %v265 = vpack.c.b16 %v210, %v205
  %v266 = vpack.c.b16 %v211, %v206
  %v267 = vpack.c.b16 %v217, %v212
  %v268 = vpack.c.b16 %v218, %v213
  %v269 = vpack.c.b16 %v219, %v214
  %v270 = vpack.c.b16 %v220, %v215
  %v271 = vpack.c.b16 %v221, %v216
  %v272 = vpack.c.b16 %v227, %v222
  %v273 = vpack.c.b16 %v228, %v223
  %v274 = vpack.c.b16 %v229, %v224
  %v275 = vpack.c.b16 %v230, %v225
  %v276 = vpack.c.b16 %v231, %v226
  %v277 = vpack.c.b16 %v237, %v232
  %v278 = vpack.c.b16 %v238, %v233
  %v279 = vpack.c.b16 %v239, %v234
  %v280 = vpack.c.b16 %v240, %v235
  %v281 = vpack.c.b16 %v241, %v236
  %v282 = vpack.c.b16 %v247, %v242
  %v283 = vpack.c.b16 %v248, %v243
  %v284 = vpack.c.b16 %v249, %v244
  %v285 = vpack.c.b16 %v250, %v245
  %v286 = vpack.c.b16 %v251, %v246
  %v402 = vunpack.c.l.b16 %v56
  %v403 = vunpack.c.l.b16 %v57
  %v404 = vunpack.c.l.b16 %v58
  %v405 = vunpack.c.l.b16 %v59
  %v406 = vunpack.c.l.b16 %v60
  %v407 = vunpack.c.l.b16 %v61
  %v408 = vunpack.c.l.b16 %v62
  %v409 = vunpack.c.l.b16 %v63
  %v410 = vunpack.c.l.b16 %v64
  %v411 = vunpack.c.l.b16 %v65
  %v412 = vunpack.c.l.b16 %v66
  %v413 = vunpack.c.l.b16 %v67
  %v414 = vunpack.c.l.b16 %v68
  %v415 = vunpack.c.l.b16 %v69
  %v416 = vunpack.c.l.b16 %v70
  %v417 = vunpack.c.l.b16 %v71
  %v418 = vunpack.c.l.b16 %v72
  %v419 = vunpack.c.l.b16 %v73
  %v420 = vunpack.c.l.b16 %v74
  %v421 = vunpack.c.l.b16 %v75
  %v422 = vunpack.c.l.b16 %v76
  %v423 = vunpack.c.l.b16 %v77
  %v424 = vunpack.c.l.b16 %v78
  %v425 = vunpack.c.l.b16 %v79
  %v426 = vunpack.c.l.b16 %v80
  %v427 = vunpack.c.l.b16 %v81
  %v428 = vunpack.c.l.b16 %v82
  %v429 = vunpack.c.l.b16 %v83
  %v430 = vunpack.c.l.b16 %v84
  %v431 = vunpack.c.l.b16 %v85
  %v432 = vunpack.c.l.b16 %v86
  %v433 = vunpack.c.l.b16 %v87
  %v434 = vunpack.c.l.b16 %v88
  %v435 = vunpack.c.l.b16 %v89
  %v436 = vunpack.c.l.b16 %v90
  %v437 = vunpack.c.l.b16 %v91
  %v438 = vunpack.c.l.b16 %v92
  %v439 = vunpack.c.l.b16 %v93
  %v440 = vunpack.c.l.b16 %v94
  %v441 = vunpack.c.l.b16 %v95
  %v442 = vunpack.c.l.b16 %v96
  %v443 = vunpack.c.l.b16 %v97
  %v444 = vunpack.c.l.b16 %v98
  %v445 = vunpack.c.l.b16 %v99
  %v446 = vunpack.c.l.b16 %v100
  %v447 = vunpack.c.l.b16 %v101
  %v448 = vunpack.c.l.b16 %v102
  %v449 = vunpack.c.l.b16 %v103
  %v450 = vunpack.c.l.b16 %v104
  %v451 = vunpack.c.l.b16 %v105
  %v452 = vunpack.c.l.b16 %v106
  %v453 = vunpack.c.l.b16 %v107
  %v454 = vunpack.c.l.b16 %v108
  %v455 = vunpack.c.l.b16 %v109
  %v456 = vunpack.c.l.b16 %v110
  %v457 = vunpack.c.l.b16 %v111
  %v458 = vunpack.c.l.b16 %v112
  %v459 = vunpack.c.l.b16 %v113
  %v460 = vunpack.c.l.b16 %v114
  %v461 = vunpack.c.l.b16 %v115
  %v462 = vunpack.c.l.b16 %v116
  %v463 = vunpack.c.l.b16 %v117
  %v464 = vunpack.c.l.b16 %v118
  %v465 = vunpack.c.l.b16 %v119
  %v466 = vunpack.c.l.b16 %v120
  %v467 = vunpack.c.l.b16 %v121
  %v468 = vunpack.c.l.b16 %v122
  %v469 = vunpack.c.l.b16 %v123
  %v470 = vunpack.c.l.b16 %v124
  %v471 = vunpack.c.l.b16 %v125
  %v472 = vunpack.c.l.b16 %v126
  %v473 = vunpack.c.l.b16 %v127
  %v474 = vunpack.c.l.b16 %v128
  %v475 = vunpack.c.l.b16 %v129
  %v476 = vunpack.c.l.b16 %v130
  %v477 = vunpack.c.l.b16 %v131
  %v478 = vunpack.c.l.b16 %v132
  %v479 = vunpack.c.l.b16 %v133
  %v480 = vunpack.c.l.b16 %v134
  %v481 = vunpack.c.l.b16 %v135
  %v482 = vpack.c.b16 %v403, %v402
  %v483 = vpack.c.b16 %v405, %v404
  %v484 = vpack.c.b16 %v407, %v406
  %v485 = vpack.c.b16 %v409, %v408
  %v486 = vpack.c.b16 %v411, %v410
  %v487 = vpack.c.b16 %v413, %v412
  %v488 = vpack.c.b16 %v415, %v414
  %v489 = vpack.c.b16 %v417, %v416
  %v490 = vpack.c.b16 %v419, %v418
  %v491 = vpack.c.b16 %v421, %v420
  %v492 = vpack.c.b16 %v423, %v422
  %v493 = vpack.c.b16 %v425, %v424
  %v494 = vpack.c.b16 %v427, %v426
  %v495 = vpack.c.b16 %v429, %v428
  %v496 = vpack.c.b16 %v431, %v430
  %v497 = vpack.c.b16 %v433, %v432
  %v498 = vpack.c.b16 %v435, %v434
  %v499 = vpack.c.b16 %v437, %v436
  %v500 = vpack.c.b16 %v439, %v438
  %v501 = vpack.c.b16 %v441, %v440
  %v502 = vpack.c.b16 %v443, %v442
  %v503 = vpack.c.b16 %v445, %v444
  %v504 = vpack.c.b16 %v447, %v446
  %v505 = vpack.c.b16 %v449, %v448
  %v506 = vpack.c.b16 %v451, %v450
  %v507 = vpack.c.b16 %v453, %v452
  %v508 = vpack.c.b16 %v455, %v454
  %v509 = vpack.c.b16 %v457, %v456
  %v510 = vpack.c.b16 %v459, %v458
  %v511 = vpack.c.b16 %v461, %v460
  %v512 = vpack.c.b16 %v463, %v462
  %v513 = vpack.c.b16 %v465, %v464
  %v514 = vpack.c.b16 %v467, %v466
  %v515 = vpack.c.b16 %v469, %v468
  %v516 = vpack.c.b16 %v471, %v470
  %v517 = vpack.c.b16 %v473, %v472
  %v518 = vpack.c.b16 %v475, %v474
  %v519 = vpack.c.b16 %v477, %v476
  %v520 = vpack.c.b16 %v479, %v478
  %v521 = vpack.c.b16 %v481, %v480
  %562 = vmatpush.bf16.msra.mxu0 %v489
  %563 = vmatpush.bf16.msra.mxu0 %v488
  %564 = vmatpush.bf16.msra.mxu0 %v487
  %565 = vmatpush.bf16.msra.mxu0 %v486
  %566 = vmatpush.bf16.msra.mxu0 %v485
  %567 = vmatpush.bf16.msra.mxu0 %v484
  %568 = vmatpush.bf16.msra.mxu0 %v483
  %569 = vmatpush.bf16.msra.mxu0 %v482
  %570 = vmatmul.bf16.gmra.mxu0 %v252
  %v571 = vpop.f32.mrf.mxu0
  %v572 = vadd.f32 %v138, %v571
  %v573 = vpop.f32.mrf.mxu0
  %v574 = vadd.f32 %v138, %v573
  %575 = vmatmul.bf16.gmra.mxu0 %v257
  %v576 = vpop.f32.mrf.mxu0
  %v577 = vadd.f32 %v138, %v576
  %v578 = vpop.f32.mrf.mxu0
  %v579 = vadd.f32 %v138, %v578
  %580 = vmatmul.bf16.gmra.mxu0 %v262
  %v581 = vpop.f32.mrf.mxu0
  %v582 = vadd.f32 %v138, %v581
  %v583 = vpop.f32.mrf.mxu0
  %v584 = vadd.f32 %v138, %v583
  %585 = vmatmul.bf16.gmra.mxu0 %v267
  %v586 = vpop.f32.mrf.mxu0
  %v587 = vadd.f32 %v138, %v586
  %v588 = vpop.f32.mrf.mxu0
  %v589 = vadd.f32 %v138, %v588
  %590 = vmatmul.bf16.gmra.mxu0 %v272
  %v591 = vpop.f32.mrf.mxu0
  %v592 = vadd.f32 %v138, %v591
  %v593 = vpop.f32.mrf.mxu0
  %v594 = vadd.f32 %v138, %v593
  %595 = vmatmul.bf16.gmra.mxu0 %v277
  %v596 = vpop.f32.mrf.mxu0
  %v597 = vadd.f32 %v138, %v596
  %v598 = vpop.f32.mrf.mxu0
  %v599 = vadd.f32 %v138, %v598
  %600 = vmatmul.bf16.gmra.mxu0 %v282
  %v601 = vpop.f32.mrf.mxu0
  %v602 = vadd.f32 %v138, %v601
  %v603 = vpop.f32.mrf.mxu0
  %v604 = vadd.f32 %v138, %v603
  %605 = vdwg.mxu0
  %606 = vmatpush.bf16.msra.mxu0 %v497
  %607 = vmatpush.bf16.msra.mxu0 %v496
  %608 = vmatpush.bf16.msra.mxu0 %v495
  %609 = vmatpush.bf16.msra.mxu0 %v494
  %610 = vmatpush.bf16.msra.mxu0 %v493
  %611 = vmatpush.bf16.msra.mxu0 %v492
  %612 = vmatpush.bf16.msra.mxu0 %v491
  %613 = vmatpush.bf16.msra.mxu0 %v490
  %614 = vmatmul.bf16.gmra.mxu0 %v253
  %v615 = vpop.f32.mrf.mxu0
  %v616 = vadd.f32 %v572, %v615
  %v617 = vpop.f32.mrf.mxu0
  %v618 = vadd.f32 %v574, %v617
  %619 = vmatmul.bf16.gmra.mxu0 %v258
  %v620 = vpop.f32.mrf.mxu0
  %v621 = vadd.f32 %v577, %v620
  %v622 = vpop.f32.mrf.mxu0
  %v623 = vadd.f32 %v579, %v622
  %624 = vmatmul.bf16.gmra.mxu0 %v263
  %v625 = vpop.f32.mrf.mxu0
  %v626 = vadd.f32 %v582, %v625
  %v627 = vpop.f32.mrf.mxu0
  %v628 = vadd.f32 %v584, %v627
  %629 = vmatmul.bf16.gmra.mxu0 %v268
  %v630 = vpop.f32.mrf.mxu0
  %v631 = vadd.f32 %v587, %v630
  %v632 = vpop.f32.mrf.mxu0
  %v633 = vadd.f32 %v589, %v632
  %634 = vmatmul.bf16.gmra.mxu0 %v273
  %v635 = vpop.f32.mrf.mxu0
  %v636 = vadd.f32 %v592, %v635
  %v637 = vpop.f32.mrf.mxu0
  %v638 = vadd.f32 %v594, %v637
  %639 = vmatmul.bf16.gmra.mxu0 %v278
  %v640 = vpop.f32.mrf.mxu0
  %v641 = vadd.f32 %v597, %v640
  %v642 = vpop.f32.mrf.mxu0
  %v643 = vadd.f32 %v599, %v642
  %644 = vmatmul.bf16.gmra.mxu0 %v283
  %v645 = vpop.f32.mrf.mxu0
  %v646 = vadd.f32 %v602, %v645
  %v647 = vpop.f32.mrf.mxu0
  %v648 = vadd.f32 %v604, %v647
  %649 = vdwg.mxu0
  %650 = vmatpush.bf16.msra.mxu0 %v505
  %651 = vmatpush.bf16.msra.mxu0 %v504
  %652 = vmatpush.bf16.msra.mxu0 %v503
  %653 = vmatpush.bf16.msra.mxu0 %v502
  %654 = vmatpush.bf16.msra.mxu0 %v501
  %655 = vmatpush.bf16.msra.mxu0 %v500
  %656 = vmatpush.bf16.msra.mxu0 %v499
  %657 = vmatpush.bf16.msra.mxu0 %v498
  %658 = vmatmul.bf16.gmra.mxu0 %v254
  %v659 = vpop.f32.mrf.mxu0
  %v660 = vadd.f32 %v616, %v659
  %v661 = vpop.f32.mrf.mxu0
  %v662 = vadd.f32 %v618, %v661
  %663 = vmatmul.bf16.gmra.mxu0 %v259
  %v664 = vpop.f32.mrf.mxu0
  %v665 = vadd.f32 %v621, %v664
  %v666 = vpop.f32.mrf.mxu0
  %v667 = vadd.f32 %v623, %v666
  %668 = vmatmul.bf16.gmra.mxu0 %v264
  %v669 = vpop.f32.mrf.mxu0
  %v670 = vadd.f32 %v626, %v669
  %v671 = vpop.f32.mrf.mxu0
  %v672 = vadd.f32 %v628, %v671
  %673 = vmatmul.bf16.gmra.mxu0 %v269
  %v674 = vpop.f32.mrf.mxu0
  %v675 = vadd.f32 %v631, %v674
  %v676 = vpop.f32.mrf.mxu0
  %v677 = vadd.f32 %v633, %v676
  %678 = vmatmul.bf16.gmra.mxu0 %v274
  %v679 = vpop.f32.mrf.mxu0
  %v680 = vadd.f32 %v636, %v679
  %v681 = vpop.f32.mrf.mxu0
  %v682 = vadd.f32 %v638, %v681
  %683 = vmatmul.bf16.gmra.mxu0 %v279
  %v684 = vpop.f32.mrf.mxu0
  %v685 = vadd.f32 %v641, %v684
  %v686 = vpop.f32.mrf.mxu0
  %v687 = vadd.f32 %v643, %v686
  %688 = vmatmul.bf16.gmra.mxu0 %v284
  %v689 = vpop.f32.mrf.mxu0
  %v690 = vadd.f32 %v646, %v689
  %v691 = vpop.f32.mrf.mxu0
  %v692 = vadd.f32 %v648, %v691
  %693 = vdwg.mxu0
  %694 = vmatpush.bf16.msra.mxu0 %v513
  %695 = vmatpush.bf16.msra.mxu0 %v512
  %696 = vmatpush.bf16.msra.mxu0 %v511
  %697 = vmatpush.bf16.msra.mxu0 %v510
  %698 = vmatpush.bf16.msra.mxu0 %v509
  %699 = vmatpush.bf16.msra.mxu0 %v508
  %700 = vmatpush.bf16.msra.mxu0 %v507
  %701 = vmatpush.bf16.msra.mxu0 %v506
  %702 = vmatmul.bf16.gmra.mxu0 %v255
  %v703 = vpop.f32.mrf.mxu0
  %v704 = vadd.f32 %v660, %v703
  %v705 = vpop.f32.mrf.mxu0
  %v706 = vadd.f32 %v662, %v705
  %707 = vmatmul.bf16.gmra.mxu0 %v260
  %v708 = vpop.f32.mrf.mxu0
  %v709 = vadd.f32 %v665, %v708
  %v710 = vpop.f32.mrf.mxu0
  %v711 = vadd.f32 %v667, %v710
  %712 = vmatmul.bf16.gmra.mxu0 %v265
  %v713 = vpop.f32.mrf.mxu0
  %v714 = vadd.f32 %v670, %v713
  %v715 = vpop.f32.mrf.mxu0
  %v716 = vadd.f32 %v672, %v715
  %717 = vmatmul.bf16.gmra.mxu0 %v270
  %v718 = vpop.f32.mrf.mxu0
  %v719 = vadd.f32 %v675, %v718
  %v720 = vpop.f32.mrf.mxu0
  %v721 = vadd.f32 %v677, %v720
  %722 = vmatmul.bf16.gmra.mxu0 %v275
  %v723 = vpop.f32.mrf.mxu0
  %v724 = vadd.f32 %v680, %v723
  %v725 = vpop.f32.mrf.mxu0
  %v726 = vadd.f32 %v682, %v725
  %727 = vmatmul.bf16.gmra.mxu0 %v280
  %v728 = vpop.f32.mrf.mxu0
  %v729 = vadd.f32 %v685, %v728
  %v730 = vpop.f32.mrf.mxu0
  %v731 = vadd.f32 %v687, %v730
  %732 = vmatmul.bf16.gmra.mxu0 %v285
  %v733 = vpop.f32.mrf.mxu0
  %v734 = vadd.f32 %v690, %v733
  %v735 = vpop.f32.mrf.mxu0
  %v736 = vadd.f32 %v692, %v735
  %737 = vdwg.mxu0
  %738 = vmatpush.bf16.msra.mxu0 %v521
  %739 = vmatpush.bf16.msra.mxu0 %v520
  %740 = vmatpush.bf16.msra.mxu0 %v519
  %741 = vmatpush.bf16.msra.mxu0 %v518
  %742 = vmatpush.bf16.msra.mxu0 %v517
  %743 = vmatpush.bf16.msra.mxu0 %v516
  %744 = vmatpush.bf16.msra.mxu0 %v515
  %745 = vmatpush.bf16.msra.mxu0 %v514
  %746 = vmatmul.bf16.gmra.mxu0 %v256
  %v747 = vpop.f32.mrf.mxu0
  %v748 = vadd.f32 %v704, %v747
  %v749 = vpop.f32.mrf.mxu0
  %v750 = vadd.f32 %v706, %v749
  %751 = vmatmul.bf16.gmra.mxu0 %v261
  %v752 = vpop.f32.mrf.mxu0
  %v753 = vadd.f32 %v709, %v752
  %v754 = vpop.f32.mrf.mxu0
  %v755 = vadd.f32 %v711, %v754
  %756 = vmatmul.bf16.gmra.mxu0 %v266
  %v757 = vpop.f32.mrf.mxu0
  %v758 = vadd.f32 %v714, %v757
  %v759 = vpop.f32.mrf.mxu0
  %v760 = vadd.f32 %v716, %v759
  %761 = vmatmul.bf16.gmra.mxu0 %v271
  %v762 = vpop.f32.mrf.mxu0
  %v763 = vadd.f32 %v719, %v762
  %v764 = vpop.f32.mrf.mxu0
  %v765 = vadd.f32 %v721, %v764
  %766 = vmatmul.bf16.gmra.mxu0 %v276
  %v767 = vpop.f32.mrf.mxu0
  %v768 = vadd.f32 %v724, %v767
  %v769 = vpop.f32.mrf.mxu0
  %v770 = vadd.f32 %v726, %v769
  %771 = vmatmul.bf16.gmra.mxu0 %v281
  %v772 = vpop.f32.mrf.mxu0
  %v773 = vadd.f32 %v729, %v772
  %v774 = vpop.f32.mrf.mxu0
  %v775 = vadd.f32 %v731, %v774
  %776 = vmatmul.bf16.gmra.mxu0 %v286
  %v777 = vpop.f32.mrf.mxu0
  %v778 = vadd.f32 %v734, %v777
  %v779 = vpop.f32.mrf.mxu0
  %v780 = vadd.f32 %v736, %v779
  %781 = vdwg.mxu0
  %v782 = vmax.f32 %v748, 0.0
  %v783 = vmax.f32 %v750, 0.0
  %v784 = vmax.f32 %v753, 0.0
  %v785 = vmax.f32 %v755, 0.0
  %v786 = vmax.f32 %v758, 0.0
  %v787 = vmax.f32 %v760, 0.0
  %v788 = vmax.f32 %v763, 0.0
  %v789 = vmax.f32 %v765, 0.0
  %v790 = vmax.f32 %v768, 0.0
  %v791 = vmax.f32 %v770, 0.0
  %v792 = vmax.f32 %v773, 0.0
  %v793 = vmax.f32 %v775, 0.0
  %v794 = vmax.f32 %v778, 0.0
  %v795 = vmax.f32 %v780, 0.0
  %v796 = vpack.c.bf16 %v782, %v782
  %v797 = vpack.c.bf16 %v783, %v783
  %v798 = vpack.c.bf16 %v784, %v784
  %v799 = vpack.c.bf16 %v785, %v785
  %v800 = vpack.c.bf16 %v786, %v786
  %v801 = vpack.c.bf16 %v787, %v787
  %v802 = vpack.c.bf16 %v788, %v788
  %v803 = vpack.c.bf16 %v789, %v789
  %v804 = vpack.c.bf16 %v790, %v790
  %v805 = vpack.c.bf16 %v791, %v791
  %v806 = vpack.c.bf16 %v792, %v792
  %v807 = vpack.c.bf16 %v793, %v793
  %v808 = vpack.c.bf16 %v794, %v794
  %v809 = vpack.c.bf16 %v795, %v795
  %810 = vst [vmem:[%s3] sm:$0xf] %v796
  %811 = vst [vmem:[%s3 + $0x4] sm:$0xf] %v797
  %812 = vst [vmem:[%s3 + $0x8] sm:$0xf] %v798
  %813 = vst [vmem:[%s3 + $0xc] sm:$0xf] %v799
  %814 = vst [vmem:[%s3 + $0x10] sm:$0xf] %v800
  %815 = vst [vmem:[%s3 + $0x14] sm:$0xf] %v801
  %816 = vst [vmem:[%s3 + $0x18] sm:$0xf] %v802
  %817 = vst [vmem:[%s3 + $0x1c] sm:$0xf] %v803
  %818 = vst [vmem:[%s3 + $0x20] sm:$0xf] %v804
  %819 = vst [vmem:[%s3 + $0x24] sm:$0xf] %v805
  %820 = vst [vmem:[%s3 + $0x28] sm:$0xf] %v806
  %821 = vst [vmem:[%s3 + $0x2c] sm:$0xf] %v807
  %822 = vst [vmem:[%s3 + $0x30] sm:$0xf] %v808
  %823 = vst [vmem:[%s3 + $0x34] sm:$0xf] %v809
  // Predicated region
  $region14: #{gaze_prediction_forward.8} parent=0 // pred_check
    _
  $region15: #{gaze_prediction_forward.8} parent=0 // pred_check_branch
    %825 = sbr.rel (0) target = $region17
  $region16: #{gaze_prediction_forward.8} parent=0 // pred_region
    _
  $region17: #{gaze_prediction_forward.8} parent=0 // pred_fallthru
    _
  // Predicated region
  $region18: #{gaze_prediction_forward.8} parent=0 // pred_check
    _
  $region19: #{gaze_prediction_forward.8} parent=0 // pred_check_branch
    %827 = sbr.rel (0) target = $region21
  $region20: #{gaze_prediction_forward.8} parent=0 // pred_region
    _
  $region21: #{gaze_prediction_forward.8} parent=0 // pred_fallthru
    _

// kernel: gaze_prediction_forward.9
$region0: #{gaze_prediction_forward.9}
  #allocation0 [shape = 'u32[]', space=smem, size = 0x4, offset = 0x4, fixed_abs, tag = 'smem constant byte address 0x4 - core index']
  #allocation1 [shape = 'u32[72,128]{1,0:T(1,128)}', space=vmem, size = 0x9000, scoped, tag = 'internal scratch']
  %s0 = inlined_call_operand.vmem [shape: bf16[176,640], index: 0, kind: input, shape index: {}]
  %s1 = inlined_call_operand.vmem [shape: bf16[640,128], index: 1, kind: input, shape index: {}]
  %s2 = inlined_call_operand.vmem [shape: f32[1,128], index: 2, kind: input, shape index: {}]
  %s3 = inlined_call_operand.vmem [shape: bf16[176,128], index: 3, kind: output, shape index: {}]
  %s4 = sld [smem:[#allocation0]]
  $region22: #{gaze_prediction_forward.9} parent=0
    _
  %s6 = ssub.s32 1, %s4
  %s7 = scalar_select 0, %s6, %s4
  // Predicated region
  $region2: #{gaze_prediction_forward.9} parent=0 // pred_check
    _
  $region3: #{gaze_prediction_forward.9} parent=0 // pred_check_branch
    %9 = sbr.rel (0) target = $region5
  $region4: #{gaze_prediction_forward.9} parent=0 // pred_region
    _
  $region5: #{gaze_prediction_forward.9} parent=0 // pred_fallthru
    _
  // Predicated region
  $region6: #{gaze_prediction_forward.9} parent=0 // pred_check
    _
  $region7: #{gaze_prediction_forward.9} parent=0 // pred_check_branch
    %11 = sbr.rel (0) target = $region9
  $region8: #{gaze_prediction_forward.9} parent=0 // pred_region
    _
  $region9: #{gaze_prediction_forward.9} parent=0 // pred_fallthru
    _
  // Predicated region
  $region10: #{gaze_prediction_forward.9} parent=0 // pred_check
    _
  $region11: #{gaze_prediction_forward.9} parent=0 // pred_check_branch
    %13 = sbr.rel (0) target = $region13
  $region12: #{gaze_prediction_forward.9} parent=0 // pred_region
    _
  $region13: #{gaze_prediction_forward.9} parent=0 // pred_fallthru
    _
  %v14 = vld [vmem:[%s0] sm:$0xff]
  %v15 = vld [vmem:[%s0 + $0x8] sm:$0xff]
  %v16 = vld [vmem:[%s0 + $0x10] sm:$0xf]
  %v17 = vld [vmem:[%s0 + $0x14] sm:$0xff]
  %v18 = vld [vmem:[%s0 + $0x1c] sm:$0xff]
  %v19 = vld [vmem:[%s0 + $0x24] sm:$0xf]
  %v20 = vld [vmem:[%s0 + $0x28] sm:$0xff]
  %v21 = vld [vmem:[%s0 + $0x30] sm:$0xff]
  %v22 = vld [vmem:[%s0 + $0x38] sm:$0xf]
  %v23 = vld [vmem:[%s0 + $0x3c] sm:$0xff]
  %v24 = vld [vmem:[%s0 + $0x44] sm:$0xff]
  %v25 = vld [vmem:[%s0 + $0x4c] sm:$0xf]
  %v26 = vld [vmem:[%s0 + $0x50] sm:$0xff]
  %v27 = vld [vmem:[%s0 + $0x58] sm:$0xff]
  %v28 = vld [vmem:[%s0 + $0x60] sm:$0xf]
  %v29 = vld [vmem:[%s0 + $0x64] sm:$0xff]
  %v30 = vld [vmem:[%s0 + $0x6c] sm:$0xff]
  %v31 = vld [vmem:[%s0 + $0x74] sm:$0xf]
  %v32 = vld [vmem:[%s0 + $0x78] sm:$0xff]
  %v33 = vld [vmem:[%s0 + $0x80] sm:$0xff]
  %v34 = vld [vmem:[%s0 + $0x88] sm:$0xf]
  %v35 = vld [vmem:[%s0 + $0x8c] sm:$0xff]
  %v36 = vld [vmem:[%s0 + $0x94] sm:$0xff]
  %v37 = vld [vmem:[%s0 + $0x9c] sm:$0xf]
  %v38 = vld [vmem:[%s0 + $0xa0] sm:$0xff]
  %v39 = vld [vmem:[%s0 + $0xa8] sm:$0xff]
  %v40 = vld [vmem:[%s0 + $0xb0] sm:$0xf]
  %v41 = vld [vmem:[%s0 + $0xb4] sm:$0xff]
  %v42 = vld [vmem:[%s0 + $0xbc] sm:$0xff]
  %v43 = vld [vmem:[%s0 + $0xc4] sm:$0xf]
  %v44 = vld [vmem:[%s0 + $0xc8] sm:$0xff]
  %v45 = vld [vmem:[%s0 + $0xd0] sm:$0xff]
  %v46 = vld [vmem:[%s0 + $0xd8] sm:$0xf]
  %v47 = vld [vmem:[%s0 + $0xdc] sm:$0xff]
  %v48 = vld [vmem:[%s0 + $0xe4] sm:$0xff]
  %v49 = vld [vmem:[%s0 + $0xec] sm:$0xf]
  %v50 = vld [vmem:[%s0 + $0xf0] sm:$0xff]
  %v51 = vld [vmem:[%s0 + $0xf8] sm:$0xff]
  %v52 = vld [vmem:[%s0 + $0x100] sm:$0xf]
  %v53 = vld [vmem:[%s0 + $0x104] sm:$0xff]
  %v54 = vld [vmem:[%s0 + $0x10c] sm:$0xff]
  %v55 = vld [vmem:[%s0 + $0x114] sm:$0xf]
  %v56 = vld [vmem:[%s0 + $0x118] sm:$0xff]
  %v57 = vld [vmem:[%s0 + $0x120] sm:$0xff]
  %v58 = vld [vmem:[%s0 + $0x128] sm:$0xf]
  %v59 = vld [vmem:[%s0 + $0x12c] sm:$0xff]
  %v60 = vld [vmem:[%s0 + $0x134] sm:$0xff]
  %v61 = vld [vmem:[%s0 + $0x13c] sm:$0xf]
  %v62 = vld [vmem:[%s0 + $0x140] sm:$0xff]
  %v63 = vld [vmem:[%s0 + $0x148] sm:$0xff]
  %v64 = vld [vmem:[%s0 + $0x150] sm:$0xf]
  %v65 = vld [vmem:[%s0 + $0x154] sm:$0xff]
  %v66 = vld [vmem:[%s0 + $0x15c] sm:$0xff]
  %v67 = vld [vmem:[%s0 + $0x164] sm:$0xf]
  %v68 = vld [vmem:[%s0 + $0x168] sm:$0xff]
  %v69 = vld [vmem:[%s0 + $0x170] sm:$0xff]
  %v70 = vld [vmem:[%s0 + $0x178] sm:$0xf]
  %v71 = vld [vmem:[%s0 + $0x17c] sm:$0xff]
  %v72 = vld [vmem:[%s0 + $0x184] sm:$0xff]
  %v73 = vld [vmem:[%s0 + $0x18c] sm:$0xf]
  %v74 = vld [vmem:[%s0 + $0x190] sm:$0xff]
  %v75 = vld [vmem:[%s0 + $0x198] sm:$0xff]
  %v76 = vld [vmem:[%s0 + $0x1a0] sm:$0xf]
  %v77 = vld [vmem:[%s0 + $0x1a4] sm:$0xff]
  %v78 = vld [vmem:[%s0 + $0x1ac] sm:$0xff]
  %v79 = vld [vmem:[%s0 + $0x1b4] sm:$0xf]
  %v80 = vld [vmem:[%s1] sm:$0xf]
  %v81 = vld [vmem:[%s1 + $0x4] sm:$0xf]
  %v82 = vld [vmem:[%s1 + $0x8] sm:$0xf]
  %v83 = vld [vmem:[%s1 + $0xc] sm:$0xf]
  %v84 = vld [vmem:[%s1 + $0x10] sm:$0xf]
  %v85 = vld [vmem:[%s1 + $0x14] sm:$0xf]
  %v86 = vld [vmem:[%s1 + $0x18] sm:$0xf]
  %v87 = vld [vmem:[%s1 + $0x1c] sm:$0xf]
  %v88 = vld [vmem:[%s1 + $0x20] sm:$0xf]
  %v89 = vld [vmem:[%s1 + $0x24] sm:$0xf]
  %v90 = vld [vmem:[%s1 + $0x28] sm:$0xf]
  %v91 = vld [vmem:[%s1 + $0x2c] sm:$0xf]
  %v92 = vld [vmem:[%s1 + $0x30] sm:$0xf]
  %v93 = vld [vmem:[%s1 + $0x34] sm:$0xf]
  %v94 = vld [vmem:[%s1 + $0x38] sm:$0xf]
  %v95 = vld [vmem:[%s1 + $0x3c] sm:$0xf]
  %v96 = vld [vmem:[%s1 + $0x40] sm:$0xf]
  %v97 = vld [vmem:[%s1 + $0x44] sm:$0xf]
  %v98 = vld [vmem:[%s1 + $0x48] sm:$0xf]
  %v99 = vld [vmem:[%s1 + $0x4c] sm:$0xf]
  %v100 = vld [vmem:[%s1 + $0x50] sm:$0xf]
  %v101 = vld [vmem:[%s1 + $0x54] sm:$0xf]
  %v102 = vld [vmem:[%s1 + $0x58] sm:$0xf]
  %v103 = vld [vmem:[%s1 + $0x5c] sm:$0xf]
  %v104 = vld [vmem:[%s1 + $0x60] sm:$0xf]
  %v105 = vld [vmem:[%s1 + $0x64] sm:$0xf]
  %v106 = vld [vmem:[%s1 + $0x68] sm:$0xf]
  %v107 = vld [vmem:[%s1 + $0x6c] sm:$0xf]
  %v108 = vld [vmem:[%s1 + $0x70] sm:$0xf]
  %v109 = vld [vmem:[%s1 + $0x74] sm:$0xf]
  %v110 = vld [vmem:[%s1 + $0x78] sm:$0xf]
  %v111 = vld [vmem:[%s1 + $0x7c] sm:$0xf]
  %v112 = vld [vmem:[%s1 + $0x80] sm:$0xf]
  %v113 = vld [vmem:[%s1 + $0x84] sm:$0xf]
  %v114 = vld [vmem:[%s1 + $0x88] sm:$0xf]
  %v115 = vld [vmem:[%s1 + $0x8c] sm:$0xf]
  %v116 = vld [vmem:[%s1 + $0x90] sm:$0xf]
  %v117 = vld [vmem:[%s1 + $0x94] sm:$0xf]
  %v118 = vld [vmem:[%s1 + $0x98] sm:$0xf]
  %v119 = vld [vmem:[%s1 + $0x9c] sm:$0xf]
  %v120 = vld [vmem:[%s1 + $0xa0] sm:$0xf]
  %v121 = vld [vmem:[%s1 + $0xa4] sm:$0xf]
  %v122 = vld [vmem:[%s1 + $0xa8] sm:$0xf]
  %v123 = vld [vmem:[%s1 + $0xac] sm:$0xf]
  %v124 = vld [vmem:[%s1 + $0xb0] sm:$0xf]
  %v125 = vld [vmem:[%s1 + $0xb4] sm:$0xf]
  %v126 = vld [vmem:[%s1 + $0xb8] sm:$0xf]
  %v127 = vld [vmem:[%s1 + $0xbc] sm:$0xf]
  %v128 = vld [vmem:[%s1 + $0xc0] sm:$0xf]
  %v129 = vld [vmem:[%s1 + $0xc4] sm:$0xf]
  %v130 = vld [vmem:[%s1 + $0xc8] sm:$0xf]
  %v131 = vld [vmem:[%s1 + $0xcc] sm:$0xf]
  %v132 = vld [vmem:[%s1 + $0xd0] sm:$0xf]
  %v133 = vld [vmem:[%s1 + $0xd4] sm:$0xf]
  %v134 = vld [vmem:[%s1 + $0xd8] sm:$0xf]
  %v135 = vld [vmem:[%s1 + $0xdc] sm:$0xf]
  %v136 = vld [vmem:[%s1 + $0xe0] sm:$0xf]
  %v137 = vld [vmem:[%s1 + $0xe4] sm:$0xf]
  %v138 = vld [vmem:[%s1 + $0xe8] sm:$0xf]
  %v139 = vld [vmem:[%s1 + $0xec] sm:$0xf]
  %v140 = vld [vmem:[%s1 + $0xf0] sm:$0xf]
  %v141 = vld [vmem:[%s1 + $0xf4] sm:$0xf]
  %v142 = vld [vmem:[%s1 + $0xf8] sm:$0xf]
  %v143 = vld [vmem:[%s1 + $0xfc] sm:$0xf]
  %v144 = vld [vmem:[%s1 + $0x100] sm:$0xf]
  %v145 = vld [vmem:[%s1 + $0x104] sm:$0xf]
  %v146 = vld [vmem:[%s1 + $0x108] sm:$0xf]
  %v147 = vld [vmem:[%s1 + $0x10c] sm:$0xf]
  %v148 = vld [vmem:[%s1 + $0x110] sm:$0xf]
  %v149 = vld [vmem:[%s1 + $0x114] sm:$0xf]
  %v150 = vld [vmem:[%s1 + $0x118] sm:$0xf]
  %v151 = vld [vmem:[%s1 + $0x11c] sm:$0xf]
  %v152 = vld [vmem:[%s1 + $0x120] sm:$0xf]
  %v153 = vld [vmem:[%s1 + $0x124] sm:$0xf]
  %v154 = vld [vmem:[%s1 + $0x128] sm:$0xf]
  %v155 = vld [vmem:[%s1 + $0x12c] sm:$0xf]
  %v156 = vld [vmem:[%s1 + $0x130] sm:$0xf]
  %v157 = vld [vmem:[%s1 + $0x134] sm:$0xf]
  %v158 = vld [vmem:[%s1 + $0x138] sm:$0xf]
  %v159 = vld [vmem:[%s1 + $0x13c] sm:$0xf]
  %v160 = vld [vmem:[%s2] sm:$0x1]
  %v162 = vperm.slane %v160, 0
  %v230 = vunpack.c.l.b16 %v14
  %v231 = vunpack.c.h.b16 %v14
  %v232 = vunpack.c.l.b16 %v15
  %v233 = vunpack.c.h.b16 %v15
  %v234 = vunpack.c.l.b16 %v16
  %v235 = vunpack.c.l.b16 %v17
  %v236 = vunpack.c.h.b16 %v17
  %v237 = vunpack.c.l.b16 %v18
  %v238 = vunpack.c.h.b16 %v18
  %v239 = vunpack.c.l.b16 %v19
  %v240 = vunpack.c.l.b16 %v20
  %v241 = vunpack.c.h.b16 %v20
  %v242 = vunpack.c.l.b16 %v21
  %v243 = vunpack.c.h.b16 %v21
  %v244 = vunpack.c.l.b16 %v22
  %v245 = vunpack.c.l.b16 %v23
  %v246 = vunpack.c.h.b16 %v23
  %v247 = vunpack.c.l.b16 %v24
  %v248 = vunpack.c.h.b16 %v24
  %v249 = vunpack.c.l.b16 %v25
  %v250 = vunpack.c.l.b16 %v26
  %v251 = vunpack.c.h.b16 %v26
  %v252 = vunpack.c.l.b16 %v27
  %v253 = vunpack.c.h.b16 %v27
  %v254 = vunpack.c.l.b16 %v28
  %v255 = vunpack.c.l.b16 %v29
  %v256 = vunpack.c.h.b16 %v29
  %v257 = vunpack.c.l.b16 %v30
  %v258 = vunpack.c.h.b16 %v30
  %v259 = vunpack.c.l.b16 %v31
  %v260 = vunpack.c.l.b16 %v32
  %v261 = vunpack.c.h.b16 %v32
  %v262 = vunpack.c.l.b16 %v33
  %v263 = vunpack.c.h.b16 %v33
  %v264 = vunpack.c.l.b16 %v34
  %v265 = vunpack.c.l.b16 %v35
  %v266 = vunpack.c.h.b16 %v35
  %v267 = vunpack.c.l.b16 %v36
  %v268 = vunpack.c.h.b16 %v36
  %v269 = vunpack.c.l.b16 %v37
  %v270 = vunpack.c.l.b16 %v38
  %v271 = vunpack.c.h.b16 %v38
  %v272 = vunpack.c.l.b16 %v39
  %v273 = vunpack.c.h.b16 %v39
  %v274 = vunpack.c.l.b16 %v40
  %v275 = vunpack.c.l.b16 %v41
  %v276 = vunpack.c.h.b16 %v41
  %v277 = vunpack.c.l.b16 %v42
  %v278 = vunpack.c.h.b16 %v42
  %v279 = vunpack.c.l.b16 %v43
  %v280 = vunpack.c.l.b16 %v44
  %v281 = vunpack.c.h.b16 %v44
  %v282 = vunpack.c.l.b16 %v45
  %v283 = vunpack.c.h.b16 %v45
  %v284 = vunpack.c.l.b16 %v46
  %v285 = vunpack.c.l.b16 %v47
  %v286 = vunpack.c.h.b16 %v47
  %v287 = vunpack.c.l.b16 %v48
  %v288 = vunpack.c.h.b16 %v48
  %v289 = vunpack.c.l.b16 %v49
  %v290 = vunpack.c.l.b16 %v50
  %v291 = vunpack.c.h.b16 %v50
  %v292 = vunpack.c.l.b16 %v51
  %v293 = vunpack.c.h.b16 %v51
  %v294 = vunpack.c.l.b16 %v52
  %v295 = vunpack.c.l.b16 %v53
  %v296 = vunpack.c.h.b16 %v53
  %v297 = vunpack.c.l.b16 %v54
  %v298 = vunpack.c.h.b16 %v54
  %v299 = vunpack.c.l.b16 %v55
  %v300 = vunpack.c.l.b16 %v56
  %v301 = vunpack.c.h.b16 %v56
  %v302 = vunpack.c.l.b16 %v57
  %v303 = vunpack.c.h.b16 %v57
  %v304 = vunpack.c.l.b16 %v58
  %v305 = vunpack.c.l.b16 %v59
  %v306 = vunpack.c.h.b16 %v59
  %v307 = vunpack.c.l.b16 %v60
  %v308 = vunpack.c.h.b16 %v60
  %v309 = vunpack.c.l.b16 %v61
  %v310 = vunpack.c.l.b16 %v62
  %v311 = vunpack.c.h.b16 %v62
  %v312 = vunpack.c.l.b16 %v63
  %v313 = vunpack.c.h.b16 %v63
  %v314 = vunpack.c.l.b16 %v64
  %v315 = vunpack.c.l.b16 %v65
  %v316 = vunpack.c.h.b16 %v65
  %v317 = vunpack.c.l.b16 %v66
  %v318 = vunpack.c.h.b16 %v66
  %v319 = vunpack.c.l.b16 %v67
  %v320 = vunpack.c.l.b16 %v68
  %v321 = vunpack.c.h.b16 %v68
  %v322 = vunpack.c.l.b16 %v69
  %v323 = vunpack.c.h.b16 %v69
  %v324 = vunpack.c.l.b16 %v70
  %v325 = vunpack.c.l.b16 %v71
  %v326 = vunpack.c.h.b16 %v71
  %v327 = vunpack.c.l.b16 %v72
  %v328 = vunpack.c.h.b16 %v72
  %v329 = vunpack.c.l.b16 %v73
  %v330 = vunpack.c.l.b16 %v74
  %v331 = vunpack.c.h.b16 %v74
  %v332 = vunpack.c.l.b16 %v75
  %v333 = vunpack.c.h.b16 %v75
  %v334 = vunpack.c.l.b16 %v76
  %v335 = vunpack.c.l.b16 %v77
  %v336 = vunpack.c.h.b16 %v77
  %v337 = vunpack.c.l.b16 %v78
  %v338 = vunpack.c.h.b16 %v78
  %v339 = vunpack.c.l.b16 %v79
  %v340 = vpack.c.b16 %v235, %v230
  %v341 = vpack.c.b16 %v236, %v231
  %v342 = vpack.c.b16 %v237, %v232
  %v343 = vpack.c.b16 %v238, %v233
  %v344 = vpack.c.b16 %v239, %v234
  %v345 = vpack.c.b16 %v245, %v240
  %v346 = vpack.c.b16 %v246, %v241
  %v347 = vpack.c.b16 %v247, %v242
  %v348 = vpack.c.b16 %v248, %v243
  %v349 = vpack.c.b16 %v249, %v244
  %v350 = vpack.c.b16 %v255, %v250
  %v351 = vpack.c.b16 %v256, %v251
  %v352 = vpack.c.b16 %v257, %v252
  %v353 = vpack.c.b16 %v258, %v253
  %v354 = vpack.c.b16 %v259, %v254
  %v355 = vpack.c.b16 %v265, %v260
  %v356 = vpack.c.b16 %v266, %v261
  %v357 = vpack.c.b16 %v267, %v262
  %v358 = vpack.c.b16 %v268, %v263
  %v359 = vpack.c.b16 %v269, %v264
  %v360 = vpack.c.b16 %v275, %v270
  %v361 = vpack.c.b16 %v276, %v271
  %v362 = vpack.c.b16 %v277, %v272
  %v363 = vpack.c.b16 %v278, %v273
  %v364 = vpack.c.b16 %v279, %v274
  %v365 = vpack.c.b16 %v285, %v280
  %v366 = vpack.c.b16 %v286, %v281
  %v367 = vpack.c.b16 %v287, %v282
  %v368 = vpack.c.b16 %v288, %v283
  %v369 = vpack.c.b16 %v289, %v284
  %v370 = vpack.c.b16 %v295, %v290
  %v371 = vpack.c.b16 %v296, %v291
  %v372 = vpack.c.b16 %v297, %v292
  %v373 = vpack.c.b16 %v298, %v293
  %v374 = vpack.c.b16 %v299, %v294
  %v375 = vpack.c.b16 %v305, %v300
  %v376 = vpack.c.b16 %v306, %v301
  %v377 = vpack.c.b16 %v307, %v302
  %v378 = vpack.c.b16 %v308, %v303
  %v379 = vpack.c.b16 %v309, %v304
  %v380 = vpack.c.b16 %v315, %v310
  %v381 = vpack.c.b16 %v316, %v311
  %v382 = vpack.c.b16 %v317, %v312
  %v383 = vpack.c.b16 %v318, %v313
  %v384 = vpack.c.b16 %v319, %v314
  %v385 = vpack.c.b16 %v325, %v320
  %v386 = vpack.c.b16 %v326, %v321
  %v387 = vpack.c.b16 %v327, %v322
  %v388 = vpack.c.b16 %v328, %v323
  %v389 = vpack.c.b16 %v329, %v324
  %v390 = vpack.c.b16 %v335, %v330
  %v391 = vpack.c.b16 %v336, %v331
  %v392 = vpack.c.b16 %v337, %v332
  %v393 = vpack.c.b16 %v338, %v333
  %v394 = vpack.c.b16 %v339, %v334
  %v530 = vunpack.c.l.b16 %v80
  %v531 = vunpack.c.l.b16 %v81
  %v532 = vunpack.c.l.b16 %v82
  %v533 = vunpack.c.l.b16 %v83
  %v534 = vunpack.c.l.b16 %v84
  %v535 = vunpack.c.l.b16 %v85
  %v536 = vunpack.c.l.b16 %v86
  %v537 = vunpack.c.l.b16 %v87
  %v538 = vunpack.c.l.b16 %v88
  %v539 = vunpack.c.l.b16 %v89
  %v540 = vunpack.c.l.b16 %v90
  %v541 = vunpack.c.l.b16 %v91
  %v542 = vunpack.c.l.b16 %v92
  %v543 = vunpack.c.l.b16 %v93
  %v544 = vunpack.c.l.b16 %v94
  %v545 = vunpack.c.l.b16 %v95
  %v546 = vunpack.c.l.b16 %v96
  %v547 = vunpack.c.l.b16 %v97
  %v548 = vunpack.c.l.b16 %v98
  %v549 = vunpack.c.l.b16 %v99
  %v550 = vunpack.c.l.b16 %v100
  %v551 = vunpack.c.l.b16 %v101
  %v552 = vunpack.c.l.b16 %v102
  %v553 = vunpack.c.l.b16 %v103
  %v554 = vunpack.c.l.b16 %v104
  %v555 = vunpack.c.l.b16 %v105
  %v556 = vunpack.c.l.b16 %v106
  %v557 = vunpack.c.l.b16 %v107
  %v558 = vunpack.c.l.b16 %v108
  %v559 = vunpack.c.l.b16 %v109
  %v560 = vunpack.c.l.b16 %v110
  %v561 = vunpack.c.l.b16 %v111
  %v562 = vunpack.c.l.b16 %v112
  %v563 = vunpack.c.l.b16 %v113
  %v564 = vunpack.c.l.b16 %v114
  %v565 = vunpack.c.l.b16 %v115
  %v566 = vunpack.c.l.b16 %v116
  %v567 = vunpack.c.l.b16 %v117
  %v568 = vunpack.c.l.b16 %v118
  %v569 = vunpack.c.l.b16 %v119
  %v570 = vunpack.c.l.b16 %v120
  %v571 = vunpack.c.l.b16 %v121
  %v572 = vunpack.c.l.b16 %v122
  %v573 = vunpack.c.l.b16 %v123
  %v574 = vunpack.c.l.b16 %v124
  %v575 = vunpack.c.l.b16 %v125
  %v576 = vunpack.c.l.b16 %v126
  %v577 = vunpack.c.l.b16 %v127
  %v578 = vunpack.c.l.b16 %v128
  %v579 = vunpack.c.l.b16 %v129
  %v580 = vunpack.c.l.b16 %v130
  %v581 = vunpack.c.l.b16 %v131
  %v582 = vunpack.c.l.b16 %v132
  %v583 = vunpack.c.l.b16 %v133
  %v584 = vunpack.c.l.b16 %v134
  %v585 = vunpack.c.l.b16 %v135
  %v586 = vunpack.c.l.b16 %v136
  %v587 = vunpack.c.l.b16 %v137
  %v588 = vunpack.c.l.b16 %v138
  %v589 = vunpack.c.l.b16 %v139
  %v590 = vunpack.c.l.b16 %v140
  %v591 = vunpack.c.l.b16 %v141
  %v592 = vunpack.c.l.b16 %v142
  %v593 = vunpack.c.l.b16 %v143
  %v594 = vunpack.c.l.b16 %v144
  %v595 = vunpack.c.l.b16 %v145
  %v596 = vunpack.c.l.b16 %v146
  %v597 = vunpack.c.l.b16 %v147
  %v598 = vunpack.c.l.b16 %v148
  %v599 = vunpack.c.l.b16 %v149
  %v600 = vunpack.c.l.b16 %v150
  %v601 = vunpack.c.l.b16 %v151
  %v602 = vunpack.c.l.b16 %v152
  %v603 = vunpack.c.l.b16 %v153
  %v604 = vunpack.c.l.b16 %v154
  %v605 = vunpack.c.l.b16 %v155
  %v606 = vunpack.c.l.b16 %v156
  %v607 = vunpack.c.l.b16 %v157
  %v608 = vunpack.c.l.b16 %v158
  %v609 = vunpack.c.l.b16 %v159
  %v610 = vpack.c.b16 %v531, %v530
  %v611 = vpack.c.b16 %v533, %v532
  %v612 = vpack.c.b16 %v535, %v534
  %v613 = vpack.c.b16 %v537, %v536
  %v614 = vpack.c.b16 %v539, %v538
  %v615 = vpack.c.b16 %v541, %v540
  %v616 = vpack.c.b16 %v543, %v542
  %v617 = vpack.c.b16 %v545, %v544
  %v618 = vpack.c.b16 %v547, %v546
  %v619 = vpack.c.b16 %v549, %v548
  %v620 = vpack.c.b16 %v551, %v550
  %v621 = vpack.c.b16 %v553, %v552
  %v622 = vpack.c.b16 %v555, %v554
  %v623 = vpack.c.b16 %v557, %v556
  %v624 = vpack.c.b16 %v559, %v558
  %v625 = vpack.c.b16 %v561, %v560
  %v626 = vpack.c.b16 %v563, %v562
  %v627 = vpack.c.b16 %v565, %v564
  %v628 = vpack.c.b16 %v567, %v566
  %v629 = vpack.c.b16 %v569, %v568
  %v630 = vpack.c.b16 %v571, %v570
  %v631 = vpack.c.b16 %v573, %v572
  %v632 = vpack.c.b16 %v575, %v574
  %v633 = vpack.c.b16 %v577, %v576
  %v634 = vpack.c.b16 %v579, %v578
  %v635 = vpack.c.b16 %v581, %v580
  %v636 = vpack.c.b16 %v583, %v582
  %v637 = vpack.c.b16 %v585, %v584
  %v638 = vpack.c.b16 %v587, %v586
  %v639 = vpack.c.b16 %v589, %v588
  %v640 = vpack.c.b16 %v591, %v590
  %v641 = vpack.c.b16 %v593, %v592
  %v642 = vpack.c.b16 %v595, %v594
  %v643 = vpack.c.b16 %v597, %v596
  %v644 = vpack.c.b16 %v599, %v598
  %v645 = vpack.c.b16 %v601, %v600
  %v646 = vpack.c.b16 %v603, %v602
  %v647 = vpack.c.b16 %v605, %v604
  %v648 = vpack.c.b16 %v607, %v606
  %v649 = vpack.c.b16 %v609, %v608
  %690 = vmatpush.bf16.msra.mxu0 %v617
  %691 = vmatpush.bf16.msra.mxu0 %v616
  %692 = vmatpush.bf16.msra.mxu0 %v615
  %693 = vmatpush.bf16.msra.mxu0 %v614
  %694 = vmatpush.bf16.msra.mxu0 %v613
  %695 = vmatpush.bf16.msra.mxu0 %v612
  %696 = vmatpush.bf16.msra.mxu0 %v611
  %697 = vmatpush.bf16.msra.mxu0 %v610
  %698 = vmatmul.bf16.gmra.mxu0 %v340
  %v699 = vpop.f32.mrf.mxu0
  %v700 = vadd.f32 %v162, %v699
  %v701 = vpop.f32.mrf.mxu0
  %v702 = vadd.f32 %v162, %v701
  %703 = vmatmul.bf16.gmra.mxu0 %v345
  %v704 = vpop.f32.mrf.mxu0
  %v705 = vadd.f32 %v162, %v704
  %v706 = vpop.f32.mrf.mxu0
  %v707 = vadd.f32 %v162, %v706
  %708 = vmatmul.bf16.gmra.mxu0 %v350
  %v709 = vpop.f32.mrf.mxu0
  %v710 = vadd.f32 %v162, %v709
  %v711 = vpop.f32.mrf.mxu0
  %v712 = vadd.f32 %v162, %v711
  %713 = vmatmul.bf16.gmra.mxu0 %v355
  %v714 = vpop.f32.mrf.mxu0
  %v715 = vadd.f32 %v162, %v714
  %v716 = vpop.f32.mrf.mxu0
  %v717 = vadd.f32 %v162, %v716
  %718 = vmatmul.bf16.gmra.mxu0 %v360
  %v719 = vpop.f32.mrf.mxu0
  %v720 = vadd.f32 %v162, %v719
  %v721 = vpop.f32.mrf.mxu0
  %v722 = vadd.f32 %v162, %v721
  %723 = vmatmul.bf16.gmra.mxu0 %v365
  %v724 = vpop.f32.mrf.mxu0
  %v725 = vadd.f32 %v162, %v724
  %v726 = vpop.f32.mrf.mxu0
  %v727 = vadd.f32 %v162, %v726
  %728 = vmatmul.bf16.gmra.mxu0 %v370
  %v729 = vpop.f32.mrf.mxu0
  %v730 = vadd.f32 %v162, %v729
  %v731 = vpop.f32.mrf.mxu0
  %v732 = vadd.f32 %v162, %v731
  %733 = vmatmul.bf16.gmra.mxu0 %v375
  %v734 = vpop.f32.mrf.mxu0
  %v735 = vadd.f32 %v162, %v734
  %v736 = vpop.f32.mrf.mxu0
  %v737 = vadd.f32 %v162, %v736
  %738 = vmatmul.bf16.gmra.mxu0 %v380
  %v739 = vpop.f32.mrf.mxu0
  %v740 = vadd.f32 %v162, %v739
  %v741 = vpop.f32.mrf.mxu0
  %v742 = vadd.f32 %v162, %v741
  %743 = vmatmul.bf16.gmra.mxu0 %v385
  %v744 = vpop.f32.mrf.mxu0
  %v745 = vadd.f32 %v162, %v744
  %v746 = vpop.f32.mrf.mxu0
  %v747 = vadd.f32 %v162, %v746
  %748 = vmatmul.bf16.gmra.mxu0 %v390
  %v749 = vpop.f32.mrf.mxu0
  %v750 = vadd.f32 %v162, %v749
  %v751 = vpop.f32.mrf.mxu0
  %v752 = vadd.f32 %v162, %v751
  %753 = vdwg.mxu0
  %754 = vmatpush.bf16.msra.mxu0 %v625
  %755 = vmatpush.bf16.msra.mxu0 %v624
  %756 = vmatpush.bf16.msra.mxu0 %v623
  %757 = vmatpush.bf16.msra.mxu0 %v622
  %758 = vmatpush.bf16.msra.mxu0 %v621
  %759 = vmatpush.bf16.msra.mxu0 %v620
  %760 = vmatpush.bf16.msra.mxu0 %v619
  %761 = vmatpush.bf16.msra.mxu0 %v618
  %762 = vmatmul.bf16.gmra.mxu0 %v341
  %v763 = vpop.f32.mrf.mxu0
  %v764 = vadd.f32 %v700, %v763
  %v765 = vpop.f32.mrf.mxu0
  %v766 = vadd.f32 %v702, %v765
  %767 = vmatmul.bf16.gmra.mxu0 %v346
  %v768 = vpop.f32.mrf.mxu0
  %v769 = vadd.f32 %v705, %v768
  %v770 = vpop.f32.mrf.mxu0
  %v771 = vadd.f32 %v707, %v770
  %772 = vmatmul.bf16.gmra.mxu0 %v351
  %v773 = vpop.f32.mrf.mxu0
  %v774 = vadd.f32 %v710, %v773
  %v775 = vpop.f32.mrf.mxu0
  %v776 = vadd.f32 %v712, %v775
  %777 = vmatmul.bf16.gmra.mxu0 %v356
  %v778 = vpop.f32.mrf.mxu0
  %v779 = vadd.f32 %v715, %v778
  %v780 = vpop.f32.mrf.mxu0
  %v781 = vadd.f32 %v717, %v780
  %782 = vmatmul.bf16.gmra.mxu0 %v361
  %v783 = vpop.f32.mrf.mxu0
  %v784 = vadd.f32 %v720, %v783
  %v785 = vpop.f32.mrf.mxu0
  %v786 = vadd.f32 %v722, %v785
  %787 = vmatmul.bf16.gmra.mxu0 %v366
  %v788 = vpop.f32.mrf.mxu0
  %v789 = vadd.f32 %v725, %v788
  %v790 = vpop.f32.mrf.mxu0
  %v791 = vadd.f32 %v727, %v790
  %792 = vmatmul.bf16.gmra.mxu0 %v371
  %v793 = vpop.f32.mrf.mxu0
  %v794 = vadd.f32 %v730, %v793
  %v795 = vpop.f32.mrf.mxu0
  %v796 = vadd.f32 %v732, %v795
  %797 = vmatmul.bf16.gmra.mxu0 %v376
  %v798 = vpop.f32.mrf.mxu0
  %v799 = vadd.f32 %v735, %v798
  %v800 = vpop.f32.mrf.mxu0
  %v801 = vadd.f32 %v737, %v800
  %802 = vmatmul.bf16.gmra.mxu0 %v381
  %v803 = vpop.f32.mrf.mxu0
  %v804 = vadd.f32 %v740, %v803
  %v805 = vpop.f32.mrf.mxu0
  %v806 = vadd.f32 %v742, %v805
  %807 = vmatmul.bf16.gmra.mxu0 %v386
  %v808 = vpop.f32.mrf.mxu0
  %v809 = vadd.f32 %v745, %v808
  %v810 = vpop.f32.mrf.mxu0
  %v811 = vadd.f32 %v747, %v810
  %812 = vmatmul.bf16.gmra.mxu0 %v391
  %v813 = vpop.f32.mrf.mxu0
  %v814 = vadd.f32 %v750, %v813
  %v815 = vpop.f32.mrf.mxu0
  %v816 = vadd.f32 %v752, %v815
  %817 = vdwg.mxu0
  %818 = vmatpush.bf16.msra.mxu0 %v633
  %819 = vmatpush.bf16.msra.mxu0 %v632
  %820 = vmatpush.bf16.msra.mxu0 %v631
  %821 = vmatpush.bf16.msra.mxu0 %v630
  %822 = vmatpush.bf16.msra.mxu0 %v629
  %823 = vmatpush.bf16.msra.mxu0 %v628
  %824 = vmatpush.bf16.msra.mxu0 %v627
  %825 = vmatpush.bf16.msra.mxu0 %v626
  %826 = vmatmul.bf16.gmra.mxu0 %v342
  %v827 = vpop.f32.mrf.mxu0
  %v828 = vadd.f32 %v764, %v827
  %v829 = vpop.f32.mrf.mxu0
  %v830 = vadd.f32 %v766, %v829
  %831 = vmatmul.bf16.gmra.mxu0 %v347
  %v832 = vpop.f32.mrf.mxu0
  %v833 = vadd.f32 %v769, %v832
  %v834 = vpop.f32.mrf.mxu0
  %v835 = vadd.f32 %v771, %v834
  %836 = vmatmul.bf16.gmra.mxu0 %v352
  %v837 = vpop.f32.mrf.mxu0
  %v838 = vadd.f32 %v774, %v837
  %v839 = vpop.f32.mrf.mxu0
  %v840 = vadd.f32 %v776, %v839
  %841 = vmatmul.bf16.gmra.mxu0 %v357
  %v842 = vpop.f32.mrf.mxu0
  %v843 = vadd.f32 %v779, %v842
  %v844 = vpop.f32.mrf.mxu0
  %v845 = vadd.f32 %v781, %v844
  %846 = vmatmul.bf16.gmra.mxu0 %v362
  %v847 = vpop.f32.mrf.mxu0
  %v848 = vadd.f32 %v784, %v847
  %v849 = vpop.f32.mrf.mxu0
  %v850 = vadd.f32 %v786, %v849
  %851 = vmatmul.bf16.gmra.mxu0 %v367
  %v852 = vpop.f32.mrf.mxu0
  %v853 = vadd.f32 %v789, %v852
  %v854 = vpop.f32.mrf.mxu0
  %v855 = vadd.f32 %v791, %v854
  %856 = vmatmul.bf16.gmra.mxu0 %v372
  %v857 = vpop.f32.mrf.mxu0
  %v858 = vadd.f32 %v794, %v857
  %v859 = vpop.f32.mrf.mxu0
  %v860 = vadd.f32 %v796, %v859
  %861 = vmatmul.bf16.gmra.mxu0 %v377
  %v862 = vpop.f32.mrf.mxu0
  %v863 = vadd.f32 %v799, %v862
  %v864 = vpop.f32.mrf.mxu0
  %v865 = vadd.f32 %v801, %v864
  %866 = vmatmul.bf16.gmra.mxu0 %v382
  %v867 = vpop.f32.mrf.mxu0
  %v868 = vadd.f32 %v804, %v867
  %v869 = vpop.f32.mrf.mxu0
  %v870 = vadd.f32 %v806, %v869
  %871 = vmatmul.bf16.gmra.mxu0 %v387
  %v872 = vpop.f32.mrf.mxu0
  %v873 = vadd.f32 %v809, %v872
  %v874 = vpop.f32.mrf.mxu0
  %v875 = vadd.f32 %v811, %v874
  %876 = vmatmul.bf16.gmra.mxu0 %v392
  %v877 = vpop.f32.mrf.mxu0
  %v878 = vadd.f32 %v814, %v877
  %v879 = vpop.f32.mrf.mxu0
  %v880 = vadd.f32 %v816, %v879
  %881 = vdwg.mxu0
  %882 = vmatpush.bf16.msra.mxu0 %v641
  %883 = vmatpush.bf16.msra.mxu0 %v640
  %884 = vmatpush.bf16.msra.mxu0 %v639
  %885 = vmatpush.bf16.msra.mxu0 %v638
  %886 = vmatpush.bf16.msra.mxu0 %v637
  %887 = vmatpush.bf16.msra.mxu0 %v636
  %888 = vmatpush.bf16.msra.mxu0 %v635
  %889 = vmatpush.bf16.msra.mxu0 %v634
  %890 = vmatmul.bf16.gmra.mxu0 %v343
  %v891 = vpop.f32.mrf.mxu0
  %v892 = vadd.f32 %v828, %v891
  %v893 = vpop.f32.mrf.mxu0
  %v894 = vadd.f32 %v830, %v893
  %895 = vmatmul.bf16.gmra.mxu0 %v348
  %v896 = vpop.f32.mrf.mxu0
  %v897 = vadd.f32 %v833, %v896
  %v898 = vpop.f32.mrf.mxu0
  %v899 = vadd.f32 %v835, %v898
  %900 = vmatmul.bf16.gmra.mxu0 %v353
  %v901 = vpop.f32.mrf.mxu0
  %v902 = vadd.f32 %v838, %v901
  %v903 = vpop.f32.mrf.mxu0
  %v904 = vadd.f32 %v840, %v903
  %905 = vmatmul.bf16.gmra.mxu0 %v358
  %v906 = vpop.f32.mrf.mxu0
  %v907 = vadd.f32 %v843, %v906
  %v908 = vpop.f32.mrf.mxu0
  %v909 = vadd.f32 %v845, %v908
  %910 = vmatmul.bf16.gmra.mxu0 %v363
  %v911 = vpop.f32.mrf.mxu0
  %v912 = vadd.f32 %v848, %v911
  %v913 = vpop.f32.mrf.mxu0
  %v914 = vadd.f32 %v850, %v913
  %915 = vmatmul.bf16.gmra.mxu0 %v368
  %v916 = vpop.f32.mrf.mxu0
  %v917 = vadd.f32 %v853, %v916
  %v918 = vpop.f32.mrf.mxu0
  %v919 = vadd.f32 %v855, %v918
  %920 = vmatmul.bf16.gmra.mxu0 %v373
  %v921 = vpop.f32.mrf.mxu0
  %v922 = vadd.f32 %v858, %v921
  %v923 = vpop.f32.mrf.mxu0
  %v924 = vadd.f32 %v860, %v923
  %925 = vmatmul.bf16.gmra.mxu0 %v378
  %v926 = vpop.f32.mrf.mxu0
  %v927 = vadd.f32 %v863, %v926
  %v928 = vpop.f32.mrf.mxu0
  %v929 = vadd.f32 %v865, %v928
  %930 = vmatmul.bf16.gmra.mxu0 %v383
  %v931 = vpop.f32.mrf.mxu0
  %v932 = vadd.f32 %v868, %v931
  %v933 = vpop.f32.mrf.mxu0
  %v934 = vadd.f32 %v870, %v933
  %935 = vmatmul.bf16.gmra.mxu0 %v388
  %v936 = vpop.f32.mrf.mxu0
  %v937 = vadd.f32 %v873, %v936
  %v938 = vpop.f32.mrf.mxu0
  %v939 = vadd.f32 %v875, %v938
  %940 = vmatmul.bf16.gmra.mxu0 %v393
  %v941 = vpop.f32.mrf.mxu0
  %v942 = vadd.f32 %v878, %v941
  %v943 = vpop.f32.mrf.mxu0
  %v944 = vadd.f32 %v880, %v943
  %945 = vdwg.mxu0
  %946 = vmatpush.bf16.msra.mxu0 %v649
  %947 = vmatpush.bf16.msra.mxu0 %v648
  %948 = vmatpush.bf16.msra.mxu0 %v647
  %949 = vmatpush.bf16.msra.mxu0 %v646
  %950 = vmatpush.bf16.msra.mxu0 %v645
  %951 = vmatpush.bf16.msra.mxu0 %v644
  %952 = vmatpush.bf16.msra.mxu0 %v643
  %953 = vmatpush.bf16.msra.mxu0 %v642
  %954 = vmatmul.bf16.gmra.mxu0 %v344
  %v955 = vpop.f32.mrf.mxu0
  %v956 = vadd.f32 %v892, %v955
  %v957 = vpop.f32.mrf.mxu0
  %v958 = vadd.f32 %v894, %v957
  %959 = vmatmul.bf16.gmra.mxu0 %v349
  %v960 = vpop.f32.mrf.mxu0
  %v961 = vadd.f32 %v897, %v960
  %v962 = vpop.f32.mrf.mxu0
  %v963 = vadd.f32 %v899, %v962
  %964 = vmatmul.bf16.gmra.mxu0 %v354
  %v965 = vpop.f32.mrf.mxu0
  %v966 = vadd.f32 %v902, %v965
  %v967 = vpop.f32.mrf.mxu0
  %v968 = vadd.f32 %v904, %v967
  %969 = vmatmul.bf16.gmra.mxu0 %v359
  %v970 = vpop.f32.mrf.mxu0
  %v971 = vadd.f32 %v907, %v970
  %v972 = vpop.f32.mrf.mxu0
  %v973 = vadd.f32 %v909, %v972
  %974 = vmatmul.bf16.gmra.mxu0 %v364
  %v975 = vpop.f32.mrf.mxu0
  %v976 = vadd.f32 %v912, %v975
  %v977 = vpop.f32.mrf.mxu0
  %v978 = vadd.f32 %v914, %v977
  %979 = vmatmul.bf16.gmra.mxu0 %v369
  %v980 = vpop.f32.mrf.mxu0
  %v981 = vadd.f32 %v917, %v980
  %v982 = vpop.f32.mrf.mxu0
  %v983 = vadd.f32 %v919, %v982
  %984 = vmatmul.bf16.gmra.mxu0 %v374
  %v985 = vpop.f32.mrf.mxu0
  %v986 = vadd.f32 %v922, %v985
  %v987 = vpop.f32.mrf.mxu0
  %v988 = vadd.f32 %v924, %v987
  %989 = vmatmul.bf16.gmra.mxu0 %v379
  %v990 = vpop.f32.mrf.mxu0
  %v991 = vadd.f32 %v927, %v990
  %v992 = vpop.f32.mrf.mxu0
  %v993 = vadd.f32 %v929, %v992
  %994 = vmatmul.bf16.gmra.mxu0 %v384
  %v995 = vpop.f32.mrf.mxu0
  %v996 = vadd.f32 %v932, %v995
  %v997 = vpop.f32.mrf.mxu0
  %v998 = vadd.f32 %v934, %v997
  %999 = vmatmul.bf16.gmra.mxu0 %v389
  %v1000 = vpop.f32.mrf.mxu0
  %v1001 = vadd.f32 %v937, %v1000
  %v1002 = vpop.f32.mrf.mxu0
  %v1003 = vadd.f32 %v939, %v1002
  %1004 = vmatmul.bf16.gmra.mxu0 %v394
  %v1005 = vpop.f32.mrf.mxu0
  %v1006 = vadd.f32 %v942, %v1005
  %v1007 = vpop.f32.mrf.mxu0
  %v1008 = vadd.f32 %v944, %v1007
  %1009 = vdwg.mxu0
  %v1010 = vmax.f32 %v956, 0.0
  %v1011 = vmax.f32 %v958, 0.0
  %v1012 = vmax.f32 %v961, 0.0
  %v1013 = vmax.f32 %v963, 0.0
  %v1014 = vmax.f32 %v966, 0.0
  %v1015 = vmax.f32 %v968, 0.0
  %v1016 = vmax.f32 %v971, 0.0
  %v1017 = vmax.f32 %v973, 0.0
  %v1018 = vmax.f32 %v976, 0.0
  %v1019 = vmax.f32 %v978, 0.0
  %v1020 = vmax.f32 %v981, 0.0
  %v1021 = vmax.f32 %v983, 0.0
  %v1022 = vmax.f32 %v986, 0.0
  %v1023 = vmax.f32 %v988, 0.0
  %v1024 = vmax.f32 %v991, 0.0
  %v1025 = vmax.f32 %v993, 0.0
  %v1026 = vmax.f32 %v996, 0.0
  %v1027 = vmax.f32 %v998, 0.0
  %v1028 = vmax.f32 %v1001, 0.0
  %v1029 = vmax.f32 %v1003, 0.0
  %v1030 = vmax.f32 %v1006, 0.0
  %v1031 = vmax.f32 %v1008, 0.0
  %v1032 = vpack.c.bf16 %v1010, %v1010
  %v1033 = vpack.c.bf16 %v1011, %v1011
  %v1034 = vpack.c.bf16 %v1012, %v1012
  %v1035 = vpack.c.bf16 %v1013, %v1013
  %v1036 = vpack.c.bf16 %v1014, %v1014
  %v1037 = vpack.c.bf16 %v1015, %v1015
  %v1038 = vpack.c.bf16 %v1016, %v1016
  %v1039 = vpack.c.bf16 %v1017, %v1017
  %v1040 = vpack.c.bf16 %v1018, %v1018
  %v1041 = vpack.c.bf16 %v1019, %v1019
  %v1042 = vpack.c.bf16 %v1020, %v1020
  %v1043 = vpack.c.bf16 %v1021, %v1021
  %v1044 = vpack.c.bf16 %v1022, %v1022
  %v1045 = vpack.c.bf16 %v1023, %v1023
  %v1046 = vpack.c.bf16 %v1024, %v1024
  %v1047 = vpack.c.bf16 %v1025, %v1025
  %v1048 = vpack.c.bf16 %v1026, %v1026
  %v1049 = vpack.c.bf16 %v1027, %v1027
  %v1050 = vpack.c.bf16 %v1028, %v1028
  %v1051 = vpack.c.bf16 %v1029, %v1029
  %v1052 = vpack.c.bf16 %v1030, %v1030
  %v1053 = vpack.c.bf16 %v1031, %v1031
  %1054 = vst [vmem:[%s3] sm:$0xf] %v1032
  %1055 = vst [vmem:[%s3 + $0x4] sm:$0xf] %v1033
  %1056 = vst [vmem:[%s3 + $0x8] sm:$0xf] %v1034
  %1057 = vst [vmem:[%s3 + $0xc] sm:$0xf] %v1035
  %1058 = vst [vmem:[%s3 + $0x10] sm:$0xf] %v1036
  %1059 = vst [vmem:[%s3 + $0x14] sm:$0xf] %v1037
  %1060 = vst [vmem:[%s3 + $0x18] sm:$0xf] %v1038
  %1061 = vst [vmem:[%s3 + $0x1c] sm:$0xf] %v1039
  %1062 = vst [vmem:[%s3 + $0x20] sm:$0xf] %v1040
  %1063 = vst [vmem:[%s3 + $0x24] sm:$0xf] %v1041
  %1064 = vst [vmem:[%s3 + $0x28] sm:$0xf] %v1042
  %1065 = vst [vmem:[%s3 + $0x2c] sm:$0xf] %v1043
  %1066 = vst [vmem:[%s3 + $0x30] sm:$0xf] %v1044
  %1067 = vst [vmem:[%s3 + $0x34] sm:$0xf] %v1045
  %1068 = vst [vmem:[%s3 + $0x38] sm:$0xf] %v1046
  %1069 = vst [vmem:[%s3 + $0x3c] sm:$0xf] %v1047
  %1070 = vst [vmem:[%s3 + $0x40] sm:$0xf] %v1048
  %1071 = vst [vmem:[%s3 + $0x44] sm:$0xf] %v1049
  %1072 = vst [vmem:[%s3 + $0x48] sm:$0xf] %v1050
  %1073 = vst [vmem:[%s3 + $0x4c] sm:$0xf] %v1051
  %1074 = vst [vmem:[%s3 + $0x50] sm:$0xf] %v1052
  %1075 = vst [vmem:[%s3 + $0x54] sm:$0xf] %v1053
  // Predicated region
  $region14: #{gaze_prediction_forward.9} parent=0 // pred_check
    _
  $region15: #{gaze_prediction_forward.9} parent=0 // pred_check_branch
    %1077 = sbr.rel (0) target = $region17
  $region16: #{gaze_prediction_forward.9} parent=0 // pred_region
    _
  $region17: #{gaze_prediction_forward.9} parent=0 // pred_fallthru
    _
  // Predicated region
  $region18: #{gaze_prediction_forward.9} parent=0 // pred_check
    _
  $region19: #{gaze_prediction_forward.9} parent=0 // pred_check_branch
    %1079 = sbr.rel (0) target = $region21
  $region20: #{gaze_prediction_forward.9} parent=0 // pred_region
    _
  $region21: #{gaze_prediction_forward.9} parent=0 // pred_fallthru
    _

// kernel: gaze_prediction_forward.10
$region0: #{gaze_prediction_forward.10}
  #allocation0 [shape = 'u32[]', space=smem, size = 0x4, offset = 0x4, fixed_abs, tag = 'smem constant byte address 0x4 - core index']
  #allocation1 [shape = 'u32[72,128]{1,0:T(1,128)}', space=vmem, size = 0x9000, scoped, tag = 'internal scratch']
  %s0 = inlined_call_operand.vmem [shape: bf16[208,256], index: 0, kind: input, shape index: {}]
  %s1 = inlined_call_operand.vmem [shape: bf16[256,128], index: 1, kind: input, shape index: {}]
  %s2 = inlined_call_operand.vmem [shape: f32[1,128], index: 2, kind: input, shape index: {}]
  %s3 = inlined_call_operand.vmem [shape: bf16[208,128], index: 3, kind: output, shape index: {}]
  %s4 = sld [smem:[#allocation0]]
  $region22: #{gaze_prediction_forward.10} parent=0
    _
  %s6 = ssub.s32 1, %s4
  %s7 = scalar_select 0, %s6, %s4
  // Predicated region
  $region2: #{gaze_prediction_forward.10} parent=0 // pred_check
    _
  $region3: #{gaze_prediction_forward.10} parent=0 // pred_check_branch
    %9 = sbr.rel (0) target = $region5
  $region4: #{gaze_prediction_forward.10} parent=0 // pred_region
    _
  $region5: #{gaze_prediction_forward.10} parent=0 // pred_fallthru
    _
  // Predicated region
  $region6: #{gaze_prediction_forward.10} parent=0 // pred_check
    _
  $region7: #{gaze_prediction_forward.10} parent=0 // pred_check_branch
    %11 = sbr.rel (0) target = $region9
  $region8: #{gaze_prediction_forward.10} parent=0 // pred_region
    _
  $region9: #{gaze_prediction_forward.10} parent=0 // pred_fallthru
    _
  // Predicated region
  $region10: #{gaze_prediction_forward.10} parent=0 // pred_check
    _
  $region11: #{gaze_prediction_forward.10} parent=0 // pred_check_branch
    %13 = sbr.rel (0) target = $region13
  $region12: #{gaze_prediction_forward.10} parent=0 // pred_region
    _
  $region13: #{gaze_prediction_forward.10} parent=0 // pred_fallthru
    _
  %v14 = vld [vmem:[%s0] sm:$0xff]
  %v15 = vld [vmem:[%s0 + $0x8] sm:$0xff]
  %v16 = vld [vmem:[%s0 + $0x10] sm:$0xff]
  %v17 = vld [vmem:[%s0 + $0x18] sm:$0xff]
  %v18 = vld [vmem:[%s0 + $0x20] sm:$0xff]
  %v19 = vld [vmem:[%s0 + $0x28] sm:$0xff]
  %v20 = vld [vmem:[%s0 + $0x30] sm:$0xff]
  %v21 = vld [vmem:[%s0 + $0x38] sm:$0xff]
  %v22 = vld [vmem:[%s0 + $0x40] sm:$0xff]
  %v23 = vld [vmem:[%s0 + $0x48] sm:$0xff]
  %v24 = vld [vmem:[%s0 + $0x50] sm:$0xff]
  %v25 = vld [vmem:[%s0 + $0x58] sm:$0xff]
  %v26 = vld [vmem:[%s0 + $0x60] sm:$0xff]
  %v27 = vld [vmem:[%s0 + $0x68] sm:$0xff]
  %v28 = vld [vmem:[%s0 + $0x70] sm:$0xff]
  %v29 = vld [vmem:[%s0 + $0x78] sm:$0xff]
  %v30 = vld [vmem:[%s0 + $0x80] sm:$0xff]
  %v31 = vld [vmem:[%s0 + $0x88] sm:$0xff]
  %v32 = vld [vmem:[%s0 + $0x90] sm:$0xff]
  %v33 = vld [vmem:[%s0 + $0x98] sm:$0xff]
  %v34 = vld [vmem:[%s0 + $0xa0] sm:$0xff]
  %v35 = vld [vmem:[%s0 + $0xa8] sm:$0xff]
  %v36 = vld [vmem:[%s0 + $0xb0] sm:$0xff]
  %v37 = vld [vmem:[%s0 + $0xb8] sm:$0xff]
  %v38 = vld [vmem:[%s0 + $0xc0] sm:$0xff]
  %v39 = vld [vmem:[%s0 + $0xc8] sm:$0xff]
  %v40 = vld [vmem:[%s1] sm:$0xf]
  %v41 = vld [vmem:[%s1 + $0x4] sm:$0xf]
  %v42 = vld [vmem:[%s1 + $0x8] sm:$0xf]
  %v43 = vld [vmem:[%s1 + $0xc] sm:$0xf]
  %v44 = vld [vmem:[%s1 + $0x10] sm:$0xf]
  %v45 = vld [vmem:[%s1 + $0x14] sm:$0xf]
  %v46 = vld [vmem:[%s1 + $0x18] sm:$0xf]
  %v47 = vld [vmem:[%s1 + $0x1c] sm:$0xf]
  %v48 = vld [vmem:[%s1 + $0x20] sm:$0xf]
  %v49 = vld [vmem:[%s1 + $0x24] sm:$0xf]
  %v50 = vld [vmem:[%s1 + $0x28] sm:$0xf]
  %v51 = vld [vmem:[%s1 + $0x2c] sm:$0xf]
  %v52 = vld [vmem:[%s1 + $0x30] sm:$0xf]
  %v53 = vld [vmem:[%s1 + $0x34] sm:$0xf]
  %v54 = vld [vmem:[%s1 + $0x38] sm:$0xf]
  %v55 = vld [vmem:[%s1 + $0x3c] sm:$0xf]
  %v56 = vld [vmem:[%s1 + $0x40] sm:$0xf]
  %v57 = vld [vmem:[%s1 + $0x44] sm:$0xf]
  %v58 = vld [vmem:[%s1 + $0x48] sm:$0xf]
  %v59 = vld [vmem:[%s1 + $0x4c] sm:$0xf]
  %v60 = vld [vmem:[%s1 + $0x50] sm:$0xf]
  %v61 = vld [vmem:[%s1 + $0x54] sm:$0xf]
  %v62 = vld [vmem:[%s1 + $0x58] sm:$0xf]
  %v63 = vld [vmem:[%s1 + $0x5c] sm:$0xf]
  %v64 = vld [vmem:[%s1 + $0x60] sm:$0xf]
  %v65 = vld [vmem:[%s1 + $0x64] sm:$0xf]
  %v66 = vld [vmem:[%s1 + $0x68] sm:$0xf]
  %v67 = vld [vmem:[%s1 + $0x6c] sm:$0xf]
  %v68 = vld [vmem:[%s1 + $0x70] sm:$0xf]
  %v69 = vld [vmem:[%s1 + $0x74] sm:$0xf]
  %v70 = vld [vmem:[%s1 + $0x78] sm:$0xf]
  %v71 = vld [vmem:[%s1 + $0x7c] sm:$0xf]
  %v72 = vld [vmem:[%s2] sm:$0x1]
  %v74 = vperm.slane %v72, 0
  %v102 = vunpack.c.l.b16 %v14
  %v103 = vunpack.c.h.b16 %v14
  %v104 = vunpack.c.l.b16 %v15
  %v105 = vunpack.c.h.b16 %v15
  %v106 = vunpack.c.l.b16 %v16
  %v107 = vunpack.c.h.b16 %v16
  %v108 = vunpack.c.l.b16 %v17
  %v109 = vunpack.c.h.b16 %v17
  %v110 = vunpack.c.l.b16 %v18
  %v111 = vunpack.c.h.b16 %v18
  %v112 = vunpack.c.l.b16 %v19
  %v113 = vunpack.c.h.b16 %v19
  %v114 = vunpack.c.l.b16 %v20
  %v115 = vunpack.c.h.b16 %v20
  %v116 = vunpack.c.l.b16 %v21
  %v117 = vunpack.c.h.b16 %v21
  %v118 = vunpack.c.l.b16 %v22
  %v119 = vunpack.c.h.b16 %v22
  %v120 = vunpack.c.l.b16 %v23
  %v121 = vunpack.c.h.b16 %v23
  %v122 = vunpack.c.l.b16 %v24
  %v123 = vunpack.c.h.b16 %v24
  %v124 = vunpack.c.l.b16 %v25
  %v125 = vunpack.c.h.b16 %v25
  %v126 = vunpack.c.l.b16 %v26
  %v127 = vunpack.c.h.b16 %v26
  %v128 = vunpack.c.l.b16 %v27
  %v129 = vunpack.c.h.b16 %v27
  %v130 = vunpack.c.l.b16 %v28
  %v131 = vunpack.c.h.b16 %v28
  %v132 = vunpack.c.l.b16 %v29
  %v133 = vunpack.c.h.b16 %v29
  %v134 = vunpack.c.l.b16 %v30
  %v135 = vunpack.c.h.b16 %v30
  %v136 = vunpack.c.l.b16 %v31
  %v137 = vunpack.c.h.b16 %v31
  %v138 = vunpack.c.l.b16 %v32
  %v139 = vunpack.c.h.b16 %v32
  %v140 = vunpack.c.l.b16 %v33
  %v141 = vunpack.c.h.b16 %v33
  %v142 = vunpack.c.l.b16 %v34
  %v143 = vunpack.c.h.b16 %v34
  %v144 = vunpack.c.l.b16 %v35
  %v145 = vunpack.c.h.b16 %v35
  %v146 = vunpack.c.l.b16 %v36
  %v147 = vunpack.c.h.b16 %v36
  %v148 = vunpack.c.l.b16 %v37
  %v149 = vunpack.c.h.b16 %v37
  %v150 = vunpack.c.l.b16 %v38
  %v151 = vunpack.c.h.b16 %v38
  %v152 = vunpack.c.l.b16 %v39
  %v153 = vunpack.c.h.b16 %v39
  %v154 = vpack.c.b16 %v104, %v102
  %v155 = vpack.c.b16 %v105, %v103
  %v156 = vpack.c.b16 %v108, %v106
  %v157 = vpack.c.b16 %v109, %v107
  %v158 = vpack.c.b16 %v112, %v110
  %v159 = vpack.c.b16 %v113, %v111
  %v160 = vpack.c.b16 %v116, %v114
  %v161 = vpack.c.b16 %v117, %v115
  %v162 = vpack.c.b16 %v120, %v118
  %v163 = vpack.c.b16 %v121, %v119
  %v164 = vpack.c.b16 %v124, %v122
  %v165 = vpack.c.b16 %v125, %v123
  %v166 = vpack.c.b16 %v128, %v126
  %v167 = vpack.c.b16 %v129, %v127
  %v168 = vpack.c.b16 %v132, %v130
  %v169 = vpack.c.b16 %v133, %v131
  %v170 = vpack.c.b16 %v136, %v134
  %v171 = vpack.c.b16 %v137, %v135
  %v172 = vpack.c.b16 %v140, %v138
  %v173 = vpack.c.b16 %v141, %v139
  %v174 = vpack.c.b16 %v144, %v142
  %v175 = vpack.c.b16 %v145, %v143
  %v176 = vpack.c.b16 %v148, %v146
  %v177 = vpack.c.b16 %v149, %v147
  %v178 = vpack.c.b16 %v152, %v150
  %v179 = vpack.c.b16 %v153, %v151
  %v238 = vunpack.c.l.b16 %v40
  %v239 = vunpack.c.l.b16 %v41
  %v240 = vunpack.c.l.b16 %v42
  %v241 = vunpack.c.l.b16 %v43
  %v242 = vunpack.c.l.b16 %v44
  %v243 = vunpack.c.l.b16 %v45
  %v244 = vunpack.c.l.b16 %v46
  %v245 = vunpack.c.l.b16 %v47
  %v246 = vunpack.c.l.b16 %v48
  %v247 = vunpack.c.l.b16 %v49
  %v248 = vunpack.c.l.b16 %v50
  %v249 = vunpack.c.l.b16 %v51
  %v250 = vunpack.c.l.b16 %v52
  %v251 = vunpack.c.l.b16 %v53
  %v252 = vunpack.c.l.b16 %v54
  %v253 = vunpack.c.l.b16 %v55
  %v254 = vunpack.c.l.b16 %v56
  %v255 = vunpack.c.l.b16 %v57
  %v256 = vunpack.c.l.b16 %v58
  %v257 = vunpack.c.l.b16 %v59
  %v258 = vunpack.c.l.b16 %v60
  %v259 = vunpack.c.l.b16 %v61
  %v260 = vunpack.c.l.b16 %v62
  %v261 = vunpack.c.l.b16 %v63
  %v262 = vunpack.c.l.b16 %v64
  %v263 = vunpack.c.l.b16 %v65
  %v264 = vunpack.c.l.b16 %v66
  %v265 = vunpack.c.l.b16 %v67
  %v266 = vunpack.c.l.b16 %v68
  %v267 = vunpack.c.l.b16 %v69
  %v268 = vunpack.c.l.b16 %v70
  %v269 = vunpack.c.l.b16 %v71
  %v270 = vpack.c.b16 %v239, %v238
  %v271 = vpack.c.b16 %v241, %v240
  %v272 = vpack.c.b16 %v243, %v242
  %v273 = vpack.c.b16 %v245, %v244
  %v274 = vpack.c.b16 %v247, %v246
  %v275 = vpack.c.b16 %v249, %v248
  %v276 = vpack.c.b16 %v251, %v250
  %v277 = vpack.c.b16 %v253, %v252
  %v278 = vpack.c.b16 %v255, %v254
  %v279 = vpack.c.b16 %v257, %v256
  %v280 = vpack.c.b16 %v259, %v258
  %v281 = vpack.c.b16 %v261, %v260
  %v282 = vpack.c.b16 %v263, %v262
  %v283 = vpack.c.b16 %v265, %v264
  %v284 = vpack.c.b16 %v267, %v266
  %v285 = vpack.c.b16 %v269, %v268
  %302 = vmatpush.bf16.msra.mxu0 %v277
  %303 = vmatpush.bf16.msra.mxu0 %v276
  %304 = vmatpush.bf16.msra.mxu0 %v275
  %305 = vmatpush.bf16.msra.mxu0 %v274
  %306 = vmatpush.bf16.msra.mxu0 %v273
  %307 = vmatpush.bf16.msra.mxu0 %v272
  %308 = vmatpush.bf16.msra.mxu0 %v271
  %309 = vmatpush.bf16.msra.mxu0 %v270
  %310 = vmatmul.bf16.gmra.mxu0 %v154
  %v311 = vpop.f32.mrf.mxu0
  %v312 = vadd.f32 %v74, %v311
  %v313 = vpop.f32.mrf.mxu0
  %v314 = vadd.f32 %v74, %v313
  %315 = vmatmul.bf16.gmra.mxu0 %v156
  %v316 = vpop.f32.mrf.mxu0
  %v317 = vadd.f32 %v74, %v316
  %v318 = vpop.f32.mrf.mxu0
  %v319 = vadd.f32 %v74, %v318
  %320 = vmatmul.bf16.gmra.mxu0 %v158
  %v321 = vpop.f32.mrf.mxu0
  %v322 = vadd.f32 %v74, %v321
  %v323 = vpop.f32.mrf.mxu0
  %v324 = vadd.f32 %v74, %v323
  %325 = vmatmul.bf16.gmra.mxu0 %v160
  %v326 = vpop.f32.mrf.mxu0
  %v327 = vadd.f32 %v74, %v326
  %v328 = vpop.f32.mrf.mxu0
  %v329 = vadd.f32 %v74, %v328
  %330 = vmatmul.bf16.gmra.mxu0 %v162
  %v331 = vpop.f32.mrf.mxu0
  %v332 = vadd.f32 %v74, %v331
  %v333 = vpop.f32.mrf.mxu0
  %v334 = vadd.f32 %v74, %v333
  %335 = vmatmul.bf16.gmra.mxu0 %v164
  %v336 = vpop.f32.mrf.mxu0
  %v337 = vadd.f32 %v74, %v336
  %v338 = vpop.f32.mrf.mxu0
  %v339 = vadd.f32 %v74, %v338
  %340 = vmatmul.bf16.gmra.mxu0 %v166
  %v341 = vpop.f32.mrf.mxu0
  %v342 = vadd.f32 %v74, %v341
  %v343 = vpop.f32.mrf.mxu0
  %v344 = vadd.f32 %v74, %v343
  %345 = vmatmul.bf16.gmra.mxu0 %v168
  %v346 = vpop.f32.mrf.mxu0
  %v347 = vadd.f32 %v74, %v346
  %v348 = vpop.f32.mrf.mxu0
  %v349 = vadd.f32 %v74, %v348
  %350 = vmatmul.bf16.gmra.mxu0 %v170
  %v351 = vpop.f32.mrf.mxu0
  %v352 = vadd.f32 %v74, %v351
  %v353 = vpop.f32.mrf.mxu0
  %v354 = vadd.f32 %v74, %v353
  %355 = vmatmul.bf16.gmra.mxu0 %v172
  %v356 = vpop.f32.mrf.mxu0
  %v357 = vadd.f32 %v74, %v356
  %v358 = vpop.f32.mrf.mxu0
  %v359 = vadd.f32 %v74, %v358
  %360 = vmatmul.bf16.gmra.mxu0 %v174
  %v361 = vpop.f32.mrf.mxu0
  %v362 = vadd.f32 %v74, %v361
  %v363 = vpop.f32.mrf.mxu0
  %v364 = vadd.f32 %v74, %v363
  %365 = vmatmul.bf16.gmra.mxu0 %v176
  %v366 = vpop.f32.mrf.mxu0
  %v367 = vadd.f32 %v74, %v366
  %v368 = vpop.f32.mrf.mxu0
  %v369 = vadd.f32 %v74, %v368
  %370 = vmatmul.bf16.gmra.mxu0 %v178
  %v371 = vpop.f32.mrf.mxu0
  %v372 = vadd.f32 %v74, %v371
  %v373 = vpop.f32.mrf.mxu0
  %v374 = vadd.f32 %v74, %v373
  %375 = vdwg.mxu0
  %376 = vmatpush.bf16.msra.mxu0 %v285
  %377 = vmatpush.bf16.msra.mxu0 %v284
  %378 = vmatpush.bf16.msra.mxu0 %v283
  %379 = vmatpush.bf16.msra.mxu0 %v282
  %380 = vmatpush.bf16.msra.mxu0 %v281
  %381 = vmatpush.bf16.msra.mxu0 %v280
  %382 = vmatpush.bf16.msra.mxu0 %v279
  %383 = vmatpush.bf16.msra.mxu0 %v278
  %384 = vmatmul.bf16.gmra.mxu0 %v155
  %v385 = vpop.f32.mrf.mxu0
  %v386 = vadd.f32 %v312, %v385
  %v387 = vpop.f32.mrf.mxu0
  %v388 = vadd.f32 %v314, %v387
  %389 = vmatmul.bf16.gmra.mxu0 %v157
  %v390 = vpop.f32.mrf.mxu0
  %v391 = vadd.f32 %v317, %v390
  %v392 = vpop.f32.mrf.mxu0
  %v393 = vadd.f32 %v319, %v392
  %394 = vmatmul.bf16.gmra.mxu0 %v159
  %v395 = vpop.f32.mrf.mxu0
  %v396 = vadd.f32 %v322, %v395
  %v397 = vpop.f32.mrf.mxu0
  %v398 = vadd.f32 %v324, %v397
  %399 = vmatmul.bf16.gmra.mxu0 %v161
  %v400 = vpop.f32.mrf.mxu0
  %v401 = vadd.f32 %v327, %v400
  %v402 = vpop.f32.mrf.mxu0
  %v403 = vadd.f32 %v329, %v402
  %404 = vmatmul.bf16.gmra.mxu0 %v163
  %v405 = vpop.f32.mrf.mxu0
  %v406 = vadd.f32 %v332, %v405
  %v407 = vpop.f32.mrf.mxu0
  %v408 = vadd.f32 %v334, %v407
  %409 = vmatmul.bf16.gmra.mxu0 %v165
  %v410 = vpop.f32.mrf.mxu0
  %v411 = vadd.f32 %v337, %v410
  %v412 = vpop.f32.mrf.mxu0
  %v413 = vadd.f32 %v339, %v412
  %414 = vmatmul.bf16.gmra.mxu0 %v167
  %v415 = vpop.f32.mrf.mxu0
  %v416 = vadd.f32 %v342, %v415
  %v417 = vpop.f32.mrf.mxu0
  %v418 = vadd.f32 %v344, %v417
  %419 = vmatmul.bf16.gmra.mxu0 %v169
  %v420 = vpop.f32.mrf.mxu0
  %v421 = vadd.f32 %v347, %v420
  %v422 = vpop.f32.mrf.mxu0
  %v423 = vadd.f32 %v349, %v422
  %424 = vmatmul.bf16.gmra.mxu0 %v171
  %v425 = vpop.f32.mrf.mxu0
  %v426 = vadd.f32 %v352, %v425
  %v427 = vpop.f32.mrf.mxu0
  %v428 = vadd.f32 %v354, %v427
  %429 = vmatmul.bf16.gmra.mxu0 %v173
  %v430 = vpop.f32.mrf.mxu0
  %v431 = vadd.f32 %v357, %v430
  %v432 = vpop.f32.mrf.mxu0
  %v433 = vadd.f32 %v359, %v432
  %434 = vmatmul.bf16.gmra.mxu0 %v175
  %v435 = vpop.f32.mrf.mxu0
  %v436 = vadd.f32 %v362, %v435
  %v437 = vpop.f32.mrf.mxu0
  %v438 = vadd.f32 %v364, %v437
  %439 = vmatmul.bf16.gmra.mxu0 %v177
  %v440 = vpop.f32.mrf.mxu0
  %v441 = vadd.f32 %v367, %v440
  %v442 = vpop.f32.mrf.mxu0
  %v443 = vadd.f32 %v369, %v442
  %444 = vmatmul.bf16.gmra.mxu0 %v179
  %v445 = vpop.f32.mrf.mxu0
  %v446 = vadd.f32 %v372, %v445
  %v447 = vpop.f32.mrf.mxu0
  %v448 = vadd.f32 %v374, %v447
  %449 = vdwg.mxu0
  %v450 = vmax.f32 %v386, 0.0
  %v451 = vmax.f32 %v388, 0.0
  %v452 = vmax.f32 %v391, 0.0
  %v453 = vmax.f32 %v393, 0.0
  %v454 = vmax.f32 %v396, 0.0
  %v455 = vmax.f32 %v398, 0.0
  %v456 = vmax.f32 %v401, 0.0
  %v457 = vmax.f32 %v403, 0.0
  %v458 = vmax.f32 %v406, 0.0
  %v459 = vmax.f32 %v408, 0.0
  %v460 = vmax.f32 %v411, 0.0
  %v461 = vmax.f32 %v413, 0.0
  %v462 = vmax.f32 %v416, 0.0
  %v463 = vmax.f32 %v418, 0.0
  %v464 = vmax.f32 %v421, 0.0
  %v465 = vmax.f32 %v423, 0.0
  %v466 = vmax.f32 %v426, 0.0
  %v467 = vmax.f32 %v428, 0.0
  %v468 = vmax.f32 %v431, 0.0
  %v469 = vmax.f32 %v433, 0.0
  %v470 = vmax.f32 %v436, 0.0
  %v471 = vmax.f32 %v438, 0.0
  %v472 = vmax.f32 %v441, 0.0
  %v473 = vmax.f32 %v443, 0.0
  %v474 = vmax.f32 %v446, 0.0
  %v475 = vmax.f32 %v448, 0.0
  %v476 = vpack.c.bf16 %v450, %v450
  %v477 = vpack.c.bf16 %v451, %v451
  %v478 = vpack.c.bf16 %v452, %v452
  %v479 = vpack.c.bf16 %v453, %v453
  %v480 = vpack.c.bf16 %v454, %v454
  %v481 = vpack.c.bf16 %v455, %v455
  %v482 = vpack.c.bf16 %v456, %v456
  %v483 = vpack.c.bf16 %v457, %v457
  %v484 = vpack.c.bf16 %v458, %v458
  %v485 = vpack.c.bf16 %v459, %v459
  %v486 = vpack.c.bf16 %v460, %v460
  %v487 = vpack.c.bf16 %v461, %v461
  %v488 = vpack.c.bf16 %v462, %v462
  %v489 = vpack.c.bf16 %v463, %v463
  %v490 = vpack.c.bf16 %v464, %v464
  %v491 = vpack.c.bf16 %v465, %v465
  %v492 = vpack.c.bf16 %v466, %v466
  %v493 = vpack.c.bf16 %v467, %v467
  %v494 = vpack.c.bf16 %v468, %v468
  %v495 = vpack.c.bf16 %v469, %v469
  %v496 = vpack.c.bf16 %v470, %v470
  %v497 = vpack.c.bf16 %v471, %v471
  %v498 = vpack.c.bf16 %v472, %v472
  %v499 = vpack.c.bf16 %v473, %v473
  %v500 = vpack.c.bf16 %v474, %v474
  %v501 = vpack.c.bf16 %v475, %v475
  %502 = vst [vmem:[%s3] sm:$0xf] %v476
  %503 = vst [vmem:[%s3 + $0x4] sm:$0xf] %v477
  %504 = vst [vmem:[%s3 + $0x8] sm:$0xf] %v478
  %505 = vst [vmem:[%s3 + $0xc] sm:$0xf] %v479
  %506 = vst [vmem:[%s3 + $0x10] sm:$0xf] %v480
  %507 = vst [vmem:[%s3 + $0x14] sm:$0xf] %v481
  %508 = vst [vmem:[%s3 + $0x18] sm:$0xf] %v482
  %509 = vst [vmem:[%s3 + $0x1c] sm:$0xf] %v483
  %510 = vst [vmem:[%s3 + $0x20] sm:$0xf] %v484
  %511 = vst [vmem:[%s3 + $0x24] sm:$0xf] %v485
  %512 = vst [vmem:[%s3 + $0x28] sm:$0xf] %v486
  %513 = vst [vmem:[%s3 + $0x2c] sm:$0xf] %v487
  %514 = vst [vmem:[%s3 + $0x30] sm:$0xf] %v488
  %515 = vst [vmem:[%s3 + $0x34] sm:$0xf] %v489
  %516 = vst [vmem:[%s3 + $0x38] sm:$0xf] %v490
  %517 = vst [vmem:[%s3 + $0x3c] sm:$0xf] %v491
  %518 = vst [vmem:[%s3 + $0x40] sm:$0xf] %v492
  %519 = vst [vmem:[%s3 + $0x44] sm:$0xf] %v493
  %520 = vst [vmem:[%s3 + $0x48] sm:$0xf] %v494
  %521 = vst [vmem:[%s3 + $0x4c] sm:$0xf] %v495
  %522 = vst [vmem:[%s3 + $0x50] sm:$0xf] %v496
  %523 = vst [vmem:[%s3 + $0x54] sm:$0xf] %v497
  %524 = vst [vmem:[%s3 + $0x58] sm:$0xf] %v498
  %525 = vst [vmem:[%s3 + $0x5c] sm:$0xf] %v499
  %526 = vst [vmem:[%s3 + $0x60] sm:$0xf] %v500
  %527 = vst [vmem:[%s3 + $0x64] sm:$0xf] %v501
  // Predicated region
  $region14: #{gaze_prediction_forward.10} parent=0 // pred_check
    _
  $region15: #{gaze_prediction_forward.10} parent=0 // pred_check_branch
    %529 = sbr.rel (0) target = $region17
  $region16: #{gaze_prediction_forward.10} parent=0 // pred_region
    _
  $region17: #{gaze_prediction_forward.10} parent=0 // pred_fallthru
    _
  // Predicated region
  $region18: #{gaze_prediction_forward.10} parent=0 // pred_check
    _
  $region19: #{gaze_prediction_forward.10} parent=0 // pred_check_branch
    %531 = sbr.rel (0) target = $region21
  $region20: #{gaze_prediction_forward.10} parent=0 // pred_region
    _
  $region21: #{gaze_prediction_forward.10} parent=0 // pred_fallthru
    _

// kernel: gaze_prediction_forward.11
$region0: #{gaze_prediction_forward.11}
  #allocation0 [shape = 'u32[]', space=smem, size = 0x4, offset = 0x4, fixed_abs, tag = 'smem constant byte address 0x4 - core index']
  #allocation1 [shape = 'u32[72,128]{1,0:T(1,128)}', space=vmem, size = 0x9000, scoped, tag = 'internal scratch']
  %s0 = inlined_call_operand.vmem [shape: bf16[16,128], index: 0, kind: input, shape index: {}]
  %s1 = inlined_call_operand.vmem [shape: bf16[2,128,512], index: 1, kind: input, shape index: {}]
  %s2 = inlined_call_operand.vmem [shape: f32[1,512], index: 2, kind: input, shape index: {}]
  %s3 = inlined_call_operand.vmem [shape: f32[2,16,512], index: 3, kind: output, shape index: {}]
  %s4 = sld [smem:[#allocation0]]
  $region45: #{gaze_prediction_forward.11} parent=0
    _
  %s6 = ssub.s32 1, %s4
  %s7 = scalar_select 0, %s6, %s4
  loop: start=0, step=1, limit=4
  $region2: #{gaze_prediction_forward.11} parent=0 // loop_pre_header
    _
  $region3: #{gaze_prediction_forward.11} parent=0 // loop_header
    %s9 = sphi 0, %s13
    %p10 = scmp.ge.s32.totalorder %s9, 4
    %s17 = sphi 0, %s17
    %s19 = sphi 0, %s17
    %s20 = sphi 0, %s19
    %s34 = sphi 0, %s20
    %s40 = sphi 0, %s42
    %s43 = sphi 0, %s40
    %s44 = sphi 0, %s43
    %s60 = sphi 0, %s44
    %s64 = sphi 0, %s64
    %s66 = sphi 0, %s64
    %s67 = sphi 0, %s66
    %s81 = sphi 0, %s67
    %s87 = sphi 0, %s89
    %s90 = sphi 0, %s87
    %s91 = sphi 0, %s90
    %s107 = sphi 0, %s91
  $region4: #{gaze_prediction_forward.11} parent=0 // loop_header_branch
    %12 = sbr.rel (%p10) target = $region8
  $region5: #{gaze_prediction_forward.11} parent=0 // loop_body
    %s14 = ssub.s32 %s9, 1
    %s15 = ssub.s32 %s9, 2
    %s16 = sadd.s32 %s9, 1
    %s18 = sadd.s32 %s17, 1
    %p21 = scmp.eq.s32.totalorder %s9, 1
    %p22 = scmp.ne.s32.totalorder %s17, %s19
    %p23 = scmp.eq.s32.totalorder %s9, 0
    %p24 = por %p22, %p23
    %p25 = scmp.ne.s32.totalorder %s17, %s19
    %p26 = scmp.eq.s32.totalorder %s14, 1
    %p27 = por %p25, %p26
    %p28 = scmp.ne.s32.totalorder %s19, %s20
    %p29 = scmp.eq.s32.totalorder %s14, 0
    %p30 = por %p28, %p29
    %p31 = scmp.ne.s32.totalorder %s19, %s20
    %p32 = scmp.eq.s32.totalorder %s15, 1
    %p33 = por %p31, %p32
    %p35 = scmp.ne.s32.totalorder %s20, %s34
    %p36 = scmp.eq.s32.totalorder %s15, 0
    %p37 = por %p35, %p36
    %s38 = ssub.s32 %s9, %s16
    %p39 = scmp.eq.s32.totalorder %s38, 0
    %s41 = sadd.s32 %s40, 1
    %s42 = scalar_select %p39, %s40, %s41
    %p45 = pneg %p39
    %p46 = scmp.eq.s32.totalorder %s9, 1
    %p47 = por %p45, %p46
    %p48 = scmp.ne.s32.totalorder %s40, %s43
    %p49 = scmp.eq.s32.totalorder %s9, 0
    %p50 = por %p48, %p49
    %p51 = scmp.ne.s32.totalorder %s40, %s43
    %p52 = scmp.eq.s32.totalorder %s14, 1
    %p53 = por %p51, %p52
    %p54 = scmp.ne.s32.totalorder %s43, %s44
    %p55 = scmp.eq.s32.totalorder %s14, 0
    %p56 = por %p54, %p55
    %p57 = scmp.ne.s32.totalorder %s43, %s44
    %p58 = scmp.eq.s32.totalorder %s15, 1
    %p59 = por %p57, %p58
    %p61 = scmp.ne.s32.totalorder %s44, %s60
    %p62 = scmp.eq.s32.totalorder %s15, 0
    %p63 = por %p61, %p62
    %s65 = sadd.s32 %s64, 1
    %p68 = scmp.eq.s32.totalorder %s9, 1
    %p69 = scmp.ne.s32.totalorder %s64, %s66
    %p70 = scmp.eq.s32.totalorder %s9, 0
    %p71 = por %p69, %p70
    %p72 = scmp.ne.s32.totalorder %s64, %s66
    %p73 = scmp.eq.s32.totalorder %s14, 1
    %p74 = por %p72, %p73
    %p75 = scmp.ne.s32.totalorder %s66, %s67
    %p76 = scmp.eq.s32.totalorder %s14, 0
    %p77 = por %p75, %p76
    %p78 = scmp.ne.s32.totalorder %s66, %s67
    %p79 = scmp.eq.s32.totalorder %s15, 1
    %p80 = por %p78, %p79
    %p82 = scmp.ne.s32.totalorder %s67, %s81
    %p83 = scmp.eq.s32.totalorder %s15, 0
    %p84 = por %p82, %p83
    %s85 = ssub.s32 %s9, %s16
    %p86 = scmp.eq.s32.totalorder %s85, 0
    %s88 = sadd.s32 %s87, 1
    %s89 = scalar_select %p86, %s87, %s88
    %p92 = pneg %p86
    %p93 = scmp.eq.s32.totalorder %s9, 1
    %p94 = por %p92, %p93
    %p95 = scmp.ne.s32.totalorder %s87, %s90
    %p96 = scmp.eq.s32.totalorder %s9, 0
    %p97 = por %p95, %p96
    %p98 = scmp.ne.s32.totalorder %s87, %s90
    %p99 = scmp.eq.s32.totalorder %s14, 1
    %p100 = por %p98, %p99
    %p101 = scmp.ne.s32.totalorder %s90, %s91
    %p102 = scmp.eq.s32.totalorder %s14, 0
    %p103 = por %p101, %p102
    %p104 = scmp.ne.s32.totalorder %s90, %s91
    %p105 = scmp.eq.s32.totalorder %s15, 1
    %p106 = por %p104, %p105
    %p108 = scmp.ne.s32.totalorder %s91, %s107
    %p109 = scmp.eq.s32.totalorder %s15, 0
    %p110 = por %p108, %p109
    %p111 = scmp.le.s32.totalorder 1, %s9
    %p112 = scmp.lt.s32.totalorder %s9, 3
    %p113 = pnand %p111, %p112
    %p114 = pneg %p113
    // Predicated region
    $region9: #{gaze_prediction_forward.11} parent=5 // pred_check
      _
    $region10: #{gaze_prediction_forward.11} parent=5 // pred_check_branch
      %116 = sbr.rel (%p113) target = $region12
    $region11: #{gaze_prediction_forward.11} parent=5 // pred_region
      %s117 = ssub.s32 %s9, 1
      // Predicated region
      $region13: #{gaze_prediction_forward.11} parent=11 // pred_check
        %p118 = pneg %p30
      $region14: #{gaze_prediction_forward.11} parent=11 // pred_check_branch
        %120 = sbr.rel (%p118) target = $region16
      $region15: #{gaze_prediction_forward.11} parent=11 // pred_region
        _
      $region16: #{gaze_prediction_forward.11} parent=11 // pred_fallthru
        _
      // Predicated region
      $region17: #{gaze_prediction_forward.11} parent=11 // pred_check
        %p121 = pneg %p77
      $region18: #{gaze_prediction_forward.11} parent=11 // pred_check_branch
        %123 = sbr.rel (%p121) target = $region20
      $region19: #{gaze_prediction_forward.11} parent=11 // pred_region
        _
      $region20: #{gaze_prediction_forward.11} parent=11 // pred_fallthru
        _
    $region12: #{gaze_prediction_forward.11} parent=5 // pred_fallthru
      _
    %p124 = scmp.lt.s32.totalorder %s9, 2
    // Predicated region
    $region21: #{gaze_prediction_forward.11} parent=5 // pred_check
      %p125 = pneg %p124
    $region22: #{gaze_prediction_forward.11} parent=5 // pred_check_branch
      %127 = sbr.rel (%p125) target = $region24
    $region23: #{gaze_prediction_forward.11} parent=5 // pred_region
      // Predicated region
      $region25: #{gaze_prediction_forward.11} parent=23 // pred_check
        %p128 = pneg %p50
      $region26: #{gaze_prediction_forward.11} parent=23 // pred_check_branch
        %130 = sbr.rel (%p128) target = $region28
      $region27: #{gaze_prediction_forward.11} parent=23 // pred_region
        %p131 = scmp.lt.s32.totalorder %s9, 1
        %s132 = scalar_select %p131, %s9, 1
        %s133 = smul.addr %s132, 64
        %s134 = smul.addr %s133, 4
        %s135 = scalar_lea.vmem %s1, %s134
      $region28: #{gaze_prediction_forward.11} parent=23 // pred_fallthru
        _
    $region24: #{gaze_prediction_forward.11} parent=5 // pred_fallthru
      _
    %p136 = scmp.le.s32.totalorder 1, %s9
    %p137 = scmp.lt.s32.totalorder %s9, 3
    %p138 = pnand %p136, %p137
    %p139 = pneg %p138
    // Predicated region
    $region29: #{gaze_prediction_forward.11} parent=5 // pred_check
      _
    $region30: #{gaze_prediction_forward.11} parent=5 // pred_check_branch
      %141 = sbr.rel (%p138) target = $region32
    $region31: #{gaze_prediction_forward.11} parent=5 // pred_region
      %s142 = ssub.s32 %s9, 1
      %p143 = pneg %p30
      %p144 = pneg %p27
      %p145 = scmp.lt.s32.totalorder %s14, 1
      %s146 = scalar_select %p145, %s14, 1
      %s147 = smul.addr %s146, 64
      %s148 = smul.addr %s147, 4
      %s149 = scalar_lea.vmem %s1, %s148
      %p150 = pneg %p56
      %p151 = pneg %p53
      %p152 = pneg %p77
      %p153 = pneg %p74
      %p154 = pneg %p103
      %p155 = pneg %p100
      %p156 = scmp.lt.s32.totalorder %s14, 1
      %s157 = scalar_select %p156, %s14, 1
      %s158 = smul.addr %s157, 8
      %s159 = smul.addr %s158, 8
      %s160 = scalar_lea.vmem %s3, %s159
      %p161 = scmp.lt.s32.totalorder %s14, 1
      %s162 = scalar_select %p161, %s14, 1
      %s163 = smul.addr %s162, 64
      %s164 = smul.addr %s163, 4
      %s165 = scalar_lea.vmem %s1, %s164
      %p166 = scmp.lt.s32.totalorder %s14, 1
      %s167 = scalar_select %p166, %s14, 1
      %s168 = smul.addr %s167, 8
      %s169 = smul.addr %s168, 8
      %s170 = scalar_lea.vmem %s3, %s169
      %v171 = vld [vmem:[%s0] sm:$0xf]
      %v172 = vld [vmem:[%s0 + $0x4] sm:$0xf]
      %v173 = vld [vmem:[%s165] sm:$0xff]
      %v174 = vld [vmem:[%s165 + $0x8] sm:$0xff]
      %v175 = vld [vmem:[%s165 + $0x10] sm:$0xff]
      %v176 = vld [vmem:[%s165 + $0x18] sm:$0xff]
      %v177 = vld [vmem:[%s165 + $0x20] sm:$0xff]
      %v178 = vld [vmem:[%s165 + $0x28] sm:$0xff]
      %v179 = vld [vmem:[%s165 + $0x30] sm:$0xff]
      %v180 = vld [vmem:[%s165 + $0x38] sm:$0xff]
      %v181 = vld [vmem:[%s165 + $0x40] sm:$0xff]
      %v182 = vld [vmem:[%s165 + $0x48] sm:$0xff]
      %v183 = vld [vmem:[%s165 + $0x50] sm:$0xff]
      %v184 = vld [vmem:[%s165 + $0x58] sm:$0xff]
      %v185 = vld [vmem:[%s165 + $0x60] sm:$0xff]
      %v186 = vld [vmem:[%s165 + $0x68] sm:$0xff]
      %v187 = vld [vmem:[%s165 + $0x70] sm:$0xff]
      %v188 = vld [vmem:[%s165 + $0x78] sm:$0xff]
      %v189 = vld [vmem:[%s165 + $0x80] sm:$0xff]
      %v190 = vld [vmem:[%s165 + $0x88] sm:$0xff]
      %v191 = vld [vmem:[%s165 + $0x90] sm:$0xff]
      %v192 = vld [vmem:[%s165 + $0x98] sm:$0xff]
      %v193 = vld [vmem:[%s165 + $0xa0] sm:$0xff]
      %v194 = vld [vmem:[%s165 + $0xa8] sm:$0xff]
      %v195 = vld [vmem:[%s165 + $0xb0] sm:$0xff]
      %v196 = vld [vmem:[%s165 + $0xb8] sm:$0xff]
      %v197 = vld [vmem:[%s165 + $0xc0] sm:$0xff]
      %v198 = vld [vmem:[%s165 + $0xc8] sm:$0xff]
      %v199 = vld [vmem:[%s165 + $0xd0] sm:$0xff]
      %v200 = vld [vmem:[%s165 + $0xd8] sm:$0xff]
      %v201 = vld [vmem:[%s165 + $0xe0] sm:$0xff]
      %v202 = vld [vmem:[%s165 + $0xe8] sm:$0xff]
      %v203 = vld [vmem:[%s165 + $0xf0] sm:$0xff]
      %v204 = vld [vmem:[%s165 + $0xf8] sm:$0xff]
      %v205 = vld [vmem:[%s2] sm:$0xf]
      %v207 = vperm.slane %v205, 0
      %v208 = vperm.slane %v205, 1
      %v209 = vperm.slane %v205, 2
      %v210 = vperm.slane %v205, 3
      %v217 = vunpack.c.l.b16 %v171
      %v218 = vunpack.c.l.b16 %v172
      %v219 = vpack.c.b16 %v218, %v217
      %v253 = vunpack.c.l.b16 %v173
      %v254 = vunpack.c.h.b16 %v173
      %v255 = vunpack.c.l.b16 %v174
      %v256 = vunpack.c.h.b16 %v174
      %v257 = vunpack.c.l.b16 %v175
      %v258 = vunpack.c.h.b16 %v175
      %v259 = vunpack.c.l.b16 %v176
      %v260 = vunpack.c.h.b16 %v176
      %v261 = vunpack.c.l.b16 %v177
      %v262 = vunpack.c.h.b16 %v177
      %v263 = vunpack.c.l.b16 %v178
      %v264 = vunpack.c.h.b16 %v178
      %v265 = vunpack.c.l.b16 %v179
      %v266 = vunpack.c.h.b16 %v179
      %v267 = vunpack.c.l.b16 %v180
      %v268 = vunpack.c.h.b16 %v180
      %v269 = vunpack.c.l.b16 %v181
      %v270 = vunpack.c.h.b16 %v181
      %v271 = vunpack.c.l.b16 %v182
      %v272 = vunpack.c.h.b16 %v182
      %v273 = vunpack.c.l.b16 %v183
      %v274 = vunpack.c.h.b16 %v183
      %v275 = vunpack.c.l.b16 %v184
      %v276 = vunpack.c.h.b16 %v184
      %v277 = vunpack.c.l.b16 %v185
      %v278 = vunpack.c.h.b16 %v185
      %v279 = vunpack.c.l.b16 %v186
      %v280 = vunpack.c.h.b16 %v186
      %v281 = vunpack.c.l.b16 %v187
      %v282 = vunpack.c.h.b16 %v187
      %v283 = vunpack.c.l.b16 %v188
      %v284 = vunpack.c.h.b16 %v188
      %v285 = vunpack.c.l.b16 %v189
      %v286 = vunpack.c.h.b16 %v189
      %v287 = vunpack.c.l.b16 %v190
      %v288 = vunpack.c.h.b16 %v190
      %v289 = vunpack.c.l.b16 %v191
      %v290 = vunpack.c.h.b16 %v191
      %v291 = vunpack.c.l.b16 %v192
      %v292 = vunpack.c.h.b16 %v192
      %v293 = vunpack.c.l.b16 %v193
      %v294 = vunpack.c.h.b16 %v193
      %v295 = vunpack.c.l.b16 %v194
      %v296 = vunpack.c.h.b16 %v194
      %v297 = vunpack.c.l.b16 %v195
      %v298 = vunpack.c.h.b16 %v195
      %v299 = vunpack.c.l.b16 %v196
      %v300 = vunpack.c.h.b16 %v196
      %v301 = vunpack.c.l.b16 %v197
      %v302 = vunpack.c.h.b16 %v197
      %v303 = vunpack.c.l.b16 %v198
      %v304 = vunpack.c.h.b16 %v198
      %v305 = vunpack.c.l.b16 %v199
      %v306 = vunpack.c.h.b16 %v199
      %v307 = vunpack.c.l.b16 %v200
      %v308 = vunpack.c.h.b16 %v200
      %v309 = vunpack.c.l.b16 %v201
      %v310 = vunpack.c.h.b16 %v201
      %v311 = vunpack.c.l.b16 %v202
      %v312 = vunpack.c.h.b16 %v202
      %v313 = vunpack.c.l.b16 %v203
      %v314 = vunpack.c.h.b16 %v203
      %v315 = vunpack.c.l.b16 %v204
      %v316 = vunpack.c.h.b16 %v204
      %v317 = vpack.c.b16 %v257, %v253
      %v318 = vpack.c.b16 %v258, %v254
      %v319 = vpack.c.b16 %v259, %v255
      %v320 = vpack.c.b16 %v260, %v256
      %v321 = vpack.c.b16 %v265, %v261
      %v322 = vpack.c.b16 %v266, %v262
      %v323 = vpack.c.b16 %v267, %v263
      %v324 = vpack.c.b16 %v268, %v264
      %v325 = vpack.c.b16 %v273, %v269
      %v326 = vpack.c.b16 %v274, %v270
      %v327 = vpack.c.b16 %v275, %v271
      %v328 = vpack.c.b16 %v276, %v272
      %v329 = vpack.c.b16 %v281, %v277
      %v330 = vpack.c.b16 %v282, %v278
      %v331 = vpack.c.b16 %v283, %v279
      %v332 = vpack.c.b16 %v284, %v280
      %v333 = vpack.c.b16 %v289, %v285
      %v334 = vpack.c.b16 %v290, %v286
      %v335 = vpack.c.b16 %v291, %v287
      %v336 = vpack.c.b16 %v292, %v288
      %v337 = vpack.c.b16 %v297, %v293
      %v338 = vpack.c.b16 %v298, %v294
      %v339 = vpack.c.b16 %v299, %v295
      %v340 = vpack.c.b16 %v300, %v296
      %v341 = vpack.c.b16 %v305, %v301
      %v342 = vpack.c.b16 %v306, %v302
      %v343 = vpack.c.b16 %v307, %v303
      %v344 = vpack.c.b16 %v308, %v304
      %v345 = vpack.c.b16 %v313, %v309
      %v346 = vpack.c.b16 %v314, %v310
      %v347 = vpack.c.b16 %v315, %v311
      %v348 = vpack.c.b16 %v316, %v312
      %381 = vmatpush.bf16.msra.mxu0 %v345
      %382 = vmatpush.bf16.msra.mxu0 %v341
      %383 = vmatpush.bf16.msra.mxu0 %v337
      %384 = vmatpush.bf16.msra.mxu0 %v333
      %385 = vmatpush.bf16.msra.mxu0 %v329
      %386 = vmatpush.bf16.msra.mxu0 %v325
      %387 = vmatpush.bf16.msra.mxu0 %v321
      %388 = vmatpush.bf16.msra.mxu0 %v317
      %389 = vmatmul.bf16.gmra.mxu0 %v219
      %v390 = vpop.f32.mrf.mxu0
      %v391 = vadd.f32 %v207, %v390
      %v392 = vpop.f32.mrf.mxu0
      %v393 = vadd.f32 %v207, %v392
      %394 = vdwg.mxu0
      %395 = vmatpush.bf16.msra.mxu0 %v346
      %396 = vmatpush.bf16.msra.mxu0 %v342
      %397 = vmatpush.bf16.msra.mxu0 %v338
      %398 = vmatpush.bf16.msra.mxu0 %v334
      %399 = vmatpush.bf16.msra.mxu0 %v330
      %400 = vmatpush.bf16.msra.mxu0 %v326
      %401 = vmatpush.bf16.msra.mxu0 %v322
      %402 = vmatpush.bf16.msra.mxu0 %v318
      %403 = vmatmul.bf16.gmra.mxu0 %v219
      %v404 = vpop.f32.mrf.mxu0
      %v405 = vadd.f32 %v208, %v404
      %v406 = vpop.f32.mrf.mxu0
      %v407 = vadd.f32 %v208, %v406
      %408 = vdwg.mxu0
      %409 = vmatpush.bf16.msra.mxu0 %v347
      %410 = vmatpush.bf16.msra.mxu0 %v343
      %411 = vmatpush.bf16.msra.mxu0 %v339
      %412 = vmatpush.bf16.msra.mxu0 %v335
      %413 = vmatpush.bf16.msra.mxu0 %v331
      %414 = vmatpush.bf16.msra.mxu0 %v327
      %415 = vmatpush.bf16.msra.mxu0 %v323
      %416 = vmatpush.bf16.msra.mxu0 %v319
      %417 = vmatmul.bf16.gmra.mxu0 %v219
      %v418 = vpop.f32.mrf.mxu0
      %v419 = vadd.f32 %v209, %v418
      %v420 = vpop.f32.mrf.mxu0
      %v421 = vadd.f32 %v209, %v420
      %422 = vdwg.mxu0
      %423 = vmatpush.bf16.msra.mxu0 %v348
      %424 = vmatpush.bf16.msra.mxu0 %v344
      %425 = vmatpush.bf16.msra.mxu0 %v340
      %426 = vmatpush.bf16.msra.mxu0 %v336
      %427 = vmatpush.bf16.msra.mxu0 %v332
      %428 = vmatpush.bf16.msra.mxu0 %v328
      %429 = vmatpush.bf16.msra.mxu0 %v324
      %430 = vmatpush.bf16.msra.mxu0 %v320
      %431 = vmatmul.bf16.gmra.mxu0 %v219
      %v432 = vpop.f32.mrf.mxu0
      %v433 = vadd.f32 %v210, %v432
      %v434 = vpop.f32.mrf.mxu0
      %v435 = vadd.f32 %v210, %v434
      %436 = vdwg.mxu0
      %v437 = vlaneseq
      %v438 = vand.u32 %v437, 127
      %v439 = vadd.s32 %v438, 128
      %v440 = vadd.s32 %v438, 256
      %v441 = vadd.s32 %v438, 384
      %vm442 = vcmp.lt.s32.totalorder %v438, 441
      %vm443 = vcmp.lt.s32.totalorder %v439, 441
      %vm444 = vcmp.lt.s32.totalorder %v440, 441
      %vm445 = vcmp.lt.s32.totalorder %v441, 441
      %v446 = vsel %vm442, %v391, -3e+38
      %v447 = vsel %vm443, %v405, -3e+38
      %v448 = vsel %vm444, %v419, -3e+38
      %v449 = vsel %vm445, %v433, -3e+38
      %v450 = vsel %vm442, %v393, -3e+38
      %v451 = vsel %vm443, %v407, -3e+38
      %v452 = vsel %vm444, %v421, -3e+38
      %v453 = vsel %vm445, %v435, -3e+38
      %v454 = vmax.f32 %v446, %v448
      %v455 = vmax.f32 %v447, %v449
      %v456 = vmax.f32 %v454, %v455
      %457 = vmax.xlane.f32.xlu0 %v456
      %v458 = vpop.xlane.xlu0 %457
      %v459 = vmax.f32 %v450, %v452
      %v460 = vmax.f32 %v451, %v453
      %v461 = vmax.f32 %v459, %v460
      %462 = vmax.xlane.f32.xlu0 %v461
      %v463 = vpop.xlane.xlu0 %462
      %v464 = vmax.f32 %v458, %v463
      %v465 = vrot.slane %v464, 4
      %v466 = vmax.f32 %v464, %v465
      %v467 = vrot.slane %v466, 2
      %v468 = vmax.f32 %v466, %v467
      %v469 = vrot.slane %v468, 1
      %v470 = vmax.f32 %v468, %v469
      %v471 = vsub.f32 %v391, %v470
      %v472 = vsub.f32 %v405, %v470
      %v473 = vsub.f32 %v419, %v470
      %v474 = vsub.f32 %v433, %v470
      %v475 = vsub.f32 %v393, %v470
      %v476 = vsub.f32 %v407, %v470
      %v477 = vsub.f32 %v421, %v470
      %v478 = vsub.f32 %v435, %v470
      %v479 = vmul.f32 %v471, 1.442695
      %v480 = vpow.pop %v479
      %v481 = vmul.f32 %v472, 1.442695
      %v482 = vpow.pop %v481
      %v483 = vmul.f32 %v473, 1.442695
      %v484 = vpow.pop %v483
      %v485 = vmul.f32 %v474, 1.442695
      %v486 = vpow.pop %v485
      %v487 = vmul.f32 %v475, 1.442695
      %v488 = vpow.pop %v487
      %v489 = vmul.f32 %v476, 1.442695
      %v490 = vpow.pop %v489
      %v491 = vmul.f32 %v477, 1.442695
      %v492 = vpow.pop %v491
      %v493 = vmul.f32 %v478, 1.442695
      %v494 = vpow.pop %v493
      %v495 = vsel %vm442, %v480, 0.0
      %v496 = vsel %vm443, %v482, 0.0
      %v497 = vsel %vm444, %v484, 0.0
      %v498 = vsel %vm445, %v486, 0.0
      %v499 = vsel %vm442, %v488, 0.0
      %v500 = vsel %vm443, %v490, 0.0
      %v501 = vsel %vm444, %v492, 0.0
      %v502 = vsel %vm445, %v494, 0.0
      %v503 = vadd.f32 %v495, %v496
      %v504 = vadd.f32 %v503, %v497
      %v505 = vadd.f32 %v504, %v498
      %506 = vadd.xlane.f32.xlu0 %v505
      %v507 = vpop.xlane.xlu0 %506
      %v508 = vadd.f32 %v499, %v500
      %v509 = vadd.f32 %v508, %v501
      %v510 = vadd.f32 %v509, %v502
      %511 = vadd.xlane.f32.xlu0 %v510
      %v512 = vpop.xlane.xlu0 %511
      %v513 = vadd.f32 %v507, %v512
      %v514 = vrot.slane %v513, 4
      %v515 = vadd.f32 %v513, %v514
      %v516 = vrot.slane %v515, 2
      %v517 = vadd.f32 %v515, %v516
      %v518 = vrot.slane %v517, 1
      %v519 = vadd.f32 %v517, %v518
      %v520 = vlog2.pop %v519
      %v521 = vmul.f32 %v520, 0.6931472
      %v522 = vsub.f32 %v471, %v521
      %v523 = vsub.f32 %v472, %v521
      %v524 = vsub.f32 %v473, %v521
      %v525 = vsub.f32 %v474, %v521
      %v526 = vsub.f32 %v475, %v521
      %v527 = vsub.f32 %v476, %v521
      %v528 = vsub.f32 %v477, %v521
      %v529 = vsub.f32 %v478, %v521
      %530 = vst [vmem:[%s170] sm:$0xff] %v522
      %531 = vst [vmem:[%s170 + $0x8] sm:$0xff] %v523
      %532 = vst [vmem:[%s170 + $0x10] sm:$0xff] %v524
      %533 = vst [vmem:[%s170 + $0x18] sm:$0xff] %v525
      %534 = vst [vmem:[%s170 + $0x20] sm:$0xff] %v526
      %535 = vst [vmem:[%s170 + $0x28] sm:$0xff] %v527
      %536 = vst [vmem:[%s170 + $0x30] sm:$0xff] %v528
      %537 = vst [vmem:[%s170 + $0x38] sm:$0xff] %v529
      %p538 = scmp.lt.s32.totalorder %s14, 1
      %s539 = scalar_select %p538, %s14, 1
      %s540 = smul.addr %s539, 8
      %s541 = smul.addr %s540, 8
      %s542 = scalar_lea.vmem %s3, %s541
      // Predicated region
      $region33: #{gaze_prediction_forward.11} parent=31 // pred_check
        %p543 = pneg %p100
      $region34: #{gaze_prediction_forward.11} parent=31 // pred_check_branch
        %545 = sbr.rel (%p543) target = $region36
      $region35: #{gaze_prediction_forward.11} parent=31 // pred_region
        _
      $region36: #{gaze_prediction_forward.11} parent=31 // pred_fallthru
        _
    $region32: #{gaze_prediction_forward.11} parent=5 // pred_fallthru
      _
    %p546 = scmp.le.s32.totalorder 2, %s9
    // Predicated region
    $region37: #{gaze_prediction_forward.11} parent=5 // pred_check
      %p547 = pneg %p546
    $region38: #{gaze_prediction_forward.11} parent=5 // pred_check_branch
      %549 = sbr.rel (%p547) target = $region40
    $region39: #{gaze_prediction_forward.11} parent=5 // pred_region
      %s550 = ssub.s32 %s9, 2
      // Predicated region
      $region41: #{gaze_prediction_forward.11} parent=39 // pred_check
        %p551 = pneg %p106
      $region42: #{gaze_prediction_forward.11} parent=39 // pred_check_branch
        %553 = sbr.rel (%p551) target = $region44
      $region43: #{gaze_prediction_forward.11} parent=39 // pred_region
        %p554 = scmp.lt.s32.totalorder %s15, 1
        %s555 = scalar_select %p554, %s15, 1
        %s556 = smul.addr %s555, 8
        %s557 = smul.addr %s556, 8
        %s558 = scalar_lea.vmem %s3, %s557
      $region44: #{gaze_prediction_forward.11} parent=39 // pred_fallthru
        _
    $region40: #{gaze_prediction_forward.11} parent=5 // pred_fallthru
      _
  $region6: #{gaze_prediction_forward.11} parent=0 // loop_footer
    %s13 = sadd.s32 1, %s9
  $region7: #{gaze_prediction_forward.11} parent=0 // loop_footer_branch
    %8 = sbr.rel target = $region3
  $region8: #{gaze_prediction_forward.11} parent=0 // loop_exit
    _

</llo_original>
